<compile_context>
chip_gen: v7x
topology: tpu7x:2x2x1
jax: 0.10.0
libtpu: 0.0.40
codegen_flags: <defaults>
</compile_context>

<pallas_src>
import functools

import jax
import jax.numpy as jnp
from jax import lax
from jax.experimental import pallas as pl
from jax.experimental.pallas import tpu as pltpu


C_PAD = 128      # lane-width padding for every channel dimension
N_LAYERS = 7     # conv1..conv7
XOFF = 16        # halo-interior column offset: sublane aligned for f32 (8) and
                 # packed bf16 (16) activations -> unmasked interior stores


# ----------------------------------------------------------------------------
# Fused Pallas kernel: one grid step == one (batch, layer) pair
# ----------------------------------------------------------------------------
def _decoder_kernel(x_ref, w_ref, b_ref, o_ref, xp_ref, *, H, W):
    # x_ref : (1, H, W, 128)        cdt  lane-padded input (resident across l)
    # w_ref : (1, 9*128, 128)       cdt  this layer's im2col weights
    # b_ref : (1, 1, 128)           f32  this layer's bias (lane zero-padded)
    # o_ref : (1, H, W, 128)        f32  output slab (only first 2 lanes valid)
    # xp_ref: (H+2, W+2*XOFF, 128)  cdt  persistent halo-padded activation scratch
    C = C_PAD
    HW = H * W
    l = pl.program_id(1)

    # First layer of this batch element: zero the halo buffer once (the 1-pixel
    # ring + padded lanes stay zero through all 7 layers) and load the input.
    @pl.when(l == 0)
    def _():
        xp_ref[...] = jnp.zeros_like(xp_ref)
        xp_ref[1:H + 1, XOFF:XOFF + W, :] = x_ref[0].astype(xp_ref.dtype)

    # 3x3 conv (stride 1, pad 1) as 9 accumulating MXU matmuls taken straight
    # from shifted views of the halo buffer (no patch-slab round trip).
    acc = None
    for k in range(9):
        ky, kx = divmod(k, 3)
        v = xp_ref[ky:ky + H, XOFF - 1 + kx:XOFF - 1 + kx + W, :].reshape(HW, C)
        d = jnp.dot(v, w_ref[0, k * C:(k + 1) * C, :],
                    preferred_element_type=jnp.float32)
        acc = d if acc is None else acc + d

    acc = acc + b_ref[0]                                    # f32 bias
    # LeakyReLU(0.1) for conv1..conv6, identity for conv7 (slope -> 1.0).
    slope = jnp.where(l < N_LAYERS - 1, jnp.float32(0.1), jnp.float32(1.0))
    acc = jnp.where(acc >= 0, acc, slope * acc)
    acc_hwc = acc.reshape(H, W, C)

    # Write straight back into the halo scratch for the next layer ...
    @pl.when(l < N_LAYERS - 1)
    def _():
        xp_ref[1:H + 1, XOFF:XOFF + W, :] = acc_hwc.astype(xp_ref.dtype)

    # ... or to the lane-dense output slab on the last layer.
    @pl.when(l == N_LAYERS - 1)
    def _():
        o_ref[0] = acc_hwc.astype(o_ref.dtype)


def _decoder_pallas_impl(x_nchw, packed):
    """x_nchw: (B, Cin, H, W) f32.  packed: (w_all, b_all) from pack_decoder_params."""
    w_all, b_all = packed
    B, Cin, H, W = x_nchw.shape
    assert Cin <= C_PAD, "in_channels must be <= 128 for this kernel"

    cdt = w_all.dtype                                    # MXU compute dtype
    x = jnp.transpose(x_nchw, (0, 2, 3, 1)).astype(cdt)  # NHWC, compute dtype
    x = jnp.pad(x, ((0, 0), (0, 0), (0, 0), (0, C_PAD - Cin)))   # lane pad once

    kernel = functools.partial(_decoder_kernel, H=H, W=W)

    out = pl.pallas_call(
        kernel,
        out_shape=jax.ShapeDtypeStruct((B, H, W, C_PAD), jnp.float32),
        grid_spec=pltpu.PrefetchScalarGridSpec(
            num_scalar_prefetch=0,
            grid=(B, N_LAYERS),
            in_specs=[
                # input: resident across the layer axis (same block index)
                pl.BlockSpec((1, H, W, C_PAD), lambda b, l: (b, 0, 0, 0)),
                # per-layer weight block, DMA pipelined under compute
                pl.BlockSpec((1, 9 * C_PAD, C_PAD), lambda b, l: (l, 0, 0)),
                # per-layer bias block (f32)
                pl.BlockSpec((1, 1, C_PAD), lambda b, l: (l, 0, 0)),
            ],
            out_specs=pl.BlockSpec((1, H, W, C_PAD), lambda b, l: (b, 0, 0, 0)),
            scratch_shapes=[
                # halo-padded activation buffer, persists across the layer axis
                pltpu.VMEM((H + 2, W + 2 * XOFF, C_PAD), cdt),
            ]),
        compiler_params=pltpu.CompilerParams(
            dimension_semantics=("parallel", "arbitrary"),
            vmem_limit_bytes=32 * 1024 * 1024),
    )(x, w_all, b_all)

    # Slice the 2 real output channels off the lane-dense slab; back to NCHW.
    return jnp.transpose(out[..., :2], (0, 3, 1, 2))


decoder_forward_pallas = jax.jit(_decoder_pallas_impl)


# ----------------------------------------------------------------------------
# Host-side (one-time) parameter packing
# ----------------------------------------------------------------------------
def to_dense_hwio(w_ocik, groups):
    """PyTorch (Cout, Cin/g, 3, 3) -> dense block-diagonal HWIO (3,3,Cin,Cout)."""
    Cout, Cin_g, kh, kw = w_ocik.shape
    w_hwio_g = jnp.transpose(w_ocik, (2, 3, 1, 0))          # (3,3,Cin_g,Cout)
    if groups == 1:
        return w_hwio_g
    Cin = Cin_g * groups
    Cout_g = Cout // groups
    dense = jnp.zeros((kh, kw, Cin, Cout), w_ocik.dtype)
    for g in range(groups):
        dense = dense.at[:, :,
                         g * Cin_g:(g + 1) * Cin_g,
                         g * Cout_g:(g + 1) * Cout_g].set(
            w_hwio_g[:, :, :, g * Cout_g:(g + 1) * Cout_g])
    return dense


def _shuffle_perm(c, groups):
    # channel_shuffle: out[c'] = x[perm[c']]
    return jnp.arange(c).reshape(groups, c // groups).T.reshape(-1)


def pack_decoder_params(params, groups, compute_dtype=jnp.bfloat16):
    """Build (w_all, b_all) for the fused kernel.

    INVARIANT (kernel relies on it): weights and bias are ZERO in every padded
    lane, so padded output lanes stay exactly 0 through all 7 layers and the
    sliced-away lanes of the final slab contain no garbage.

    - grouped convs -> exact block-diagonal dense weights
    - the channel_shuffle after conv2/3/4 is folded into the input-channel
      permutation of conv3/4/5 (mathematically identical)
    - channels zero-padded to 128; weights reshaped to (9*128, 128) in
      (ky, kx, cin) row order, matching the kernel's shifted-view matmuls
    """
    names = ["conv1", "conv2", "conv3", "conv4", "conv5", "conv6", "conv7"]
    fold_shuffle = {"conv3", "conv4", "conv5"} if groups > 1 else set()

    w_list, b_list = [], []
    for name in names:
        w, b, g = params[name]
        dense = to_dense_hwio(w, g)                      # (3,3,Cin,Cout)
        if name in fold_shuffle:
            cin = dense.shape[2]
            inv = jnp.argsort(_shuffle_perm(cin, groups))
            dense = dense[:, :, inv, :]                  # fold shuffle into weights
        kh, kw, cin, cout = dense.shape
        wp = jnp.zeros((kh, kw, C_PAD, C_PAD), jnp.float32)
        wp = wp.at[:, :, :cin, :cout].set(dense.astype(jnp.float32))
        w_list.append(wp.reshape(kh * kw * C_PAD, C_PAD))
        bp = jnp.zeros((C_PAD,), jnp.float32).at[:cout].set(b.astype(jnp.float32))
        b_list.append(bp)

    w_all = jnp.stack(w_list).astype(compute_dtype)      # (7, 1152, 128) cdt
    b_all = jnp.stack(b_list).reshape(N_LAYERS, 1, C_PAD)  # (7, 1, 128) f32
    return w_all, b_all


def init_decoder_params(key, in_channels, groups):
    """Deterministic synthetic weights matching the PyTorch module's shapes."""
    cfg = [
        ("conv1", in_channels, 96, 1),
        ("conv2", 96, 96, groups),
        ("conv3", 96, 96, groups),
        ("conv4", 96, 96, groups),
        ("conv5", 96, 64, 1),
        ("conv6", 64, 32, 1),
        ("conv7", 32, 2, 1),
    ]
    params = {}
    for name, cin, cout, g in cfg:
        key, kw, kb = jax.random.split(key, 3)
        cin_g = cin // g
        scale = 1.0 / jnp.sqrt(jnp.float32(cin_g * 9))
        w = jax.random.normal(kw, (cout, cin_g, 3, 3), jnp.float32) * scale
        b = jax.random.normal(kb, (cout,), jnp.float32) * 0.01
        params[name] = (w, b, g)
    return params


# ----------------------------------------------------------------------------
# Pure-JAX reference (explicit grouped conv + explicit channel shuffle)
# ----------------------------------------------------------------------------
def channel_shuffle_nhwc(x, groups):
    B, H, W, C = x.shape
    cpg = C // groups
    x = x.reshape(B, H, W, groups, cpg)
    x = jnp.transpose(x, (0, 1, 2, 4, 3))
    return x.reshape(B, H, W, C)


def _conv_ref(x_nhwc, w_ocik, b, g, relu):
    w_hwio = jnp.transpose(w_ocik, (2, 3, 1, 0))
    y = lax.conv_general_dilated(
        x_nhwc, w_hwio, window_strides=(1, 1), padding=((1, 1), (1, 1)),
        dimension_numbers=("NHWC", "HWIO", "NHWC"),
        feature_group_count=g, precision=lax.Precision.HIGHEST)
    y = y + b
    if relu:
        y = jnp.where(y >= 0, y, 0.1 * y)
    return y


def decoder_forward_ref(x_nchw, params, groups):
    x = jnp.transpose(x_nchw, (0, 2, 3, 1))

    def layer(h, name, relu=True):
        w, b, g = params[name]
        return _conv_ref(h, w, b, g, relu)

    if groups == 1:
        out = layer(x, "conv1")
        out = layer(out, "conv2")
        out = layer(out, "conv3")
        out = layer(out, "conv4")
        out = layer(out, "conv5")
        out = layer(out, "conv6")
        out = layer(out, "conv7", relu=False)
    else:
        out = layer(x, "conv1")
        out = channel_shuffle_nhwc(layer(out, "conv2"), groups)
        out = channel_shuffle_nhwc(layer(out, "conv3"), groups)
        out = channel_shuffle_nhwc(layer(out, "conv4"), groups)
        out = layer(out, "conv5")
        out = layer(out, "conv6")
        out = layer(out, "conv7", relu=False)
    return jnp.transpose(out, (0, 3, 1, 2))


# ----------------------------------------------------------------------------
if __name__ == "__main__":
    key = jax.random.PRNGKey(0)
    B, in_channels, H, W = 2, 16, 16, 16
    groups = 3

    k_x, k_p = jax.random.split(key)
    x = jax.random.normal(k_x, (B, in_channels, H, W), jnp.float32)   # NCHW
    params = init_decoder_params(k_p, in_channels, groups)

    ref = jax.block_until_ready(decoder_forward_ref(x, params, groups))

    # f32 MXU path (reference-exact check).
    packed_f32 = pack_decoder_params(params, groups, jnp.float32)
    out_f32 = jax.block_until_ready(decoder_forward_pallas(x, packed_f32))
    assert out_f32.shape == (B, 2, H, W), out_f32.shape
    assert jnp.allclose(out_f32, ref, rtol=1e-2, atol=1e-2), \
        f"f32 path max abs diff {jnp.max(jnp.abs(out_f32 - ref))}"

    # Default bf16 MXU-input fast path (all TPU generations): bf16 weights and
    # activations, f32 accumulation + f32 bias/LeakyReLU epilogue.
    packed_bf16 = pack_decoder_params(params, groups)                 # bf16 default
    out_bf16 = jax.block_until_ready(decoder_forward_pallas(x, packed_bf16))
    assert out_bf16.shape == (B, 2, H, W), out_bf16.shape
    rel_err = jnp.linalg.norm(out_bf16 - ref) / jnp.linalg.norm(ref)
    assert rel_err < 5e-2, f"bf16 path relative L2 error {rel_err}"

    print("KERNEL_OK")
</pallas_src>

<mosaic_0001>
module attributes {stable_mosaic.version = 11 : i64} {
  func.func @_decoder_kernel(%arg0: i32, %arg1: i32, %arg2: memref<1x16x16x128xf32, #tpu.memory_space<vmem>>, %arg3: memref<1x1152x128xf32, #tpu.memory_space<vmem>>, %arg4: memref<1x1x128xf32, #tpu.memory_space<vmem>>, %arg5: memref<1x16x16x128xf32, #tpu.memory_space<vmem>>, %arg6: memref<18x48x128xf32, #tpu.memory_space<vmem>>) attributes {dimension_semantics = [#tpu.dimension_semantics<parallel>, #tpu.dimension_semantics<arbitrary>], iteration_bounds = array<i64: 2, 7>, scalar_prefetch = 0 : i64, scratch_operands = 1 : i64, tpu.core_type = #tpu.core_type<tc>, window_params = [{transform_indices = @transform_0, window_bounds = array<i64: 1, 16, 16, 128>}, {transform_indices = @transform_1, window_bounds = array<i64: 1, 1152, 128>}, {transform_indices = @transform_2, window_bounds = array<i64: 1, 1, 128>}, {transform_indices = @transform_3, window_bounds = array<i64: 1, 16, 16, 128>}]} {
    %c0_i32 = arith.constant 0 : i32
    %0 = arith.cmpi eq, %arg1, %c0_i32 : i32
    %1 = arith.extui %0 : i1 to i32
    %c0_i32_0 = arith.constant 0 : i32
    %2 = arith.cmpi ne, %1, %c0_i32_0 : i32
    scf.if %2 {
      %cst_59 = arith.constant 0.000000e+00 : f32
      %74 = vector.broadcast %cst_59 : f32 to vector<18x48x128xf32>
      %c0_60 = arith.constant 0 : index
      %c0_61 = arith.constant 0 : index
      %c0_62 = arith.constant 0 : index
      %75 = vector.load %arg6[%c0_60, %c0_61, %c0_62] : memref<18x48x128xf32, #tpu.memory_space<vmem>>, vector<18x48x128xf32>
      tpu.vector_store %arg6[%c0_60, %c0_61, %c0_62], %74 {strides = array<i32>} : memref<18x48x128xf32, #tpu.memory_space<vmem>>, vector<18x48x128xf32>,
      %c0_63 = arith.constant 0 : index
      %c0_64 = arith.constant 0 : index
      %c0_65 = arith.constant 0 : index
      %c0_66 = arith.constant 0 : index
      %76 = vector.load %arg2[%c0_63, %c0_64, %c0_65, %c0_66] : memref<1x16x16x128xf32, #tpu.memory_space<vmem>>, vector<1x16x16x128xf32>
      %77 = vector.shape_cast %76 : vector<1x16x16x128xf32> to vector<16x16x128xf32>
      %c1_67 = arith.constant 1 : index
      %c16_68 = arith.constant 16 : index
      %c0_69 = arith.constant 0 : index
      %78 = vector.load %arg6[%c1_67, %c16_68, %c0_69] : memref<18x48x128xf32, #tpu.memory_space<vmem>>, vector<16x16x128xf32>
      tpu.vector_store %arg6[%c1_67, %c16_68, %c0_69], %77 {strides = array<i32>} : memref<18x48x128xf32, #tpu.memory_space<vmem>>, vector<16x16x128xf32>,
    } else {
    }
    %c0 = arith.constant 0 : index
    %c15 = arith.constant 15 : index
    %c0_1 = arith.constant 0 : index
    %3 = vector.load %arg6[%c0, %c15, %c0_1] : memref<18x48x128xf32, #tpu.memory_space<vmem>>, vector<16x16x128xf32>
    %4 = vector.shape_cast %3 : vector<16x16x128xf32> to vector<256x128xf32>
    %c0_2 = arith.constant 0 : index
    %c0_3 = arith.constant 0 : index
    %c0_4 = arith.constant 0 : index
    %5 = vector.load %arg3[%c0_2, %c0_3, %c0_4] : memref<1x1152x128xf32, #tpu.memory_space<vmem>>, vector<1x128x128xf32>
    %6 = vector.shape_cast %5 : vector<1x128x128xf32> to vector<128x128xf32>
    %cst = arith.constant dense<0.000000e+00> : vector<256x128xf32>
    %7 = tpu.matmul %4, %6, %cst {dimension_numbers = #tpu.dot_dimension_numbers<[1], [0], [0], [1], [0, 0, 1, 1], [], []>} : vector<256x128xf32>, vector<128x128xf32>, vector<256x128xf32> -> vector<256x128xf32>
    %c0_5 = arith.constant 0 : index
    %c16 = arith.constant 16 : index
    %c0_6 = arith.constant 0 : index
    %8 = vector.load %arg6[%c0_5, %c16, %c0_6] : memref<18x48x128xf32, #tpu.memory_space<vmem>>, vector<16x16x128xf32>
    %9 = vector.shape_cast %8 : vector<16x16x128xf32> to vector<256x128xf32>
    %c0_7 = arith.constant 0 : index
    %c128 = arith.constant 128 : index
    %c0_8 = arith.constant 0 : index
    %10 = vector.load %arg3[%c0_7, %c128, %c0_8] : memref<1x1152x128xf32, #tpu.memory_space<vmem>>, vector<1x128x128xf32>
    %11 = vector.shape_cast %10 : vector<1x128x128xf32> to vector<128x128xf32>
    %cst_9 = arith.constant dense<0.000000e+00> : vector<256x128xf32>
    %12 = tpu.matmul %9, %11, %cst_9 {dimension_numbers = #tpu.dot_dimension_numbers<[1], [0], [0], [1], [0, 0, 1, 1], [], []>} : vector<256x128xf32>, vector<128x128xf32>, vector<256x128xf32> -> vector<256x128xf32>
    %13 = arith.addf %7, %12 : vector<256x128xf32>
    %c0_10 = arith.constant 0 : index
    %c17 = arith.constant 17 : index
    %c0_11 = arith.constant 0 : index
    %14 = vector.load %arg6[%c0_10, %c17, %c0_11] : memref<18x48x128xf32, #tpu.memory_space<vmem>>, vector<16x16x128xf32>
    %15 = vector.shape_cast %14 : vector<16x16x128xf32> to vector<256x128xf32>
    %c0_12 = arith.constant 0 : index
    %c256 = arith.constant 256 : index
    %c0_13 = arith.constant 0 : index
    %16 = vector.load %arg3[%c0_12, %c256, %c0_13] : memref<1x1152x128xf32, #tpu.memory_space<vmem>>, vector<1x128x128xf32>
    %17 = vector.shape_cast %16 : vector<1x128x128xf32> to vector<128x128xf32>
    %cst_14 = arith.constant dense<0.000000e+00> : vector<256x128xf32>
    %18 = tpu.matmul %15, %17, %cst_14 {dimension_numbers = #tpu.dot_dimension_numbers<[1], [0], [0], [1], [0, 0, 1, 1], [], []>} : vector<256x128xf32>, vector<128x128xf32>, vector<256x128xf32> -> vector<256x128xf32>
    %19 = arith.addf %13, %18 : vector<256x128xf32>
    %c1 = arith.constant 1 : index
    %c15_15 = arith.constant 15 : index
    %c0_16 = arith.constant 0 : index
    %20 = vector.load %arg6[%c1, %c15_15, %c0_16] : memref<18x48x128xf32, #tpu.memory_space<vmem>>, vector<16x16x128xf32>
    %21 = vector.shape_cast %20 : vector<16x16x128xf32> to vector<256x128xf32>
    %c0_17 = arith.constant 0 : index
    %c384 = arith.constant 384 : index
    %c0_18 = arith.constant 0 : index
    %22 = vector.load %arg3[%c0_17, %c384, %c0_18] : memref<1x1152x128xf32, #tpu.memory_space<vmem>>, vector<1x128x128xf32>
    %23 = vector.shape_cast %22 : vector<1x128x128xf32> to vector<128x128xf32>
    %cst_19 = arith.constant dense<0.000000e+00> : vector<256x128xf32>
    %24 = tpu.matmul %21, %23, %cst_19 {dimension_numbers = #tpu.dot_dimension_numbers<[1], [0], [0], [1], [0, 0, 1, 1], [], []>} : vector<256x128xf32>, vector<128x128xf32>, vector<256x128xf32> -> vector<256x128xf32>
    %25 = arith.addf %19, %24 : vector<256x128xf32>
    %c1_20 = arith.constant 1 : index
    %c16_21 = arith.constant 16 : index
    %c0_22 = arith.constant 0 : index
    %26 = vector.load %arg6[%c1_20, %c16_21, %c0_22] : memref<18x48x128xf32, #tpu.memory_space<vmem>>, vector<16x16x128xf32>
    %27 = vector.shape_cast %26 : vector<16x16x128xf32> to vector<256x128xf32>
    %c0_23 = arith.constant 0 : index
    %c512 = arith.constant 512 : index
    %c0_24 = arith.constant 0 : index
    %28 = vector.load %arg3[%c0_23, %c512, %c0_24] : memref<1x1152x128xf32, #tpu.memory_space<vmem>>, vector<1x128x128xf32>
    %29 = vector.shape_cast %28 : vector<1x128x128xf32> to vector<128x128xf32>
    %cst_25 = arith.constant dense<0.000000e+00> : vector<256x128xf32>
    %30 = tpu.matmul %27, %29, %cst_25 {dimension_numbers = #tpu.dot_dimension_numbers<[1], [0], [0], [1], [0, 0, 1, 1], [], []>} : vector<256x128xf32>, vector<128x128xf32>, vector<256x128xf32> -> vector<256x128xf32>
    %31 = arith.addf %25, %30 : vector<256x128xf32>
    %c1_26 = arith.constant 1 : index
    %c17_27 = arith.constant 17 : index
    %c0_28 = arith.constant 0 : index
    %32 = vector.load %arg6[%c1_26, %c17_27, %c0_28] : memref<18x48x128xf32, #tpu.memory_space<vmem>>, vector<16x16x128xf32>
    %33 = vector.shape_cast %32 : vector<16x16x128xf32> to vector<256x128xf32>
    %c0_29 = arith.constant 0 : index
    %c640 = arith.constant 640 : index
    %c0_30 = arith.constant 0 : index
    %34 = vector.load %arg3[%c0_29, %c640, %c0_30] : memref<1x1152x128xf32, #tpu.memory_space<vmem>>, vector<1x128x128xf32>
    %35 = vector.shape_cast %34 : vector<1x128x128xf32> to vector<128x128xf32>
    %cst_31 = arith.constant dense<0.000000e+00> : vector<256x128xf32>
    %36 = tpu.matmul %33, %35, %cst_31 {dimension_numbers = #tpu.dot_dimension_numbers<[1], [0], [0], [1], [0, 0, 1, 1], [], []>} : vector<256x128xf32>, vector<128x128xf32>, vector<256x128xf32> -> vector<256x128xf32>
    %37 = arith.addf %31, %36 : vector<256x128xf32>
    %c2 = arith.constant 2 : index
    %c15_32 = arith.constant 15 : index
    %c0_33 = arith.constant 0 : index
    %38 = vector.load %arg6[%c2, %c15_32, %c0_33] : memref<18x48x128xf32, #tpu.memory_space<vmem>>, vector<16x16x128xf32>
    %39 = vector.shape_cast %38 : vector<16x16x128xf32> to vector<256x128xf32>
    %c0_34 = arith.constant 0 : index
    %c768 = arith.constant 768 : index
    %c0_35 = arith.constant 0 : index
    %40 = vector.load %arg3[%c0_34, %c768, %c0_35] : memref<1x1152x128xf32, #tpu.memory_space<vmem>>, vector<1x128x128xf32>
    %41 = vector.shape_cast %40 : vector<1x128x128xf32> to vector<128x128xf32>
    %cst_36 = arith.constant dense<0.000000e+00> : vector<256x128xf32>
    %42 = tpu.matmul %39, %41, %cst_36 {dimension_numbers = #tpu.dot_dimension_numbers<[1], [0], [0], [1], [0, 0, 1, 1], [], []>} : vector<256x128xf32>, vector<128x128xf32>, vector<256x128xf32> -> vector<256x128xf32>
    %43 = arith.addf %37, %42 : vector<256x128xf32>
    %c2_37 = arith.constant 2 : index
    %c16_38 = arith.constant 16 : index
    %c0_39 = arith.constant 0 : index
    %44 = vector.load %arg6[%c2_37, %c16_38, %c0_39] : memref<18x48x128xf32, #tpu.memory_space<vmem>>, vector<16x16x128xf32>
    %45 = vector.shape_cast %44 : vector<16x16x128xf32> to vector<256x128xf32>
    %c0_40 = arith.constant 0 : index
    %c896 = arith.constant 896 : index
    %c0_41 = arith.constant 0 : index
    %46 = vector.load %arg3[%c0_40, %c896, %c0_41] : memref<1x1152x128xf32, #tpu.memory_space<vmem>>, vector<1x128x128xf32>
    %47 = vector.shape_cast %46 : vector<1x128x128xf32> to vector<128x128xf32>
    %cst_42 = arith.constant dense<0.000000e+00> : vector<256x128xf32>
    %48 = tpu.matmul %45, %47, %cst_42 {dimension_numbers = #tpu.dot_dimension_numbers<[1], [0], [0], [1], [0, 0, 1, 1], [], []>} : vector<256x128xf32>, vector<128x128xf32>, vector<256x128xf32> -> vector<256x128xf32>
    %49 = arith.addf %43, %48 : vector<256x128xf32>
    %c2_43 = arith.constant 2 : index
    %c17_44 = arith.constant 17 : index
    %c0_45 = arith.constant 0 : index
    %50 = vector.load %arg6[%c2_43, %c17_44, %c0_45] : memref<18x48x128xf32, #tpu.memory_space<vmem>>, vector<16x16x128xf32>
    %51 = vector.shape_cast %50 : vector<16x16x128xf32> to vector<256x128xf32>
    %c0_46 = arith.constant 0 : index
    %c1024 = arith.constant 1024 : index
    %c0_47 = arith.constant 0 : index
    %52 = vector.load %arg3[%c0_46, %c1024, %c0_47] : memref<1x1152x128xf32, #tpu.memory_space<vmem>>, vector<1x128x128xf32>
    %53 = vector.shape_cast %52 : vector<1x128x128xf32> to vector<128x128xf32>
    %cst_48 = arith.constant dense<0.000000e+00> : vector<256x128xf32>
    %54 = tpu.matmul %51, %53, %cst_48 {dimension_numbers = #tpu.dot_dimension_numbers<[1], [0], [0], [1], [0, 0, 1, 1], [], []>} : vector<256x128xf32>, vector<128x128xf32>, vector<256x128xf32> -> vector<256x128xf32>
    %55 = arith.addf %49, %54 : vector<256x128xf32>
    %c0_49 = arith.constant 0 : index
    %c0_50 = arith.constant 0 : index
    %c0_51 = arith.constant 0 : index
    %56 = vector.load %arg4[%c0_49, %c0_50, %c0_51] : memref<1x1x128xf32, #tpu.memory_space<vmem>>, vector<1x1x128xf32>
    %57 = vector.shape_cast %56 : vector<1x1x128xf32> to vector<1x128xf32>
    %58 = vector.broadcast %57 : vector<1x128xf32> to vector<256x128xf32>
    %59 = arith.addf %55, %58 : vector<256x128xf32>
    %c6_i32 = arith.constant 6 : i32
    %60 = arith.cmpi slt, %arg1, %c6_i32 : i32
    %cst_52 = arith.constant 1.000000e-01 : f32
    %cst_53 = arith.constant 1.000000e+00 : f32
    %61 = arith.select %60, %cst_52, %cst_53 : f32
    %cst_54 = arith.constant 0.000000e+00 : f32
    %62 = vector.broadcast %cst_54 : f32 to vector<256x128xf32>
    %63 = arith.cmpf oge, %59, %62 : vector<256x128xf32>
    %64 = vector.broadcast %61 : f32 to vector<256x128xf32>
    %65 = arith.mulf %64, %59 : vector<256x128xf32>
    %66 = arith.select %63, %59, %65 : vector<256x128xi1>, vector<256x128xf32>
    %67 = vector.shape_cast %66 : vector<256x128xf32> to vector<16x16x128xf32>
    %c6_i32_55 = arith.constant 6 : i32
    %68 = arith.cmpi slt, %arg1, %c6_i32_55 : i32
    %69 = arith.extui %68 : i1 to i32
    %c0_i32_56 = arith.constant 0 : i32
    %70 = arith.cmpi ne, %69, %c0_i32_56 : i32
    scf.if %70 {
      %c1_59 = arith.constant 1 : index
      %c16_60 = arith.constant 16 : index
      %c0_61 = arith.constant 0 : index
      %74 = vector.load %arg6[%c1_59, %c16_60, %c0_61] : memref<18x48x128xf32, #tpu.memory_space<vmem>>, vector<16x16x128xf32>
      tpu.vector_store %arg6[%c1_59, %c16_60, %c0_61], %67 {strides = array<i32>} : memref<18x48x128xf32, #tpu.memory_space<vmem>>, vector<16x16x128xf32>,
    } else {
    }
    %c6_i32_57 = arith.constant 6 : i32
    %71 = arith.cmpi eq, %arg1, %c6_i32_57 : i32
    %72 = arith.extui %71 : i1 to i32
    %c0_i32_58 = arith.constant 0 : i32
    %73 = arith.cmpi ne, %72, %c0_i32_58 : i32
    scf.if %73 {
      %c0_59 = arith.constant 0 : index
      %c0_60 = arith.constant 0 : index
      %c0_61 = arith.constant 0 : index
      %c0_62 = arith.constant 0 : index
      %74 = vector.load %arg5[%c0_59, %c0_60, %c0_61, %c0_62] : memref<1x16x16x128xf32, #tpu.memory_space<vmem>>, vector<1x16x16x128xf32>
      %75 = vector.shape_cast %74 : vector<1x16x16x128xf32> to vector<16x16x128xf32>
      %76 = vector.shape_cast %67 : vector<16x16x128xf32> to vector<1x16x16x128xf32>
      tpu.vector_store %arg5[%c0_59, %c0_60, %c0_61, %c0_62], %76 {strides = array<i32>} : memref<1x16x16x128xf32, #tpu.memory_space<vmem>>, vector<1x16x16x128xf32>,
    } else {
    }
    return
  }
  func.func @transform_0(%arg0: i32, %arg1: i32) -> (i32, i32, i32, i32) {
    %c0_i32 = arith.constant 0 : i32
    %c0_i32_0 = arith.constant 0 : i32
    %c0_i32_1 = arith.constant 0 : i32
    %c0_i32_2 = arith.constant 0 : i32
    return %arg0, %c0_i32, %c0_i32_0, %c0_i32_1 : i32, i32, i32, i32
  }
  func.func @transform_1(%arg0: i32, %arg1: i32) -> (i32, i32, i32) {
    %c0_i32 = arith.constant 0 : i32
    %c0_i32_0 = arith.constant 0 : i32
    %c0_i32_1 = arith.constant 0 : i32
    return %arg1, %c0_i32, %c0_i32_0 : i32, i32, i32
  }
  func.func @transform_2(%arg0: i32, %arg1: i32) -> (i32, i32, i32) {
    %c0_i32 = arith.constant 0 : i32
    %c0_i32_0 = arith.constant 0 : i32
    %c0_i32_1 = arith.constant 0 : i32
    return %arg1, %c0_i32, %c0_i32_0 : i32, i32, i32
  }
  func.func @transform_3(%arg0: i32, %arg1: i32) -> (i32, i32, i32, i32) {
    %c0_i32 = arith.constant 0 : i32
    %c0_i32_0 = arith.constant 0 : i32
    %c0_i32_1 = arith.constant 0 : i32
    %c0_i32_2 = arith.constant 0 : i32
    return %arg0, %c0_i32, %c0_i32_0, %c0_i32_1 : i32, i32, i32, i32
  }
}

</mosaic_0001>

<llo_original>
// kernel: _decoder_pallas_impl.1
$region0: #{_decoder_pallas_impl.1}
  #allocation0 [shape = 'u32[]', space=smem, size = 0x4, offset = 0x4, fixed_abs, tag = 'smem constant byte address 0x4 - core index']
  #allocation1 [shape = 'u32[144,128]{1,0:T(1,128)}', space=vmem, size = 0x12000, scoped, tag = 'internal scratch']
  #allocation2 [shape = 'f32[18,48,128]{2,1,0:T(8,128)}', space=vmem, size = 0x6c000, scoped, tag = 'scratch operand']
  %s0 = inlined_call_operand.vmem [shape: f32[2,16,16,128], index: 0, kind: input, shape index: {}]
  %s1 = inlined_call_operand.hbm [shape: f32[7,1152,128], index: 1, kind: input, shape index: {}]
  %s2 = inlined_call_operand.hbm [shape: f32[7,1,128], index: 2, kind: input, shape index: {}]
  %s3 = inlined_call_operand.vmem [shape: f32[2,16,16,128], index: 3, kind: output, shape index: {}]
  %s4 = sld [smem:[#allocation0]]
  $region65: #{_decoder_pallas_impl.1} parent=0
    _
  %s6 = ssub.s32 1, %s4
  %s7 = scalar_select 0, %s6, %s4
  $region1: #{_decoder_pallas_impl.1} parent=0
    #allocation3 [shape = 'u8[1179648]{0}', space=vmem, size = 0x120000, scoped, tag = 'input window, operand 1']
    #allocation4 [shape = 's32[2]{0}', space=sflag, size = 0x8, scoped, tag = 'scoped memory for _decoder_pallas_impl.1']
    #allocation5 [shape = 'u8[1024]{0}', space=vmem, size = 0x400, scoped, tag = 'input window, operand 2']
    #allocation6 [shape = 's32[2]{0}', space=sflag, size = 0x8, scoped, tag = 'scoped memory for _decoder_pallas_impl.1']
    %8 = vsyncpa [#allocation4], 0
    %s9 = scalar_lea.sflag [#allocation4], 1
    %10 = vsyncpa %s9, 0
    %11 = vsyncpa [#allocation6], 0
    %s12 = scalar_lea.sflag [#allocation6], 1
    %13 = vsyncpa %s12, 0
    loop: start=0, step=1, limit=16
    $region2: #{_decoder_pallas_impl.1} parent=1 // loop_pre_header
      _
    $region3: #{_decoder_pallas_impl.1} parent=1 // loop_header
      %s15 = sphi 0, %s19
      %p16 = scmp.ge.s32.totalorder %s15, 16
      %s22 = sphi 0, %s34
      %s23 = sphi 0, %s30
      %s24 = sphi 0, %s22
      %s25 = sphi 0, %s23
      %s26 = sphi 0, %s24
      %s27 = sphi 0, %s25
      %s37 = sphi 0, %s39
      %s40 = sphi 0, %s37
      %s41 = sphi 0, %s40
      %s57 = sphi 0, %s41
      %s63 = sphi 0, %s65
      %s66 = sphi 0, %s63
      %s67 = sphi 0, %s66
      %s83 = sphi 0, %s67
      %s89 = sphi 0, %s91
      %s92 = sphi 0, %s89
      %s93 = sphi 0, %s92
      %s109 = sphi 0, %s93
      %s115 = sphi 0, %s117
      %s118 = sphi 0, %s115
      %s119 = sphi 0, %s118
      %s135 = sphi 0, %s119
    $region4: #{_decoder_pallas_impl.1} parent=1 // loop_header_branch
      %18 = sbr.rel (%p16) target = $region8
    $region5: #{_decoder_pallas_impl.1} parent=1 // loop_body
      %s20 = ssub.s32 %s15, 1
      %s21 = ssub.s32 %s15, 2
      %s28 = sadd.s32 1, %s23
      %p29 = scmp.ge.s32.totalorder %s28, 7
      %s30 = scalar_select %p29, 0, %s28
      %s31 = sadd.s32 1, %s22
      %s32 = scalar_select %p29, %s31, %s22
      %p33 = scmp.ge.s32.totalorder %s32, 2
      %s34 = scalar_select %p33, 0, %s32
      %s35 = ssub.s32 %s22, %s34
      %p36 = scmp.eq.s32.totalorder %s35, 0
      %s38 = sadd.s32 %s37, 1
      %s39 = scalar_select %p36, %s37, %s38
      %p42 = pneg %p36
      %p43 = scmp.eq.s32.totalorder %s15, 13
      %p44 = por %p42, %p43
      %p45 = scmp.ne.s32.totalorder %s37, %s40
      %p46 = scmp.eq.s32.totalorder %s15, 0
      %p47 = por %p45, %p46
      %p48 = scmp.ne.s32.totalorder %s37, %s40
      %p49 = scmp.eq.s32.totalorder %s20, 13
      %p50 = por %p48, %p49
      %p51 = scmp.ne.s32.totalorder %s40, %s41
      %p52 = scmp.eq.s32.totalorder %s20, 0
      %p53 = por %p51, %p52
      %p54 = scmp.ne.s32.totalorder %s40, %s41
      %p55 = scmp.eq.s32.totalorder %s21, 13
      %p56 = por %p54, %p55
      %p58 = scmp.ne.s32.totalorder %s41, %s57
      %p59 = scmp.eq.s32.totalorder %s21, 0
      %p60 = por %p58, %p59
      %s61 = ssub.s32 %s23, %s30
      %p62 = scmp.eq.s32.totalorder %s61, 0
      %s64 = sadd.s32 %s63, 1
      %s65 = scalar_select %p62, %s63, %s64
      %p68 = pneg %p62
      %p69 = scmp.eq.s32.totalorder %s15, 13
      %p70 = por %p68, %p69
      %p71 = scmp.ne.s32.totalorder %s63, %s66
      %p72 = scmp.eq.s32.totalorder %s15, 0
      %p73 = por %p71, %p72
      %p74 = scmp.ne.s32.totalorder %s63, %s66
      %p75 = scmp.eq.s32.totalorder %s20, 13
      %p76 = por %p74, %p75
      %p77 = scmp.ne.s32.totalorder %s66, %s67
      %p78 = scmp.eq.s32.totalorder %s20, 0
      %p79 = por %p77, %p78
      %p80 = scmp.ne.s32.totalorder %s66, %s67
      %p81 = scmp.eq.s32.totalorder %s21, 13
      %p82 = por %p80, %p81
      %p84 = scmp.ne.s32.totalorder %s67, %s83
      %p85 = scmp.eq.s32.totalorder %s21, 0
      %p86 = por %p84, %p85
      %s87 = ssub.s32 %s23, %s30
      %p88 = scmp.eq.s32.totalorder %s87, 0
      %s90 = sadd.s32 %s89, 1
      %s91 = scalar_select %p88, %s89, %s90
      %p94 = pneg %p88
      %p95 = scmp.eq.s32.totalorder %s15, 13
      %p96 = por %p94, %p95
      %p97 = scmp.ne.s32.totalorder %s89, %s92
      %p98 = scmp.eq.s32.totalorder %s15, 0
      %p99 = por %p97, %p98
      %p100 = scmp.ne.s32.totalorder %s89, %s92
      %p101 = scmp.eq.s32.totalorder %s20, 13
      %p102 = por %p100, %p101
      %p103 = scmp.ne.s32.totalorder %s92, %s93
      %p104 = scmp.eq.s32.totalorder %s20, 0
      %p105 = por %p103, %p104
      %p106 = scmp.ne.s32.totalorder %s92, %s93
      %p107 = scmp.eq.s32.totalorder %s21, 13
      %p108 = por %p106, %p107
      %p110 = scmp.ne.s32.totalorder %s93, %s109
      %p111 = scmp.eq.s32.totalorder %s21, 0
      %p112 = por %p110, %p111
      %s113 = ssub.s32 %s22, %s34
      %p114 = scmp.eq.s32.totalorder %s113, 0
      %s116 = sadd.s32 %s115, 1
      %s117 = scalar_select %p114, %s115, %s116
      %p120 = pneg %p114
      %p121 = scmp.eq.s32.totalorder %s15, 13
      %p122 = por %p120, %p121
      %p123 = scmp.ne.s32.totalorder %s115, %s118
      %p124 = scmp.eq.s32.totalorder %s15, 0
      %p125 = por %p123, %p124
      %p126 = scmp.ne.s32.totalorder %s115, %s118
      %p127 = scmp.eq.s32.totalorder %s20, 13
      %p128 = por %p126, %p127
      %p129 = scmp.ne.s32.totalorder %s118, %s119
      %p130 = scmp.eq.s32.totalorder %s20, 0
      %p131 = por %p129, %p130
      %p132 = scmp.ne.s32.totalorder %s118, %s119
      %p133 = scmp.eq.s32.totalorder %s21, 13
      %p134 = por %p132, %p133
      %p136 = scmp.ne.s32.totalorder %s119, %s135
      %p137 = scmp.eq.s32.totalorder %s21, 0
      %p138 = por %p136, %p137
      %p139 = scmp.le.s32.totalorder 1, %s15
      %p140 = scmp.lt.s32.totalorder %s15, 15
      %p141 = pnand %p139, %p140
      %p142 = pneg %p141
      // Predicated region
      $region9: #{_decoder_pallas_impl.1} parent=5 // pred_check
        _
      $region10: #{_decoder_pallas_impl.1} parent=5 // pred_check_branch
        %144 = sbr.rel (%p141) target = $region12
      $region11: #{_decoder_pallas_impl.1} parent=5 // pred_region
        %s145 = ssub.s32 %s15, 1
      $region12: #{_decoder_pallas_impl.1} parent=5 // pred_fallthru
        _
      %p146 = scmp.lt.s32.totalorder %s15, 14
      // Predicated region
      $region13: #{_decoder_pallas_impl.1} parent=5 // pred_check
        %p147 = pneg %p146
      $region14: #{_decoder_pallas_impl.1} parent=5 // pred_check_branch
        %149 = sbr.rel (%p147) target = $region16
      $region15: #{_decoder_pallas_impl.1} parent=5 // pred_region
        // Predicated region
        $region17: #{_decoder_pallas_impl.1} parent=15 // pred_check
          %p150 = pneg %p47
        $region18: #{_decoder_pallas_impl.1} parent=15 // pred_check_branch
          %152 = sbr.rel (%p150) target = $region20
        $region19: #{_decoder_pallas_impl.1} parent=15 // pred_region
          %p153 = scmp.lt.s32.totalorder %s22, 1
          %s154 = scalar_select %p153, %s22, 1
          %s155 = smul.addr %s154, 32
          %s156 = smul.addr %s155, 8
          %s157 = scalar_lea.vmem %s0, %s156
        $region20: #{_decoder_pallas_impl.1} parent=15 // pred_fallthru
          _
        // Predicated region
        $region21: #{_decoder_pallas_impl.1} parent=15 // pred_check
          %p158 = pneg %p73
        $region22: #{_decoder_pallas_impl.1} parent=15 // pred_check_branch
          %160 = sbr.rel (%p158) target = $region24
        $region23: #{_decoder_pallas_impl.1} parent=15 // pred_region
          %s161 = sand.u32 %s63, 1
          %s162 = scalar_lea.sflag [#allocation4], %s161
          %s163 = sand.u32 %s63, 1
          %s164 = smul.addr %s163, 1152
          %s165 = scalar_lea.vmem [#allocation3], %s164
          %s167 = ssub.s32 18432, 18432
          %168 = vsyncadd %s162, %s167
          %s169 = smul.addr %s23, 144
          %s170 = smul.addr %s169, 128
          %s171 = scalar_lea.hbm %s1, %s170
          %s172 = sshll.u32 %s165, 4
          %s173 = int_to_ptr.vmem [resolvable:$true] %s172
          %178 = dma.hbm_to_vmem [thread:$0]  %s171, 18432, %s173, %s162, 128, 128, 8
        $region24: #{_decoder_pallas_impl.1} parent=15 // pred_fallthru
          _
        // Predicated region
        $region25: #{_decoder_pallas_impl.1} parent=15 // pred_check
          %p179 = pneg %p99
        $region26: #{_decoder_pallas_impl.1} parent=15 // pred_check_branch
          %181 = sbr.rel (%p179) target = $region28
        $region27: #{_decoder_pallas_impl.1} parent=15 // pred_region
          %s182 = sand.u32 %s89, 1
          %s183 = scalar_lea.sflag [#allocation6], %s182
          %s184 = sand.u32 %s89, 1
          %s185 = scalar_lea.vmem [#allocation5], %s184
          %s187 = ssub.s32 16, 16
          %188 = vsyncadd %s183, %s187
          %s189 = smul.addr %s23, 16
          %s190 = scalar_lea.hbm %s2, %s189
          %s192 = sshll.u32 %s185, 4
          %s193 = int_to_ptr.vmem [resolvable:$true] %s192
          %195 = dma.hbm_to_vmem [thread:$0]  %s190, 16, %s193, %s183
        $region28: #{_decoder_pallas_impl.1} parent=15 // pred_fallthru
          _
      $region16: #{_decoder_pallas_impl.1} parent=5 // pred_fallthru
        _
      %p196 = scmp.le.s32.totalorder 1, %s15
      %p197 = scmp.lt.s32.totalorder %s15, 15
      %p198 = pnand %p196, %p197
      %p199 = pneg %p198
      // Predicated region
      $region29: #{_decoder_pallas_impl.1} parent=5 // pred_check
        _
      $region30: #{_decoder_pallas_impl.1} parent=5 // pred_check_branch
        %201 = sbr.rel (%p198) target = $region32
      $region31: #{_decoder_pallas_impl.1} parent=5 // pred_region
        %s202 = ssub.s32 %s15, 1
        %s203 = sand.u32 %s66, 1
        %s204 = scalar_lea.sflag [#allocation4], %s203
        %s205 = sand.u32 %s66, 1
        %s206 = smul.addr %s205, 1152
        %s207 = scalar_lea.vmem [#allocation3], %s206
        // Predicated region
        $region33: #{_decoder_pallas_impl.1} parent=31 // pred_check
          %p208 = pneg %p79
        $region34: #{_decoder_pallas_impl.1} parent=31 // pred_check_branch
          %210 = sbr.rel (%p208) target = $region36
        $region35: #{_decoder_pallas_impl.1} parent=31 // pred_region
          %211 = dma.done %s204, 18432
        $region36: #{_decoder_pallas_impl.1} parent=31 // pred_fallthru
          _
        %s212 = sand.u32 %s92, 1
        %s213 = scalar_lea.sflag [#allocation6], %s212
        %s214 = sand.u32 %s92, 1
        %s215 = scalar_lea.vmem [#allocation5], %s214
        // Predicated region
        $region37: #{_decoder_pallas_impl.1} parent=31 // pred_check
          %p216 = pneg %p105
        $region38: #{_decoder_pallas_impl.1} parent=31 // pred_check_branch
          %218 = sbr.rel (%p216) target = $region40
        $region39: #{_decoder_pallas_impl.1} parent=31 // pred_region
          %219 = dma.done %s213, 16
        $region40: #{_decoder_pallas_impl.1} parent=31 // pred_fallthru
          _
        %p220 = scmp.lt.s32.totalorder %s24, 1
        %s221 = scalar_select %p220, %s24, 1
        %s222 = smul.addr %s221, 32
        %s223 = smul.addr %s222, 8
        %s224 = scalar_lea.vmem %s0, %s223
        %p225 = pneg %p53
        %p226 = pneg %p50
        %s227 = sand.u32 %s66, 1
        %s228 = scalar_lea.sflag [#allocation4], %s227
        %s229 = sand.u32 %s66, 1
        %s230 = smul.addr %s229, 1152
        %s231 = scalar_lea.vmem [#allocation3], %s230
        %p232 = pneg %p79
        %p233 = pneg %p76
        %s234 = sand.u32 %s92, 1
        %s235 = scalar_lea.sflag [#allocation6], %s234
        %s236 = sand.u32 %s92, 1
        %s237 = scalar_lea.vmem [#allocation5], %s236
        %p238 = pneg %p105
        %p239 = pneg %p102
        %p240 = pneg %p131
        %p241 = pneg %p128
        %p242 = scmp.lt.s32.totalorder %s24, 1
        %s243 = scalar_select %p242, %s24, 1
        %s244 = smul.addr %s243, 32
        %s245 = smul.addr %s244, 8
        %s246 = scalar_lea.vmem %s3, %s245
        %p247 = scmp.lt.s32.totalorder %s24, 1
        %s248 = scalar_select %p247, %s24, 1
        %s249 = smul.addr %s248, 32
        %s250 = smul.addr %s249, 8
        %s251 = scalar_lea.vmem %s0, %s250
        %p252 = scmp.lt.s32.totalorder %s24, 1
        %s253 = scalar_select %p252, %s24, 1
        %s254 = smul.addr %s253, 32
        %s255 = smul.addr %s254, 8
        %s256 = scalar_lea.vmem %s3, %s255
        %p257 = scmp.eq.s32.totalorder %s25, 0
        // Predicated region
        $region41: #{_decoder_pallas_impl.1} parent=31 // pred_check
          %p258 = pneg %p257
        $region42: #{_decoder_pallas_impl.1} parent=31 // pred_check_branch
          %260 = sbr.rel (%p258) target = $region44
        $region43: #{_decoder_pallas_impl.1} parent=31 // pred_region
          %261 = vst [vmem:[#allocation2] sm:$0xff] 0.0
          %262 = vst [vmem:[#allocation2 + $0x8] sm:$0xff] 0.0
          %263 = vst [vmem:[#allocation2 + $0x10] sm:$0xff] 0.0
          %264 = vst [vmem:[#allocation2 + $0x18] sm:$0xff] 0.0
          %265 = vst [vmem:[#allocation2 + $0x20] sm:$0xff] 0.0
          %266 = vst [vmem:[#allocation2 + $0x28] sm:$0xff] 0.0
          %267 = vst [vmem:[#allocation2 + $0x30] sm:$0xff] 0.0
          %268 = vst [vmem:[#allocation2 + $0x38] sm:$0xff] 0.0
          %269 = vst [vmem:[#allocation2 + $0x40] sm:$0xff] 0.0
          %270 = vst [vmem:[#allocation2 + $0x48] sm:$0xff] 0.0
          %271 = vst [vmem:[#allocation2 + $0x50] sm:$0xff] 0.0
          %272 = vst [vmem:[#allocation2 + $0x58] sm:$0xff] 0.0
          %273 = vst [vmem:[#allocation2 + $0x60] sm:$0xff] 0.0
          %274 = vst [vmem:[#allocation2 + $0x68] sm:$0xff] 0.0
          %275 = vst [vmem:[#allocation2 + $0x70] sm:$0xff] 0.0
          %276 = vst [vmem:[#allocation2 + $0x78] sm:$0xff] 0.0
          %277 = vst [vmem:[#allocation2 + $0x80] sm:$0xff] 0.0
          %278 = vst [vmem:[#allocation2 + $0x88] sm:$0xff] 0.0
          %279 = vst [vmem:[#allocation2 + $0x90] sm:$0xff] 0.0
          %280 = vst [vmem:[#allocation2 + $0x98] sm:$0xff] 0.0
          %281 = vst [vmem:[#allocation2 + $0xa0] sm:$0xff] 0.0
          %282 = vst [vmem:[#allocation2 + $0xa8] sm:$0xff] 0.0
          %283 = vst [vmem:[#allocation2 + $0xb0] sm:$0xff] 0.0
          %284 = vst [vmem:[#allocation2 + $0xb8] sm:$0xff] 0.0
          %285 = vst [vmem:[#allocation2 + $0xc0] sm:$0xff] 0.0
          %286 = vst [vmem:[#allocation2 + $0xc8] sm:$0xff] 0.0
          %287 = vst [vmem:[#allocation2 + $0xd0] sm:$0xff] 0.0
          %288 = vst [vmem:[#allocation2 + $0xd8] sm:$0xff] 0.0
          %289 = vst [vmem:[#allocation2 + $0xe0] sm:$0xff] 0.0
          %290 = vst [vmem:[#allocation2 + $0xe8] sm:$0xff] 0.0
          %291 = vst [vmem:[#allocation2 + $0xf0] sm:$0xff] 0.0
          %292 = vst [vmem:[#allocation2 + $0xf8] sm:$0xff] 0.0
          %293 = vst [vmem:[#allocation2 + $0x100] sm:$0xff] 0.0
          %294 = vst [vmem:[#allocation2 + $0x108] sm:$0xff] 0.0
          %295 = vst [vmem:[#allocation2 + $0x110] sm:$0xff] 0.0
          %296 = vst [vmem:[#allocation2 + $0x118] sm:$0xff] 0.0
          %297 = vst [vmem:[#allocation2 + $0x120] sm:$0xff] 0.0
          %298 = vst [vmem:[#allocation2 + $0x128] sm:$0xff] 0.0
          %299 = vst [vmem:[#allocation2 + $0x130] sm:$0xff] 0.0
          %300 = vst [vmem:[#allocation2 + $0x138] sm:$0xff] 0.0
          %301 = vst [vmem:[#allocation2 + $0x140] sm:$0xff] 0.0
          %302 = vst [vmem:[#allocation2 + $0x148] sm:$0xff] 0.0
          %303 = vst [vmem:[#allocation2 + $0x150] sm:$0xff] 0.0
          %304 = vst [vmem:[#allocation2 + $0x158] sm:$0xff] 0.0
          %305 = vst [vmem:[#allocation2 + $0x160] sm:$0xff] 0.0
          %306 = vst [vmem:[#allocation2 + $0x168] sm:$0xff] 0.0
          %307 = vst [vmem:[#allocation2 + $0x170] sm:$0xff] 0.0
          %308 = vst [vmem:[#allocation2 + $0x178] sm:$0xff] 0.0
          %309 = vst [vmem:[#allocation2 + $0x180] sm:$0xff] 0.0
          %310 = vst [vmem:[#allocation2 + $0x188] sm:$0xff] 0.0
          %311 = vst [vmem:[#allocation2 + $0x190] sm:$0xff] 0.0
          %312 = vst [vmem:[#allocation2 + $0x198] sm:$0xff] 0.0
          %313 = vst [vmem:[#allocation2 + $0x1a0] sm:$0xff] 0.0
          %314 = vst [vmem:[#allocation2 + $0x1a8] sm:$0xff] 0.0
          %315 = vst [vmem:[#allocation2 + $0x1b0] sm:$0xff] 0.0
          %316 = vst [vmem:[#allocation2 + $0x1b8] sm:$0xff] 0.0
          %317 = vst [vmem:[#allocation2 + $0x1c0] sm:$0xff] 0.0
          %318 = vst [vmem:[#allocation2 + $0x1c8] sm:$0xff] 0.0
          %319 = vst [vmem:[#allocation2 + $0x1d0] sm:$0xff] 0.0
          %320 = vst [vmem:[#allocation2 + $0x1d8] sm:$0xff] 0.0
          %321 = vst [vmem:[#allocation2 + $0x1e0] sm:$0xff] 0.0
          %322 = vst [vmem:[#allocation2 + $0x1e8] sm:$0xff] 0.0
          %323 = vst [vmem:[#allocation2 + $0x1f0] sm:$0xff] 0.0
          %324 = vst [vmem:[#allocation2 + $0x1f8] sm:$0xff] 0.0
          %325 = vst [vmem:[#allocation2 + $0x200] sm:$0xff] 0.0
          %326 = vst [vmem:[#allocation2 + $0x208] sm:$0xff] 0.0
          %327 = vst [vmem:[#allocation2 + $0x210] sm:$0xff] 0.0
          %328 = vst [vmem:[#allocation2 + $0x218] sm:$0xff] 0.0
          %329 = vst [vmem:[#allocation2 + $0x220] sm:$0xff] 0.0
          %330 = vst [vmem:[#allocation2 + $0x228] sm:$0xff] 0.0
          %331 = vst [vmem:[#allocation2 + $0x230] sm:$0xff] 0.0
          %332 = vst [vmem:[#allocation2 + $0x238] sm:$0xff] 0.0
          %333 = vst [vmem:[#allocation2 + $0x240] sm:$0xff] 0.0
          %334 = vst [vmem:[#allocation2 + $0x248] sm:$0xff] 0.0
          %335 = vst [vmem:[#allocation2 + $0x250] sm:$0xff] 0.0
          %336 = vst [vmem:[#allocation2 + $0x258] sm:$0xff] 0.0
          %337 = vst [vmem:[#allocation2 + $0x260] sm:$0xff] 0.0
          %338 = vst [vmem:[#allocation2 + $0x268] sm:$0xff] 0.0
          %339 = vst [vmem:[#allocation2 + $0x270] sm:$0xff] 0.0
          %340 = vst [vmem:[#allocation2 + $0x278] sm:$0xff] 0.0
          %341 = vst [vmem:[#allocation2 + $0x280] sm:$0xff] 0.0
          %342 = vst [vmem:[#allocation2 + $0x288] sm:$0xff] 0.0
          %343 = vst [vmem:[#allocation2 + $0x290] sm:$0xff] 0.0
          %344 = vst [vmem:[#allocation2 + $0x298] sm:$0xff] 0.0
          %345 = vst [vmem:[#allocation2 + $0x2a0] sm:$0xff] 0.0
          %346 = vst [vmem:[#allocation2 + $0x2a8] sm:$0xff] 0.0
          %347 = vst [vmem:[#allocation2 + $0x2b0] sm:$0xff] 0.0
          %348 = vst [vmem:[#allocation2 + $0x2b8] sm:$0xff] 0.0
          %349 = vst [vmem:[#allocation2 + $0x2c0] sm:$0xff] 0.0
          %350 = vst [vmem:[#allocation2 + $0x2c8] sm:$0xff] 0.0
          %351 = vst [vmem:[#allocation2 + $0x2d0] sm:$0xff] 0.0
          %352 = vst [vmem:[#allocation2 + $0x2d8] sm:$0xff] 0.0
          %353 = vst [vmem:[#allocation2 + $0x2e0] sm:$0xff] 0.0
          %354 = vst [vmem:[#allocation2 + $0x2e8] sm:$0xff] 0.0
          %355 = vst [vmem:[#allocation2 + $0x2f0] sm:$0xff] 0.0
          %356 = vst [vmem:[#allocation2 + $0x2f8] sm:$0xff] 0.0
          %357 = vst [vmem:[#allocation2 + $0x300] sm:$0xff] 0.0
          %358 = vst [vmem:[#allocation2 + $0x308] sm:$0xff] 0.0
          %359 = vst [vmem:[#allocation2 + $0x310] sm:$0xff] 0.0
          %360 = vst [vmem:[#allocation2 + $0x318] sm:$0xff] 0.0
          %361 = vst [vmem:[#allocation2 + $0x320] sm:$0xff] 0.0
          %362 = vst [vmem:[#allocation2 + $0x328] sm:$0xff] 0.0
          %363 = vst [vmem:[#allocation2 + $0x330] sm:$0xff] 0.0
          %364 = vst [vmem:[#allocation2 + $0x338] sm:$0xff] 0.0
          %365 = vst [vmem:[#allocation2 + $0x340] sm:$0xff] 0.0
          %366 = vst [vmem:[#allocation2 + $0x348] sm:$0xff] 0.0
          %367 = vst [vmem:[#allocation2 + $0x350] sm:$0xff] 0.0
          %368 = vst [vmem:[#allocation2 + $0x358] sm:$0xff] 0.0
          %v369 = vld [vmem:[%s251] sm:$0xff]
          %v370 = vld [vmem:[%s251 + $0x8] sm:$0xff]
          %v371 = vld [vmem:[%s251 + $0x10] sm:$0xff]
          %v372 = vld [vmem:[%s251 + $0x18] sm:$0xff]
          %v373 = vld [vmem:[%s251 + $0x20] sm:$0xff]
          %v374 = vld [vmem:[%s251 + $0x28] sm:$0xff]
          %v375 = vld [vmem:[%s251 + $0x30] sm:$0xff]
          %v376 = vld [vmem:[%s251 + $0x38] sm:$0xff]
          %v377 = vld [vmem:[%s251 + $0x40] sm:$0xff]
          %v378 = vld [vmem:[%s251 + $0x48] sm:$0xff]
          %v379 = vld [vmem:[%s251 + $0x50] sm:$0xff]
          %v380 = vld [vmem:[%s251 + $0x58] sm:$0xff]
          %v381 = vld [vmem:[%s251 + $0x60] sm:$0xff]
          %v382 = vld [vmem:[%s251 + $0x68] sm:$0xff]
          %v383 = vld [vmem:[%s251 + $0x70] sm:$0xff]
          %v384 = vld [vmem:[%s251 + $0x78] sm:$0xff]
          %v385 = vld [vmem:[%s251 + $0x80] sm:$0xff]
          %v386 = vld [vmem:[%s251 + $0x88] sm:$0xff]
          %v387 = vld [vmem:[%s251 + $0x90] sm:$0xff]
          %v388 = vld [vmem:[%s251 + $0x98] sm:$0xff]
          %v389 = vld [vmem:[%s251 + $0xa0] sm:$0xff]
          %v390 = vld [vmem:[%s251 + $0xa8] sm:$0xff]
          %v391 = vld [vmem:[%s251 + $0xb0] sm:$0xff]
          %v392 = vld [vmem:[%s251 + $0xb8] sm:$0xff]
          %v393 = vld [vmem:[%s251 + $0xc0] sm:$0xff]
          %v394 = vld [vmem:[%s251 + $0xc8] sm:$0xff]
          %v395 = vld [vmem:[%s251 + $0xd0] sm:$0xff]
          %v396 = vld [vmem:[%s251 + $0xd8] sm:$0xff]
          %v397 = vld [vmem:[%s251 + $0xe0] sm:$0xff]
          %v398 = vld [vmem:[%s251 + $0xe8] sm:$0xff]
          %v399 = vld [vmem:[%s251 + $0xf0] sm:$0xff]
          %v400 = vld [vmem:[%s251 + $0xf8] sm:$0xff]
          %s401 = scalar_lea.vmem [#allocation2], 48
          %402 = vst [vmem:[%s401 + $0x10] sm:$0xff] %v369
          %403 = vst [vmem:[%s401 + $0x18] sm:$0xff] %v370
          %404 = vst [vmem:[%s401 + $0x40] sm:$0xff] %v371
          %405 = vst [vmem:[%s401 + $0x48] sm:$0xff] %v372
          %406 = vst [vmem:[%s401 + $0x70] sm:$0xff] %v373
          %407 = vst [vmem:[%s401 + $0x78] sm:$0xff] %v374
          %408 = vst [vmem:[%s401 + $0xa0] sm:$0xff] %v375
          %409 = vst [vmem:[%s401 + $0xa8] sm:$0xff] %v376
          %410 = vst [vmem:[%s401 + $0xd0] sm:$0xff] %v377
          %411 = vst [vmem:[%s401 + $0xd8] sm:$0xff] %v378
          %412 = vst [vmem:[%s401 + $0x100] sm:$0xff] %v379
          %413 = vst [vmem:[%s401 + $0x108] sm:$0xff] %v380
          %414 = vst [vmem:[%s401 + $0x130] sm:$0xff] %v381
          %415 = vst [vmem:[%s401 + $0x138] sm:$0xff] %v382
          %416 = vst [vmem:[%s401 + $0x160] sm:$0xff] %v383
          %417 = vst [vmem:[%s401 + $0x168] sm:$0xff] %v384
          %418 = vst [vmem:[%s401 + $0x190] sm:$0xff] %v385
          %419 = vst [vmem:[%s401 + $0x198] sm:$0xff] %v386
          %420 = vst [vmem:[%s401 + $0x1c0] sm:$0xff] %v387
          %421 = vst [vmem:[%s401 + $0x1c8] sm:$0xff] %v388
          %422 = vst [vmem:[%s401 + $0x1f0] sm:$0xff] %v389
          %423 = vst [vmem:[%s401 + $0x1f8] sm:$0xff] %v390
          %424 = vst [vmem:[%s401 + $0x220] sm:$0xff] %v391
          %425 = vst [vmem:[%s401 + $0x228] sm:$0xff] %v392
          %426 = vst [vmem:[%s401 + $0x250] sm:$0xff] %v393
          %427 = vst [vmem:[%s401 + $0x258] sm:$0xff] %v394
          %428 = vst [vmem:[%s401 + $0x280] sm:$0xff] %v395
          %429 = vst [vmem:[%s401 + $0x288] sm:$0xff] %v396
          %430 = vst [vmem:[%s401 + $0x2b0] sm:$0xff] %v397
          %431 = vst [vmem:[%s401 + $0x2b8] sm:$0xff] %v398
          %432 = vst [vmem:[%s401 + $0x2e0] sm:$0xff] %v399
          %433 = vst [vmem:[%s401 + $0x2e8] sm:$0xff] %v400
        $region44: #{_decoder_pallas_impl.1} parent=31 // pred_fallthru
          _
        %v434 = vld [vmem:[#allocation2 + $0xf] sm:$0xff]
        %v435 = vld [vmem:[#allocation2 + $0x17] sm:$0xff]
        %v436 = vld [vmem:[#allocation2 + $0x3f] sm:$0xff]
        %v437 = vld [vmem:[#allocation2 + $0x47] sm:$0xff]
        %v438 = vld [vmem:[#allocation2 + $0x6f] sm:$0xff]
        %v439 = vld [vmem:[#allocation2 + $0x77] sm:$0xff]
        %v440 = vld [vmem:[#allocation2 + $0x9f] sm:$0xff]
        %v441 = vld [vmem:[#allocation2 + $0xa7] sm:$0xff]
        %v442 = vld [vmem:[#allocation2 + $0xcf] sm:$0xff]
        %v443 = vld [vmem:[#allocation2 + $0xd7] sm:$0xff]
        %v444 = vld [vmem:[#allocation2 + $0xff] sm:$0xff]
        %v445 = vld [vmem:[#allocation2 + $0x107] sm:$0xff]
        %v446 = vld [vmem:[#allocation2 + $0x12f] sm:$0xff]
        %v447 = vld [vmem:[#allocation2 + $0x137] sm:$0xff]
        %v448 = vld [vmem:[#allocation2 + $0x15f] sm:$0xff]
        %v449 = vld [vmem:[#allocation2 + $0x167] sm:$0xff]
        %v450 = vld [vmem:[#allocation2 + $0x18f] sm:$0xff]
        %v451 = vld [vmem:[#allocation2 + $0x197] sm:$0xff]
        %v452 = vld [vmem:[#allocation2 + $0x1bf] sm:$0xff]
        %v453 = vld [vmem:[#allocation2 + $0x1c7] sm:$0xff]
        %v454 = vld [vmem:[#allocation2 + $0x1ef] sm:$0xff]
        %v455 = vld [vmem:[#allocation2 + $0x1f7] sm:$0xff]
        %v456 = vld [vmem:[#allocation2 + $0x21f] sm:$0xff]
        %v457 = vld [vmem:[#allocation2 + $0x227] sm:$0xff]
        %v458 = vld [vmem:[#allocation2 + $0x24f] sm:$0xff]
        %v459 = vld [vmem:[#allocation2 + $0x257] sm:$0xff]
        %v460 = vld [vmem:[#allocation2 + $0x27f] sm:$0xff]
        %v461 = vld [vmem:[#allocation2 + $0x287] sm:$0xff]
        %v462 = vld [vmem:[#allocation2 + $0x2af] sm:$0xff]
        %v463 = vld [vmem:[#allocation2 + $0x2b7] sm:$0xff]
        %v464 = vld [vmem:[#allocation2 + $0x2df] sm:$0xff]
        %v465 = vld [vmem:[#allocation2 + $0x2e7] sm:$0xff]
        %v466 = vld [vmem:[%s207] sm:$0xff]
        %v467 = vld [vmem:[%s207 + $0x8] sm:$0xff]
        %v468 = vld [vmem:[%s207 + $0x10] sm:$0xff]
        %v469 = vld [vmem:[%s207 + $0x18] sm:$0xff]
        %v470 = vld [vmem:[%s207 + $0x20] sm:$0xff]
        %v471 = vld [vmem:[%s207 + $0x28] sm:$0xff]
        %v472 = vld [vmem:[%s207 + $0x30] sm:$0xff]
        %v473 = vld [vmem:[%s207 + $0x38] sm:$0xff]
        %v474 = vld [vmem:[%s207 + $0x40] sm:$0xff]
        %v475 = vld [vmem:[%s207 + $0x48] sm:$0xff]
        %v476 = vld [vmem:[%s207 + $0x50] sm:$0xff]
        %v477 = vld [vmem:[%s207 + $0x58] sm:$0xff]
        %v478 = vld [vmem:[%s207 + $0x60] sm:$0xff]
        %v479 = vld [vmem:[%s207 + $0x68] sm:$0xff]
        %v480 = vld [vmem:[%s207 + $0x70] sm:$0xff]
        %v481 = vld [vmem:[%s207 + $0x78] sm:$0xff]
        %v482 = vld [vmem:[#allocation2 + $0x10] sm:$0xff]
        %v483 = vld [vmem:[#allocation2 + $0x18] sm:$0xff]
        %v484 = vld [vmem:[#allocation2 + $0x40] sm:$0xff]
        %v485 = vld [vmem:[#allocation2 + $0x48] sm:$0xff]
        %v486 = vld [vmem:[#allocation2 + $0x70] sm:$0xff]
        %v487 = vld [vmem:[#allocation2 + $0x78] sm:$0xff]
        %v488 = vld [vmem:[#allocation2 + $0xa0] sm:$0xff]
        %v489 = vld [vmem:[#allocation2 + $0xa8] sm:$0xff]
        %v490 = vld [vmem:[#allocation2 + $0xd0] sm:$0xff]
        %v491 = vld [vmem:[#allocation2 + $0xd8] sm:$0xff]
        %v492 = vld [vmem:[#allocation2 + $0x100] sm:$0xff]
        %v493 = vld [vmem:[#allocation2 + $0x108] sm:$0xff]
        %v494 = vld [vmem:[#allocation2 + $0x130] sm:$0xff]
        %v495 = vld [vmem:[#allocation2 + $0x138] sm:$0xff]
        %v496 = vld [vmem:[#allocation2 + $0x160] sm:$0xff]
        %v497 = vld [vmem:[#allocation2 + $0x168] sm:$0xff]
        %v498 = vld [vmem:[#allocation2 + $0x190] sm:$0xff]
        %v499 = vld [vmem:[#allocation2 + $0x198] sm:$0xff]
        %v500 = vld [vmem:[#allocation2 + $0x1c0] sm:$0xff]
        %v501 = vld [vmem:[#allocation2 + $0x1c8] sm:$0xff]
        %v502 = vld [vmem:[#allocation2 + $0x1f0] sm:$0xff]
        %v503 = vld [vmem:[#allocation2 + $0x1f8] sm:$0xff]
        %v504 = vld [vmem:[#allocation2 + $0x220] sm:$0xff]
        %v505 = vld [vmem:[#allocation2 + $0x228] sm:$0xff]
        %v506 = vld [vmem:[#allocation2 + $0x250] sm:$0xff]
        %v507 = vld [vmem:[#allocation2 + $0x258] sm:$0xff]
        %v508 = vld [vmem:[#allocation2 + $0x280] sm:$0xff]
        %v509 = vld [vmem:[#allocation2 + $0x288] sm:$0xff]
        %v510 = vld [vmem:[#allocation2 + $0x2b0] sm:$0xff]
        %v511 = vld [vmem:[#allocation2 + $0x2b8] sm:$0xff]
        %v512 = vld [vmem:[#allocation2 + $0x2e0] sm:$0xff]
        %v513 = vld [vmem:[#allocation2 + $0x2e8] sm:$0xff]
        %v514 = vld [vmem:[%s207 + $0x80] sm:$0xff]
        %v515 = vld [vmem:[%s207 + $0x88] sm:$0xff]
        %v516 = vld [vmem:[%s207 + $0x90] sm:$0xff]
        %v517 = vld [vmem:[%s207 + $0x98] sm:$0xff]
        %v518 = vld [vmem:[%s207 + $0xa0] sm:$0xff]
        %v519 = vld [vmem:[%s207 + $0xa8] sm:$0xff]
        %v520 = vld [vmem:[%s207 + $0xb0] sm:$0xff]
        %v521 = vld [vmem:[%s207 + $0xb8] sm:$0xff]
        %v522 = vld [vmem:[%s207 + $0xc0] sm:$0xff]
        %v523 = vld [vmem:[%s207 + $0xc8] sm:$0xff]
        %v524 = vld [vmem:[%s207 + $0xd0] sm:$0xff]
        %v525 = vld [vmem:[%s207 + $0xd8] sm:$0xff]
        %v526 = vld [vmem:[%s207 + $0xe0] sm:$0xff]
        %v527 = vld [vmem:[%s207 + $0xe8] sm:$0xff]
        %v528 = vld [vmem:[%s207 + $0xf0] sm:$0xff]
        %v529 = vld [vmem:[%s207 + $0xf8] sm:$0xff]
        %530 = vmatprep.subr.mxu0 0.0
        %531 = vmatpush1.msra.mxu0 %v514
        %532 = vmatprep.subr.mxu0 0.0
        %533 = vmatpush1.msra.mxu0 %v515
        %534 = vmatprep.subr.mxu0 0.0
        %535 = vmatpush1.msra.mxu0 %v516
        %536 = vmatprep.subr.mxu0 0.0
        %537 = vmatpush1.msra.mxu0 %v517
        %538 = vmatprep.subr.mxu0 0.0
        %539 = vmatpush1.msra.mxu0 %v518
        %540 = vmatprep.subr.mxu0 0.0
        %541 = vmatpush1.msra.mxu0 %v519
        %542 = vmatprep.subr.mxu0 0.0
        %543 = vmatpush1.msra.mxu0 %v520
        %544 = vmatprep.subr.mxu0 0.0
        %545 = vmatpush1.msra.mxu0 %v521
        %546 = vmatprep.subr.mxu0 0.0
        %547 = vmatpush1.msra.mxu0 %v522
        %548 = vmatprep.subr.mxu0 0.0
        %549 = vmatpush1.msra.mxu0 %v523
        %550 = vmatprep.subr.mxu0 0.0
        %551 = vmatpush1.msra.mxu0 %v524
        %552 = vmatprep.subr.mxu0 0.0
        %553 = vmatpush1.msra.mxu0 %v525
        %554 = vmatprep.subr.mxu0 0.0
        %555 = vmatpush1.msra.mxu0 %v526
        %556 = vmatprep.subr.mxu0 0.0
        %557 = vmatpush1.msra.mxu0 %v527
        %558 = vmatprep.subr.mxu0 0.0
        %559 = vmatpush1.msra.mxu0 %v528
        %560 = vmatprep.subr.mxu0 0.0
        %561 = vmatpush1.msra.mxu0 %v529
        %562 = vmatprep.subr.mxu0 0.0
        %563 = vmatpush1.msra.mxu0 0.0
        %564 = vmatprep.subr.mxu0 0.0
        %565 = vmatpush1.msra.mxu0 0.0
        %566 = vmatprep.subr.mxu0 0.0
        %567 = vmatpush1.msra.mxu0 0.0
        %568 = vmatprep.subr.mxu0 0.0
        %569 = vmatpush1.msra.mxu0 0.0
        %570 = vmatprep.subr.mxu0 0.0
        %571 = vmatpush1.msra.mxu0 0.0
        %572 = vmatprep.subr.mxu0 0.0
        %573 = vmatpush1.msra.mxu0 0.0
        %574 = vmatprep.subr.mxu0 0.0
        %575 = vmatpush1.msra.mxu0 0.0
        %576 = vmatprep.subr.mxu0 0.0
        %577 = vmatpush1.msra.mxu0 0.0
        %578 = vmatprep.subr.mxu0 0.0
        %579 = vmatpush1.msra.mxu0 0.0
        %580 = vmatprep.subr.mxu0 0.0
        %581 = vmatpush1.msra.mxu0 0.0
        %582 = vmatprep.subr.mxu0 0.0
        %583 = vmatpush1.msra.mxu0 0.0
        %584 = vmatprep.subr.mxu0 0.0
        %585 = vmatpush1.msra.mxu0 0.0
        %586 = vmatprep.subr.mxu0 0.0
        %587 = vmatpush1.msra.mxu0 0.0
        %588 = vmatprep.subr.mxu0 0.0
        %589 = vmatpush1.msra.mxu0 0.0
        %590 = vmatprep.subr.mxu0 0.0
        %591 = vmatpush1.msra.mxu0 0.0
        %592 = vmatprep.subr.mxu0 0.0
        %593 = vmatpush1.msra.mxu0 0.0
        %594 = vmatprep.mubr.f32.mxu0 0.0
        %595 = vmatmul.mubr.f32.gmra.mrb[0].mxu0 %v482
        %v596 = vpop.f32.mrb[0].mxu0
        %v597 = vadd.f32 0.0, %v596
        %v598 = vpop.f32.mrb[0].mxu0
        %599 = vmatprep.mubr.f32.mxu0 0.0
        %600 = vmatmul.mubr.f32.gmra.mrb[0].mxu0 %v483
        %v601 = vpop.f32.mrb[0].mxu0
        %v602 = vadd.f32 0.0, %v601
        %v603 = vpop.f32.mrb[0].mxu0
        %604 = vmatprep.mubr.f32.mxu0 0.0
        %605 = vmatmul.mubr.f32.gmra.mrb[0].mxu0 %v484
        %v606 = vpop.f32.mrb[0].mxu0
        %v607 = vadd.f32 0.0, %v606
        %v608 = vpop.f32.mrb[0].mxu0
        %609 = vmatprep.mubr.f32.mxu0 0.0
        %610 = vmatmul.mubr.f32.gmra.mrb[0].mxu0 %v485
        %v611 = vpop.f32.mrb[0].mxu0
        %v612 = vadd.f32 0.0, %v611
        %v613 = vpop.f32.mrb[0].mxu0
        %614 = vmatprep.mubr.f32.mxu0 0.0
        %615 = vmatmul.mubr.f32.gmra.mrb[0].mxu0 %v486
        %v616 = vpop.f32.mrb[0].mxu0
        %v617 = vadd.f32 0.0, %v616
        %v618 = vpop.f32.mrb[0].mxu0
        %619 = vmatprep.mubr.f32.mxu0 0.0
        %620 = vmatmul.mubr.f32.gmra.mrb[0].mxu0 %v487
        %v621 = vpop.f32.mrb[0].mxu0
        %v622 = vadd.f32 0.0, %v621
        %v623 = vpop.f32.mrb[0].mxu0
        %624 = vmatprep.mubr.f32.mxu0 0.0
        %625 = vmatmul.mubr.f32.gmra.mrb[0].mxu0 %v488
        %v626 = vpop.f32.mrb[0].mxu0
        %v627 = vadd.f32 0.0, %v626
        %v628 = vpop.f32.mrb[0].mxu0
        %629 = vmatprep.mubr.f32.mxu0 0.0
        %630 = vmatmul.mubr.f32.gmra.mrb[0].mxu0 %v489
        %v631 = vpop.f32.mrb[0].mxu0
        %v632 = vadd.f32 0.0, %v631
        %v633 = vpop.f32.mrb[0].mxu0
        %634 = vmatprep.mubr.f32.mxu0 0.0
        %635 = vmatmul.mubr.f32.gmra.mrb[0].mxu0 %v490
        %v636 = vpop.f32.mrb[0].mxu0
        %v637 = vadd.f32 0.0, %v636
        %v638 = vpop.f32.mrb[0].mxu0
        %639 = vmatprep.mubr.f32.mxu0 0.0
        %640 = vmatmul.mubr.f32.gmra.mrb[0].mxu0 %v491
        %v641 = vpop.f32.mrb[0].mxu0
        %v642 = vadd.f32 0.0, %v641
        %v643 = vpop.f32.mrb[0].mxu0
        %644 = vmatprep.mubr.f32.mxu0 0.0
        %645 = vmatmul.mubr.f32.gmra.mrb[0].mxu0 %v492
        %v646 = vpop.f32.mrb[0].mxu0
        %v647 = vadd.f32 0.0, %v646
        %v648 = vpop.f32.mrb[0].mxu0
        %649 = vmatprep.mubr.f32.mxu0 0.0
        %650 = vmatmul.mubr.f32.gmra.mrb[0].mxu0 %v493
        %v651 = vpop.f32.mrb[0].mxu0
        %v652 = vadd.f32 0.0, %v651
        %v653 = vpop.f32.mrb[0].mxu0
        %654 = vmatprep.mubr.f32.mxu0 0.0
        %655 = vmatmul.mubr.f32.gmra.mrb[0].mxu0 %v494
        %v656 = vpop.f32.mrb[0].mxu0
        %v657 = vadd.f32 0.0, %v656
        %v658 = vpop.f32.mrb[0].mxu0
        %659 = vmatprep.mubr.f32.mxu0 0.0
        %660 = vmatmul.mubr.f32.gmra.mrb[0].mxu0 %v495
        %v661 = vpop.f32.mrb[0].mxu0
        %v662 = vadd.f32 0.0, %v661
        %v663 = vpop.f32.mrb[0].mxu0
        %664 = vmatprep.mubr.f32.mxu0 0.0
        %665 = vmatmul.mubr.f32.gmra.mrb[0].mxu0 %v496
        %v666 = vpop.f32.mrb[0].mxu0
        %v667 = vadd.f32 0.0, %v666
        %v668 = vpop.f32.mrb[0].mxu0
        %669 = vmatprep.mubr.f32.mxu0 0.0
        %670 = vmatmul.mubr.f32.gmra.mrb[0].mxu0 %v497
        %v671 = vpop.f32.mrb[0].mxu0
        %v672 = vadd.f32 0.0, %v671
        %v673 = vpop.f32.mrb[0].mxu0
        %674 = vmatprep.mubr.f32.mxu0 0.0
        %675 = vmatmul.mubr.f32.gmra.mrb[0].mxu0 %v498
        %v676 = vpop.f32.mrb[0].mxu0
        %v677 = vadd.f32 0.0, %v676
        %v678 = vpop.f32.mrb[0].mxu0
        %679 = vmatprep.mubr.f32.mxu0 0.0
        %680 = vmatmul.mubr.f32.gmra.mrb[0].mxu0 %v499
        %v681 = vpop.f32.mrb[0].mxu0
        %v682 = vadd.f32 0.0, %v681
        %v683 = vpop.f32.mrb[0].mxu0
        %684 = vmatprep.mubr.f32.mxu0 0.0
        %685 = vmatmul.mubr.f32.gmra.mrb[0].mxu0 %v500
        %v686 = vpop.f32.mrb[0].mxu0
        %v687 = vadd.f32 0.0, %v686
        %v688 = vpop.f32.mrb[0].mxu0
        %689 = vmatprep.mubr.f32.mxu0 0.0
        %690 = vmatmul.mubr.f32.gmra.mrb[0].mxu0 %v501
        %v691 = vpop.f32.mrb[0].mxu0
        %v692 = vadd.f32 0.0, %v691
        %v693 = vpop.f32.mrb[0].mxu0
        %694 = vmatprep.mubr.f32.mxu0 0.0
        %695 = vmatmul.mubr.f32.gmra.mrb[0].mxu0 %v502
        %v696 = vpop.f32.mrb[0].mxu0
        %v697 = vadd.f32 0.0, %v696
        %v698 = vpop.f32.mrb[0].mxu0
        %699 = vmatprep.mubr.f32.mxu0 0.0
        %700 = vmatmul.mubr.f32.gmra.mrb[0].mxu0 %v503
        %v701 = vpop.f32.mrb[0].mxu0
        %v702 = vadd.f32 0.0, %v701
        %v703 = vpop.f32.mrb[0].mxu0
        %704 = vmatprep.mubr.f32.mxu0 0.0
        %705 = vmatmul.mubr.f32.gmra.mrb[0].mxu0 %v504
        %v706 = vpop.f32.mrb[0].mxu0
        %v707 = vadd.f32 0.0, %v706
        %v708 = vpop.f32.mrb[0].mxu0
        %709 = vmatprep.mubr.f32.mxu0 0.0
        %710 = vmatmul.mubr.f32.gmra.mrb[0].mxu0 %v505
        %v711 = vpop.f32.mrb[0].mxu0
        %v712 = vadd.f32 0.0, %v711
        %v713 = vpop.f32.mrb[0].mxu0
        %714 = vmatprep.mubr.f32.mxu0 0.0
        %715 = vmatmul.mubr.f32.gmra.mrb[0].mxu0 %v506
        %v716 = vpop.f32.mrb[0].mxu0
        %v717 = vadd.f32 0.0, %v716
        %v718 = vpop.f32.mrb[0].mxu0
        %719 = vmatprep.mubr.f32.mxu0 0.0
        %720 = vmatmul.mubr.f32.gmra.mrb[0].mxu0 %v507
        %v721 = vpop.f32.mrb[0].mxu0
        %v722 = vadd.f32 0.0, %v721
        %v723 = vpop.f32.mrb[0].mxu0
        %724 = vmatprep.mubr.f32.mxu0 0.0
        %725 = vmatmul.mubr.f32.gmra.mrb[0].mxu0 %v508
        %v726 = vpop.f32.mrb[0].mxu0
        %v727 = vadd.f32 0.0, %v726
        %v728 = vpop.f32.mrb[0].mxu0
        %729 = vmatprep.mubr.f32.mxu0 0.0
        %730 = vmatmul.mubr.f32.gmra.mrb[0].mxu0 %v509
        %v731 = vpop.f32.mrb[0].mxu0
        %v732 = vadd.f32 0.0, %v731
        %v733 = vpop.f32.mrb[0].mxu0
        %734 = vmatprep.mubr.f32.mxu0 0.0
        %735 = vmatmul.mubr.f32.gmra.mrb[0].mxu0 %v510
        %v736 = vpop.f32.mrb[0].mxu0
        %v737 = vadd.f32 0.0, %v736
        %v738 = vpop.f32.mrb[0].mxu0
        %739 = vmatprep.mubr.f32.mxu0 0.0
        %740 = vmatmul.mubr.f32.gmra.mrb[0].mxu0 %v511
        %v741 = vpop.f32.mrb[0].mxu0
        %v742 = vadd.f32 0.0, %v741
        %v743 = vpop.f32.mrb[0].mxu0
        %744 = vmatprep.mubr.f32.mxu0 0.0
        %745 = vmatmul.mubr.f32.gmra.mrb[0].mxu0 %v512
        %v746 = vpop.f32.mrb[0].mxu0
        %v747 = vadd.f32 0.0, %v746
        %v748 = vpop.f32.mrb[0].mxu0
        %749 = vmatprep.mubr.f32.mxu0 0.0
        %750 = vmatmul.mubr.f32.gmra.mrb[0].mxu0 %v513
        %v751 = vpop.f32.mrb[0].mxu0
        %v752 = vadd.f32 0.0, %v751
        %v753 = vpop.f32.mrb[0].mxu0
        %754 = vdwg.mxu0
        %755 = vmatprep.subr.mxu0 0.0
        %756 = vmatpush1.msra.mxu0 %v466
        %757 = vmatprep.subr.mxu0 0.0
        %758 = vmatpush1.msra.mxu0 %v467
        %759 = vmatprep.subr.mxu0 0.0
        %760 = vmatpush1.msra.mxu0 %v468
        %761 = vmatprep.subr.mxu0 0.0
        %762 = vmatpush1.msra.mxu0 %v469
        %763 = vmatprep.subr.mxu0 0.0
        %764 = vmatpush1.msra.mxu0 %v470
        %765 = vmatprep.subr.mxu0 0.0
        %766 = vmatpush1.msra.mxu0 %v471
        %767 = vmatprep.subr.mxu0 0.0
        %768 = vmatpush1.msra.mxu0 %v472
        %769 = vmatprep.subr.mxu0 0.0
        %770 = vmatpush1.msra.mxu0 %v473
        %771 = vmatprep.subr.mxu0 0.0
        %772 = vmatpush1.msra.mxu0 %v474
        %773 = vmatprep.subr.mxu0 0.0
        %774 = vmatpush1.msra.mxu0 %v475
        %775 = vmatprep.subr.mxu0 0.0
        %776 = vmatpush1.msra.mxu0 %v476
        %777 = vmatprep.subr.mxu0 0.0
        %778 = vmatpush1.msra.mxu0 %v477
        %779 = vmatprep.subr.mxu0 0.0
        %780 = vmatpush1.msra.mxu0 %v478
        %781 = vmatprep.subr.mxu0 0.0
        %782 = vmatpush1.msra.mxu0 %v479
        %783 = vmatprep.subr.mxu0 0.0
        %784 = vmatpush1.msra.mxu0 %v480
        %785 = vmatprep.subr.mxu0 0.0
        %786 = vmatpush1.msra.mxu0 %v481
        %787 = vmatprep.subr.mxu0 0.0
        %788 = vmatpush1.msra.mxu0 0.0
        %789 = vmatprep.subr.mxu0 0.0
        %790 = vmatpush1.msra.mxu0 0.0
        %791 = vmatprep.subr.mxu0 0.0
        %792 = vmatpush1.msra.mxu0 0.0
        %793 = vmatprep.subr.mxu0 0.0
        %794 = vmatpush1.msra.mxu0 0.0
        %795 = vmatprep.subr.mxu0 0.0
        %796 = vmatpush1.msra.mxu0 0.0
        %797 = vmatprep.subr.mxu0 0.0
        %798 = vmatpush1.msra.mxu0 0.0
        %799 = vmatprep.subr.mxu0 0.0
        %800 = vmatpush1.msra.mxu0 0.0
        %801 = vmatprep.subr.mxu0 0.0
        %802 = vmatpush1.msra.mxu0 0.0
        %803 = vmatprep.subr.mxu0 0.0
        %804 = vmatpush1.msra.mxu0 0.0
        %805 = vmatprep.subr.mxu0 0.0
        %806 = vmatpush1.msra.mxu0 0.0
        %807 = vmatprep.subr.mxu0 0.0
        %808 = vmatpush1.msra.mxu0 0.0
        %809 = vmatprep.subr.mxu0 0.0
        %810 = vmatpush1.msra.mxu0 0.0
        %811 = vmatprep.subr.mxu0 0.0
        %812 = vmatpush1.msra.mxu0 0.0
        %813 = vmatprep.subr.mxu0 0.0
        %814 = vmatpush1.msra.mxu0 0.0
        %815 = vmatprep.subr.mxu0 0.0
        %816 = vmatpush1.msra.mxu0 0.0
        %817 = vmatprep.subr.mxu0 0.0
        %818 = vmatpush1.msra.mxu0 0.0
        %819 = vmatprep.mubr.f32.mxu0 0.0
        %820 = vmatmul.mubr.f32.gmra.mrb[0].mxu0 %v434
        %v821 = vpop.f32.mrb[0].mxu0
        %v822 = vadd.f32 %v597, %v821
        %v823 = vpop.f32.mrb[0].mxu0
        %824 = vmatprep.mubr.f32.mxu0 0.0
        %825 = vmatmul.mubr.f32.gmra.mrb[0].mxu0 %v435
        %v826 = vpop.f32.mrb[0].mxu0
        %v827 = vadd.f32 %v602, %v826
        %v828 = vpop.f32.mrb[0].mxu0
        %829 = vmatprep.mubr.f32.mxu0 0.0
        %830 = vmatmul.mubr.f32.gmra.mrb[0].mxu0 %v436
        %v831 = vpop.f32.mrb[0].mxu0
        %v832 = vadd.f32 %v607, %v831
        %v833 = vpop.f32.mrb[0].mxu0
        %834 = vmatprep.mubr.f32.mxu0 0.0
        %835 = vmatmul.mubr.f32.gmra.mrb[0].mxu0 %v437
        %v836 = vpop.f32.mrb[0].mxu0
        %v837 = vadd.f32 %v612, %v836
        %v838 = vpop.f32.mrb[0].mxu0
        %839 = vmatprep.mubr.f32.mxu0 0.0
        %840 = vmatmul.mubr.f32.gmra.mrb[0].mxu0 %v438
        %v841 = vpop.f32.mrb[0].mxu0
        %v842 = vadd.f32 %v617, %v841
        %v843 = vpop.f32.mrb[0].mxu0
        %844 = vmatprep.mubr.f32.mxu0 0.0
        %845 = vmatmul.mubr.f32.gmra.mrb[0].mxu0 %v439
        %v846 = vpop.f32.mrb[0].mxu0
        %v847 = vadd.f32 %v622, %v846
        %v848 = vpop.f32.mrb[0].mxu0
        %849 = vmatprep.mubr.f32.mxu0 0.0
        %850 = vmatmul.mubr.f32.gmra.mrb[0].mxu0 %v440
        %v851 = vpop.f32.mrb[0].mxu0
        %v852 = vadd.f32 %v627, %v851
        %v853 = vpop.f32.mrb[0].mxu0
        %854 = vmatprep.mubr.f32.mxu0 0.0
        %855 = vmatmul.mubr.f32.gmra.mrb[0].mxu0 %v441
        %v856 = vpop.f32.mrb[0].mxu0
        %v857 = vadd.f32 %v632, %v856
        %v858 = vpop.f32.mrb[0].mxu0
        %859 = vmatprep.mubr.f32.mxu0 0.0
        %860 = vmatmul.mubr.f32.gmra.mrb[0].mxu0 %v442
        %v861 = vpop.f32.mrb[0].mxu0
        %v862 = vadd.f32 %v637, %v861
        %v863 = vpop.f32.mrb[0].mxu0
        %864 = vmatprep.mubr.f32.mxu0 0.0
        %865 = vmatmul.mubr.f32.gmra.mrb[0].mxu0 %v443
        %v866 = vpop.f32.mrb[0].mxu0
        %v867 = vadd.f32 %v642, %v866
        %v868 = vpop.f32.mrb[0].mxu0
        %869 = vmatprep.mubr.f32.mxu0 0.0
        %870 = vmatmul.mubr.f32.gmra.mrb[0].mxu0 %v444
        %v871 = vpop.f32.mrb[0].mxu0
        %v872 = vadd.f32 %v647, %v871
        %v873 = vpop.f32.mrb[0].mxu0
        %874 = vmatprep.mubr.f32.mxu0 0.0
        %875 = vmatmul.mubr.f32.gmra.mrb[0].mxu0 %v445
        %v876 = vpop.f32.mrb[0].mxu0
        %v877 = vadd.f32 %v652, %v876
        %v878 = vpop.f32.mrb[0].mxu0
        %879 = vmatprep.mubr.f32.mxu0 0.0
        %880 = vmatmul.mubr.f32.gmra.mrb[0].mxu0 %v446
        %v881 = vpop.f32.mrb[0].mxu0
        %v882 = vadd.f32 %v657, %v881
        %v883 = vpop.f32.mrb[0].mxu0
        %884 = vmatprep.mubr.f32.mxu0 0.0
        %885 = vmatmul.mubr.f32.gmra.mrb[0].mxu0 %v447
        %v886 = vpop.f32.mrb[0].mxu0
        %v887 = vadd.f32 %v662, %v886
        %v888 = vpop.f32.mrb[0].mxu0
        %889 = vmatprep.mubr.f32.mxu0 0.0
        %890 = vmatmul.mubr.f32.gmra.mrb[0].mxu0 %v448
        %v891 = vpop.f32.mrb[0].mxu0
        %v892 = vadd.f32 %v667, %v891
        %v893 = vpop.f32.mrb[0].mxu0
        %894 = vmatprep.mubr.f32.mxu0 0.0
        %895 = vmatmul.mubr.f32.gmra.mrb[0].mxu0 %v449
        %v896 = vpop.f32.mrb[0].mxu0
        %v897 = vadd.f32 %v672, %v896
        %v898 = vpop.f32.mrb[0].mxu0
        %899 = vmatprep.mubr.f32.mxu0 0.0
        %900 = vmatmul.mubr.f32.gmra.mrb[0].mxu0 %v450
        %v901 = vpop.f32.mrb[0].mxu0
        %v902 = vadd.f32 %v677, %v901
        %v903 = vpop.f32.mrb[0].mxu0
        %904 = vmatprep.mubr.f32.mxu0 0.0
        %905 = vmatmul.mubr.f32.gmra.mrb[0].mxu0 %v451
        %v906 = vpop.f32.mrb[0].mxu0
        %v907 = vadd.f32 %v682, %v906
        %v908 = vpop.f32.mrb[0].mxu0
        %909 = vmatprep.mubr.f32.mxu0 0.0
        %910 = vmatmul.mubr.f32.gmra.mrb[0].mxu0 %v452
        %v911 = vpop.f32.mrb[0].mxu0
        %v912 = vadd.f32 %v687, %v911
        %v913 = vpop.f32.mrb[0].mxu0
        %914 = vmatprep.mubr.f32.mxu0 0.0
        %915 = vmatmul.mubr.f32.gmra.mrb[0].mxu0 %v453
        %v916 = vpop.f32.mrb[0].mxu0
        %v917 = vadd.f32 %v692, %v916
        %v918 = vpop.f32.mrb[0].mxu0
        %919 = vmatprep.mubr.f32.mxu0 0.0
        %920 = vmatmul.mubr.f32.gmra.mrb[0].mxu0 %v454
        %v921 = vpop.f32.mrb[0].mxu0
        %v922 = vadd.f32 %v697, %v921
        %v923 = vpop.f32.mrb[0].mxu0
        %924 = vmatprep.mubr.f32.mxu0 0.0
        %925 = vmatmul.mubr.f32.gmra.mrb[0].mxu0 %v455
        %v926 = vpop.f32.mrb[0].mxu0
        %v927 = vadd.f32 %v702, %v926
        %v928 = vpop.f32.mrb[0].mxu0
        %929 = vmatprep.mubr.f32.mxu0 0.0
        %930 = vmatmul.mubr.f32.gmra.mrb[0].mxu0 %v456
        %v931 = vpop.f32.mrb[0].mxu0
        %v932 = vadd.f32 %v707, %v931
        %v933 = vpop.f32.mrb[0].mxu0
        %934 = vmatprep.mubr.f32.mxu0 0.0
        %935 = vmatmul.mubr.f32.gmra.mrb[0].mxu0 %v457
        %v936 = vpop.f32.mrb[0].mxu0
        %v937 = vadd.f32 %v712, %v936
        %v938 = vpop.f32.mrb[0].mxu0
        %939 = vmatprep.mubr.f32.mxu0 0.0
        %940 = vmatmul.mubr.f32.gmra.mrb[0].mxu0 %v458
        %v941 = vpop.f32.mrb[0].mxu0
        %v942 = vadd.f32 %v717, %v941
        %v943 = vpop.f32.mrb[0].mxu0
        %944 = vmatprep.mubr.f32.mxu0 0.0
        %945 = vmatmul.mubr.f32.gmra.mrb[0].mxu0 %v459
        %v946 = vpop.f32.mrb[0].mxu0
        %v947 = vadd.f32 %v722, %v946
        %v948 = vpop.f32.mrb[0].mxu0
        %949 = vmatprep.mubr.f32.mxu0 0.0
        %950 = vmatmul.mubr.f32.gmra.mrb[0].mxu0 %v460
        %v951 = vpop.f32.mrb[0].mxu0
        %v952 = vadd.f32 %v727, %v951
        %v953 = vpop.f32.mrb[0].mxu0
        %954 = vmatprep.mubr.f32.mxu0 0.0
        %955 = vmatmul.mubr.f32.gmra.mrb[0].mxu0 %v461
        %v956 = vpop.f32.mrb[0].mxu0
        %v957 = vadd.f32 %v732, %v956
        %v958 = vpop.f32.mrb[0].mxu0
        %959 = vmatprep.mubr.f32.mxu0 0.0
        %960 = vmatmul.mubr.f32.gmra.mrb[0].mxu0 %v462
        %v961 = vpop.f32.mrb[0].mxu0
        %v962 = vadd.f32 %v737, %v961
        %v963 = vpop.f32.mrb[0].mxu0
        %964 = vmatprep.mubr.f32.mxu0 0.0
        %965 = vmatmul.mubr.f32.gmra.mrb[0].mxu0 %v463
        %v966 = vpop.f32.mrb[0].mxu0
        %v967 = vadd.f32 %v742, %v966
        %v968 = vpop.f32.mrb[0].mxu0
        %969 = vmatprep.mubr.f32.mxu0 0.0
        %970 = vmatmul.mubr.f32.gmra.mrb[0].mxu0 %v464
        %v971 = vpop.f32.mrb[0].mxu0
        %v972 = vadd.f32 %v747, %v971
        %v973 = vpop.f32.mrb[0].mxu0
        %974 = vmatprep.mubr.f32.mxu0 0.0
        %975 = vmatmul.mubr.f32.gmra.mrb[0].mxu0 %v465
        %v976 = vpop.f32.mrb[0].mxu0
        %v977 = vadd.f32 %v752, %v976
        %v978 = vpop.f32.mrb[0].mxu0
        %979 = vdwg.mxu0
        %v980 = vld [vmem:[#allocation2 + $0x11] sm:$0xff]
        %v981 = vld [vmem:[#allocation2 + $0x19] sm:$0xff]
        %v982 = vld [vmem:[#allocation2 + $0x41] sm:$0xff]
        %v983 = vld [vmem:[#allocation2 + $0x49] sm:$0xff]
        %v984 = vld [vmem:[#allocation2 + $0x71] sm:$0xff]
        %v985 = vld [vmem:[#allocation2 + $0x79] sm:$0xff]
        %v986 = vld [vmem:[#allocation2 + $0xa1] sm:$0xff]
        %v987 = vld [vmem:[#allocation2 + $0xa9] sm:$0xff]
        %v988 = vld [vmem:[#allocation2 + $0xd1] sm:$0xff]
        %v989 = vld [vmem:[#allocation2 + $0xd9] sm:$0xff]
        %v990 = vld [vmem:[#allocation2 + $0x101] sm:$0xff]
        %v991 = vld [vmem:[#allocation2 + $0x109] sm:$0xff]
        %v992 = vld [vmem:[#allocation2 + $0x131] sm:$0xff]
        %v993 = vld [vmem:[#allocation2 + $0x139] sm:$0xff]
        %v994 = vld [vmem:[#allocation2 + $0x161] sm:$0xff]
        %v995 = vld [vmem:[#allocation2 + $0x169] sm:$0xff]
        %v996 = vld [vmem:[#allocation2 + $0x191] sm:$0xff]
        %v997 = vld [vmem:[#allocation2 + $0x199] sm:$0xff]
        %v998 = vld [vmem:[#allocation2 + $0x1c1] sm:$0xff]
        %v999 = vld [vmem:[#allocation2 + $0x1c9] sm:$0xff]
        %v1000 = vld [vmem:[#allocation2 + $0x1f1] sm:$0xff]
        %v1001 = vld [vmem:[#allocation2 + $0x1f9] sm:$0xff]
        %v1002 = vld [vmem:[#allocation2 + $0x221] sm:$0xff]
        %v1003 = vld [vmem:[#allocation2 + $0x229] sm:$0xff]
        %v1004 = vld [vmem:[#allocation2 + $0x251] sm:$0xff]
        %v1005 = vld [vmem:[#allocation2 + $0x259] sm:$0xff]
        %v1006 = vld [vmem:[#allocation2 + $0x281] sm:$0xff]
        %v1007 = vld [vmem:[#allocation2 + $0x289] sm:$0xff]
        %v1008 = vld [vmem:[#allocation2 + $0x2b1] sm:$0xff]
        %v1009 = vld [vmem:[#allocation2 + $0x2b9] sm:$0xff]
        %v1010 = vld [vmem:[#allocation2 + $0x2e1] sm:$0xff]
        %v1011 = vld [vmem:[#allocation2 + $0x2e9] sm:$0xff]
        %v1012 = vld [vmem:[%s207 + $0x100] sm:$0xff]
        %v1013 = vld [vmem:[%s207 + $0x108] sm:$0xff]
        %v1014 = vld [vmem:[%s207 + $0x110] sm:$0xff]
        %v1015 = vld [vmem:[%s207 + $0x118] sm:$0xff]
        %v1016 = vld [vmem:[%s207 + $0x120] sm:$0xff]
        %v1017 = vld [vmem:[%s207 + $0x128] sm:$0xff]
        %v1018 = vld [vmem:[%s207 + $0x130] sm:$0xff]
        %v1019 = vld [vmem:[%s207 + $0x138] sm:$0xff]
        %v1020 = vld [vmem:[%s207 + $0x140] sm:$0xff]
        %v1021 = vld [vmem:[%s207 + $0x148] sm:$0xff]
        %v1022 = vld [vmem:[%s207 + $0x150] sm:$0xff]
        %v1023 = vld [vmem:[%s207 + $0x158] sm:$0xff]
        %v1024 = vld [vmem:[%s207 + $0x160] sm:$0xff]
        %v1025 = vld [vmem:[%s207 + $0x168] sm:$0xff]
        %v1026 = vld [vmem:[%s207 + $0x170] sm:$0xff]
        %v1027 = vld [vmem:[%s207 + $0x178] sm:$0xff]
        %1028 = vmatprep.subr.mxu0 0.0
        %1029 = vmatpush1.msra.mxu0 %v1012
        %1030 = vmatprep.subr.mxu0 0.0
        %1031 = vmatpush1.msra.mxu0 %v1013
        %1032 = vmatprep.subr.mxu0 0.0
        %1033 = vmatpush1.msra.mxu0 %v1014
        %1034 = vmatprep.subr.mxu0 0.0
        %1035 = vmatpush1.msra.mxu0 %v1015
        %1036 = vmatprep.subr.mxu0 0.0
        %1037 = vmatpush1.msra.mxu0 %v1016
        %1038 = vmatprep.subr.mxu0 0.0
        %1039 = vmatpush1.msra.mxu0 %v1017
        %1040 = vmatprep.subr.mxu0 0.0
        %1041 = vmatpush1.msra.mxu0 %v1018
        %1042 = vmatprep.subr.mxu0 0.0
        %1043 = vmatpush1.msra.mxu0 %v1019
        %1044 = vmatprep.subr.mxu0 0.0
        %1045 = vmatpush1.msra.mxu0 %v1020
        %1046 = vmatprep.subr.mxu0 0.0
        %1047 = vmatpush1.msra.mxu0 %v1021
        %1048 = vmatprep.subr.mxu0 0.0
        %1049 = vmatpush1.msra.mxu0 %v1022
        %1050 = vmatprep.subr.mxu0 0.0
        %1051 = vmatpush1.msra.mxu0 %v1023
        %1052 = vmatprep.subr.mxu0 0.0
        %1053 = vmatpush1.msra.mxu0 %v1024
        %1054 = vmatprep.subr.mxu0 0.0
        %1055 = vmatpush1.msra.mxu0 %v1025
        %1056 = vmatprep.subr.mxu0 0.0
        %1057 = vmatpush1.msra.mxu0 %v1026
        %1058 = vmatprep.subr.mxu0 0.0
        %1059 = vmatpush1.msra.mxu0 %v1027
        %1060 = vmatprep.subr.mxu0 0.0
        %1061 = vmatpush1.msra.mxu0 0.0
        %1062 = vmatprep.subr.mxu0 0.0
        %1063 = vmatpush1.msra.mxu0 0.0
        %1064 = vmatprep.subr.mxu0 0.0
        %1065 = vmatpush1.msra.mxu0 0.0
        %1066 = vmatprep.subr.mxu0 0.0
        %1067 = vmatpush1.msra.mxu0 0.0
        %1068 = vmatprep.subr.mxu0 0.0
        %1069 = vmatpush1.msra.mxu0 0.0
        %1070 = vmatprep.subr.mxu0 0.0
        %1071 = vmatpush1.msra.mxu0 0.0
        %1072 = vmatprep.subr.mxu0 0.0
        %1073 = vmatpush1.msra.mxu0 0.0
        %1074 = vmatprep.subr.mxu0 0.0
        %1075 = vmatpush1.msra.mxu0 0.0
        %1076 = vmatprep.subr.mxu0 0.0
        %1077 = vmatpush1.msra.mxu0 0.0
        %1078 = vmatprep.subr.mxu0 0.0
        %1079 = vmatpush1.msra.mxu0 0.0
        %1080 = vmatprep.subr.mxu0 0.0
        %1081 = vmatpush1.msra.mxu0 0.0
        %1082 = vmatprep.subr.mxu0 0.0
        %1083 = vmatpush1.msra.mxu0 0.0
        %1084 = vmatprep.subr.mxu0 0.0
        %1085 = vmatpush1.msra.mxu0 0.0
        %1086 = vmatprep.subr.mxu0 0.0
        %1087 = vmatpush1.msra.mxu0 0.0
        %1088 = vmatprep.subr.mxu0 0.0
        %1089 = vmatpush1.msra.mxu0 0.0
        %1090 = vmatprep.subr.mxu0 0.0
        %1091 = vmatpush1.msra.mxu0 0.0
        %1092 = vmatprep.mubr.f32.mxu0 0.0
        %1093 = vmatmul.mubr.f32.gmra.mrb[0].mxu0 %v980
        %v1094 = vpop.f32.mrb[0].mxu0
        %v1095 = vadd.f32 0.0, %v1094
        %v1096 = vpop.f32.mrb[0].mxu0
        %1097 = vmatprep.mubr.f32.mxu0 0.0
        %1098 = vmatmul.mubr.f32.gmra.mrb[0].mxu0 %v981
        %v1099 = vpop.f32.mrb[0].mxu0
        %v1100 = vadd.f32 0.0, %v1099
        %v1101 = vpop.f32.mrb[0].mxu0
        %1102 = vmatprep.mubr.f32.mxu0 0.0
        %1103 = vmatmul.mubr.f32.gmra.mrb[0].mxu0 %v982
        %v1104 = vpop.f32.mrb[0].mxu0
        %v1105 = vadd.f32 0.0, %v1104
        %v1106 = vpop.f32.mrb[0].mxu0
        %1107 = vmatprep.mubr.f32.mxu0 0.0
        %1108 = vmatmul.mubr.f32.gmra.mrb[0].mxu0 %v983
        %v1109 = vpop.f32.mrb[0].mxu0
        %v1110 = vadd.f32 0.0, %v1109
        %v1111 = vpop.f32.mrb[0].mxu0
        %1112 = vmatprep.mubr.f32.mxu0 0.0
        %1113 = vmatmul.mubr.f32.gmra.mrb[0].mxu0 %v984
        %v1114 = vpop.f32.mrb[0].mxu0
        %v1115 = vadd.f32 0.0, %v1114
        %v1116 = vpop.f32.mrb[0].mxu0
        %1117 = vmatprep.mubr.f32.mxu0 0.0
        %1118 = vmatmul.mubr.f32.gmra.mrb[0].mxu0 %v985
        %v1119 = vpop.f32.mrb[0].mxu0
        %v1120 = vadd.f32 0.0, %v1119
        %v1121 = vpop.f32.mrb[0].mxu0
        %1122 = vmatprep.mubr.f32.mxu0 0.0
        %1123 = vmatmul.mubr.f32.gmra.mrb[0].mxu0 %v986
        %v1124 = vpop.f32.mrb[0].mxu0
        %v1125 = vadd.f32 0.0, %v1124
        %v1126 = vpop.f32.mrb[0].mxu0
        %1127 = vmatprep.mubr.f32.mxu0 0.0
        %1128 = vmatmul.mubr.f32.gmra.mrb[0].mxu0 %v987
        %v1129 = vpop.f32.mrb[0].mxu0
        %v1130 = vadd.f32 0.0, %v1129
        %v1131 = vpop.f32.mrb[0].mxu0
        %1132 = vmatprep.mubr.f32.mxu0 0.0
        %1133 = vmatmul.mubr.f32.gmra.mrb[0].mxu0 %v988
        %v1134 = vpop.f32.mrb[0].mxu0
        %v1135 = vadd.f32 0.0, %v1134
        %v1136 = vpop.f32.mrb[0].mxu0
        %1137 = vmatprep.mubr.f32.mxu0 0.0
        %1138 = vmatmul.mubr.f32.gmra.mrb[0].mxu0 %v989
        %v1139 = vpop.f32.mrb[0].mxu0
        %v1140 = vadd.f32 0.0, %v1139
        %v1141 = vpop.f32.mrb[0].mxu0
        %1142 = vmatprep.mubr.f32.mxu0 0.0
        %1143 = vmatmul.mubr.f32.gmra.mrb[0].mxu0 %v990
        %v1144 = vpop.f32.mrb[0].mxu0
        %v1145 = vadd.f32 0.0, %v1144
        %v1146 = vpop.f32.mrb[0].mxu0
        %1147 = vmatprep.mubr.f32.mxu0 0.0
        %1148 = vmatmul.mubr.f32.gmra.mrb[0].mxu0 %v991
        %v1149 = vpop.f32.mrb[0].mxu0
        %v1150 = vadd.f32 0.0, %v1149
        %v1151 = vpop.f32.mrb[0].mxu0
        %1152 = vmatprep.mubr.f32.mxu0 0.0
        %1153 = vmatmul.mubr.f32.gmra.mrb[0].mxu0 %v992
        %v1154 = vpop.f32.mrb[0].mxu0
        %v1155 = vadd.f32 0.0, %v1154
        %v1156 = vpop.f32.mrb[0].mxu0
        %1157 = vmatprep.mubr.f32.mxu0 0.0
        %1158 = vmatmul.mubr.f32.gmra.mrb[0].mxu0 %v993
        %v1159 = vpop.f32.mrb[0].mxu0
        %v1160 = vadd.f32 0.0, %v1159
        %v1161 = vpop.f32.mrb[0].mxu0
        %1162 = vmatprep.mubr.f32.mxu0 0.0
        %1163 = vmatmul.mubr.f32.gmra.mrb[0].mxu0 %v994
        %v1164 = vpop.f32.mrb[0].mxu0
        %v1165 = vadd.f32 0.0, %v1164
        %v1166 = vpop.f32.mrb[0].mxu0
        %1167 = vmatprep.mubr.f32.mxu0 0.0
        %1168 = vmatmul.mubr.f32.gmra.mrb[0].mxu0 %v995
        %v1169 = vpop.f32.mrb[0].mxu0
        %v1170 = vadd.f32 0.0, %v1169
        %v1171 = vpop.f32.mrb[0].mxu0
        %1172 = vmatprep.mubr.f32.mxu0 0.0
        %1173 = vmatmul.mubr.f32.gmra.mrb[0].mxu0 %v996
        %v1174 = vpop.f32.mrb[0].mxu0
        %v1175 = vadd.f32 0.0, %v1174
        %v1176 = vpop.f32.mrb[0].mxu0
        %1177 = vmatprep.mubr.f32.mxu0 0.0
        %1178 = vmatmul.mubr.f32.gmra.mrb[0].mxu0 %v997
        %v1179 = vpop.f32.mrb[0].mxu0
        %v1180 = vadd.f32 0.0, %v1179
        %v1181 = vpop.f32.mrb[0].mxu0
        %1182 = vmatprep.mubr.f32.mxu0 0.0
        %1183 = vmatmul.mubr.f32.gmra.mrb[0].mxu0 %v998
        %v1184 = vpop.f32.mrb[0].mxu0
        %v1185 = vadd.f32 0.0, %v1184
        %v1186 = vpop.f32.mrb[0].mxu0
        %1187 = vmatprep.mubr.f32.mxu0 0.0
        %1188 = vmatmul.mubr.f32.gmra.mrb[0].mxu0 %v999
        %v1189 = vpop.f32.mrb[0].mxu0
        %v1190 = vadd.f32 0.0, %v1189
        %v1191 = vpop.f32.mrb[0].mxu0
        %1192 = vmatprep.mubr.f32.mxu0 0.0
        %1193 = vmatmul.mubr.f32.gmra.mrb[0].mxu0 %v1000
        %v1194 = vpop.f32.mrb[0].mxu0
        %v1195 = vadd.f32 0.0, %v1194
        %v1196 = vpop.f32.mrb[0].mxu0
        %1197 = vmatprep.mubr.f32.mxu0 0.0
        %1198 = vmatmul.mubr.f32.gmra.mrb[0].mxu0 %v1001
        %v1199 = vpop.f32.mrb[0].mxu0
        %v1200 = vadd.f32 0.0, %v1199
        %v1201 = vpop.f32.mrb[0].mxu0
        %1202 = vmatprep.mubr.f32.mxu0 0.0
        %1203 = vmatmul.mubr.f32.gmra.mrb[0].mxu0 %v1002
        %v1204 = vpop.f32.mrb[0].mxu0
        %v1205 = vadd.f32 0.0, %v1204
        %v1206 = vpop.f32.mrb[0].mxu0
        %1207 = vmatprep.mubr.f32.mxu0 0.0
        %1208 = vmatmul.mubr.f32.gmra.mrb[0].mxu0 %v1003
        %v1209 = vpop.f32.mrb[0].mxu0
        %v1210 = vadd.f32 0.0, %v1209
        %v1211 = vpop.f32.mrb[0].mxu0
        %1212 = vmatprep.mubr.f32.mxu0 0.0
        %1213 = vmatmul.mubr.f32.gmra.mrb[0].mxu0 %v1004
        %v1214 = vpop.f32.mrb[0].mxu0
        %v1215 = vadd.f32 0.0, %v1214
        %v1216 = vpop.f32.mrb[0].mxu0
        %1217 = vmatprep.mubr.f32.mxu0 0.0
        %1218 = vmatmul.mubr.f32.gmra.mrb[0].mxu0 %v1005
        %v1219 = vpop.f32.mrb[0].mxu0
        %v1220 = vadd.f32 0.0, %v1219
        %v1221 = vpop.f32.mrb[0].mxu0
        %1222 = vmatprep.mubr.f32.mxu0 0.0
        %1223 = vmatmul.mubr.f32.gmra.mrb[0].mxu0 %v1006
        %v1224 = vpop.f32.mrb[0].mxu0
        %v1225 = vadd.f32 0.0, %v1224
        %v1226 = vpop.f32.mrb[0].mxu0
        %1227 = vmatprep.mubr.f32.mxu0 0.0
        %1228 = vmatmul.mubr.f32.gmra.mrb[0].mxu0 %v1007
        %v1229 = vpop.f32.mrb[0].mxu0
        %v1230 = vadd.f32 0.0, %v1229
        %v1231 = vpop.f32.mrb[0].mxu0
        %1232 = vmatprep.mubr.f32.mxu0 0.0
        %1233 = vmatmul.mubr.f32.gmra.mrb[0].mxu0 %v1008
        %v1234 = vpop.f32.mrb[0].mxu0
        %v1235 = vadd.f32 0.0, %v1234
        %v1236 = vpop.f32.mrb[0].mxu0
        %1237 = vmatprep.mubr.f32.mxu0 0.0
        %1238 = vmatmul.mubr.f32.gmra.mrb[0].mxu0 %v1009
        %v1239 = vpop.f32.mrb[0].mxu0
        %v1240 = vadd.f32 0.0, %v1239
        %v1241 = vpop.f32.mrb[0].mxu0
        %1242 = vmatprep.mubr.f32.mxu0 0.0
        %1243 = vmatmul.mubr.f32.gmra.mrb[0].mxu0 %v1010
        %v1244 = vpop.f32.mrb[0].mxu0
        %v1245 = vadd.f32 0.0, %v1244
        %v1246 = vpop.f32.mrb[0].mxu0
        %1247 = vmatprep.mubr.f32.mxu0 0.0
        %1248 = vmatmul.mubr.f32.gmra.mrb[0].mxu0 %v1011
        %v1249 = vpop.f32.mrb[0].mxu0
        %v1250 = vadd.f32 0.0, %v1249
        %v1251 = vpop.f32.mrb[0].mxu0
        %1252 = vdwg.mxu0
        %v1253 = vadd.f32 %v822, %v1095
        %v1254 = vadd.f32 %v827, %v1100
        %v1255 = vadd.f32 %v832, %v1105
        %v1256 = vadd.f32 %v837, %v1110
        %v1257 = vadd.f32 %v842, %v1115
        %v1258 = vadd.f32 %v847, %v1120
        %v1259 = vadd.f32 %v852, %v1125
        %v1260 = vadd.f32 %v857, %v1130
        %v1261 = vadd.f32 %v862, %v1135
        %v1262 = vadd.f32 %v867, %v1140
        %v1263 = vadd.f32 %v872, %v1145
        %v1264 = vadd.f32 %v877, %v1150
        %v1265 = vadd.f32 %v882, %v1155
        %v1266 = vadd.f32 %v887, %v1160
        %v1267 = vadd.f32 %v892, %v1165
        %v1268 = vadd.f32 %v897, %v1170
        %v1269 = vadd.f32 %v902, %v1175
        %v1270 = vadd.f32 %v907, %v1180
        %v1271 = vadd.f32 %v912, %v1185
        %v1272 = vadd.f32 %v917, %v1190
        %v1273 = vadd.f32 %v922, %v1195
        %v1274 = vadd.f32 %v927, %v1200
        %v1275 = vadd.f32 %v932, %v1205
        %v1276 = vadd.f32 %v937, %v1210
        %v1277 = vadd.f32 %v942, %v1215
        %v1278 = vadd.f32 %v947, %v1220
        %v1279 = vadd.f32 %v952, %v1225
        %v1280 = vadd.f32 %v957, %v1230
        %v1281 = vadd.f32 %v962, %v1235
        %v1282 = vadd.f32 %v967, %v1240
        %v1283 = vadd.f32 %v972, %v1245
        %v1284 = vadd.f32 %v977, %v1250
        %s1285 = scalar_lea.vmem [#allocation2], 48
        %v1286 = vld [vmem:[%s1285 + $0xf] sm:$0xff]
        %v1287 = vld [vmem:[%s1285 + $0x17] sm:$0xff]
        %v1288 = vld [vmem:[%s1285 + $0x3f] sm:$0xff]
        %v1289 = vld [vmem:[%s1285 + $0x47] sm:$0xff]
        %v1290 = vld [vmem:[%s1285 + $0x6f] sm:$0xff]
        %v1291 = vld [vmem:[%s1285 + $0x77] sm:$0xff]
        %v1292 = vld [vmem:[%s1285 + $0x9f] sm:$0xff]
        %v1293 = vld [vmem:[%s1285 + $0xa7] sm:$0xff]
        %v1294 = vld [vmem:[%s1285 + $0xcf] sm:$0xff]
        %v1295 = vld [vmem:[%s1285 + $0xd7] sm:$0xff]
        %v1296 = vld [vmem:[%s1285 + $0xff] sm:$0xff]
        %v1297 = vld [vmem:[%s1285 + $0x107] sm:$0xff]
        %v1298 = vld [vmem:[%s1285 + $0x12f] sm:$0xff]
        %v1299 = vld [vmem:[%s1285 + $0x137] sm:$0xff]
        %v1300 = vld [vmem:[%s1285 + $0x15f] sm:$0xff]
        %v1301 = vld [vmem:[%s1285 + $0x167] sm:$0xff]
        %v1302 = vld [vmem:[%s1285 + $0x18f] sm:$0xff]
        %v1303 = vld [vmem:[%s1285 + $0x197] sm:$0xff]
        %v1304 = vld [vmem:[%s1285 + $0x1bf] sm:$0xff]
        %v1305 = vld [vmem:[%s1285 + $0x1c7] sm:$0xff]
        %v1306 = vld [vmem:[%s1285 + $0x1ef] sm:$0xff]
        %v1307 = vld [vmem:[%s1285 + $0x1f7] sm:$0xff]
        %v1308 = vld [vmem:[%s1285 + $0x21f] sm:$0xff]
        %v1309 = vld [vmem:[%s1285 + $0x227] sm:$0xff]
        %v1310 = vld [vmem:[%s1285 + $0x24f] sm:$0xff]
        %v1311 = vld [vmem:[%s1285 + $0x257] sm:$0xff]
        %v1312 = vld [vmem:[%s1285 + $0x27f] sm:$0xff]
        %v1313 = vld [vmem:[%s1285 + $0x287] sm:$0xff]
        %v1314 = vld [vmem:[%s1285 + $0x2af] sm:$0xff]
        %v1315 = vld [vmem:[%s1285 + $0x2b7] sm:$0xff]
        %v1316 = vld [vmem:[%s1285 + $0x2df] sm:$0xff]
        %v1317 = vld [vmem:[%s1285 + $0x2e7] sm:$0xff]
        %v1318 = vld [vmem:[%s207 + $0x180] sm:$0xff]
        %v1319 = vld [vmem:[%s207 + $0x188] sm:$0xff]
        %v1320 = vld [vmem:[%s207 + $0x190] sm:$0xff]
        %v1321 = vld [vmem:[%s207 + $0x198] sm:$0xff]
        %v1322 = vld [vmem:[%s207 + $0x1a0] sm:$0xff]
        %v1323 = vld [vmem:[%s207 + $0x1a8] sm:$0xff]
        %v1324 = vld [vmem:[%s207 + $0x1b0] sm:$0xff]
        %v1325 = vld [vmem:[%s207 + $0x1b8] sm:$0xff]
        %v1326 = vld [vmem:[%s207 + $0x1c0] sm:$0xff]
        %v1327 = vld [vmem:[%s207 + $0x1c8] sm:$0xff]
        %v1328 = vld [vmem:[%s207 + $0x1d0] sm:$0xff]
        %v1329 = vld [vmem:[%s207 + $0x1d8] sm:$0xff]
        %v1330 = vld [vmem:[%s207 + $0x1e0] sm:$0xff]
        %v1331 = vld [vmem:[%s207 + $0x1e8] sm:$0xff]
        %v1332 = vld [vmem:[%s207 + $0x1f0] sm:$0xff]
        %v1333 = vld [vmem:[%s207 + $0x1f8] sm:$0xff]
        %1334 = vmatprep.subr.mxu0 0.0
        %1335 = vmatpush1.msra.mxu0 %v1318
        %1336 = vmatprep.subr.mxu0 0.0
        %1337 = vmatpush1.msra.mxu0 %v1319
        %1338 = vmatprep.subr.mxu0 0.0
        %1339 = vmatpush1.msra.mxu0 %v1320
        %1340 = vmatprep.subr.mxu0 0.0
        %1341 = vmatpush1.msra.mxu0 %v1321
        %1342 = vmatprep.subr.mxu0 0.0
        %1343 = vmatpush1.msra.mxu0 %v1322
        %1344 = vmatprep.subr.mxu0 0.0
        %1345 = vmatpush1.msra.mxu0 %v1323
        %1346 = vmatprep.subr.mxu0 0.0
        %1347 = vmatpush1.msra.mxu0 %v1324
        %1348 = vmatprep.subr.mxu0 0.0
        %1349 = vmatpush1.msra.mxu0 %v1325
        %1350 = vmatprep.subr.mxu0 0.0
        %1351 = vmatpush1.msra.mxu0 %v1326
        %1352 = vmatprep.subr.mxu0 0.0
        %1353 = vmatpush1.msra.mxu0 %v1327
        %1354 = vmatprep.subr.mxu0 0.0
        %1355 = vmatpush1.msra.mxu0 %v1328
        %1356 = vmatprep.subr.mxu0 0.0
        %1357 = vmatpush1.msra.mxu0 %v1329
        %1358 = vmatprep.subr.mxu0 0.0
        %1359 = vmatpush1.msra.mxu0 %v1330
        %1360 = vmatprep.subr.mxu0 0.0
        %1361 = vmatpush1.msra.mxu0 %v1331
        %1362 = vmatprep.subr.mxu0 0.0
        %1363 = vmatpush1.msra.mxu0 %v1332
        %1364 = vmatprep.subr.mxu0 0.0
        %1365 = vmatpush1.msra.mxu0 %v1333
        %1366 = vmatprep.subr.mxu0 0.0
        %1367 = vmatpush1.msra.mxu0 0.0
        %1368 = vmatprep.subr.mxu0 0.0
        %1369 = vmatpush1.msra.mxu0 0.0
        %1370 = vmatprep.subr.mxu0 0.0
        %1371 = vmatpush1.msra.mxu0 0.0
        %1372 = vmatprep.subr.mxu0 0.0
        %1373 = vmatpush1.msra.mxu0 0.0
        %1374 = vmatprep.subr.mxu0 0.0
        %1375 = vmatpush1.msra.mxu0 0.0
        %1376 = vmatprep.subr.mxu0 0.0
        %1377 = vmatpush1.msra.mxu0 0.0
        %1378 = vmatprep.subr.mxu0 0.0
        %1379 = vmatpush1.msra.mxu0 0.0
        %1380 = vmatprep.subr.mxu0 0.0
        %1381 = vmatpush1.msra.mxu0 0.0
        %1382 = vmatprep.subr.mxu0 0.0
        %1383 = vmatpush1.msra.mxu0 0.0
        %1384 = vmatprep.subr.mxu0 0.0
        %1385 = vmatpush1.msra.mxu0 0.0
        %1386 = vmatprep.subr.mxu0 0.0
        %1387 = vmatpush1.msra.mxu0 0.0
        %1388 = vmatprep.subr.mxu0 0.0
        %1389 = vmatpush1.msra.mxu0 0.0
        %1390 = vmatprep.subr.mxu0 0.0
        %1391 = vmatpush1.msra.mxu0 0.0
        %1392 = vmatprep.subr.mxu0 0.0
        %1393 = vmatpush1.msra.mxu0 0.0
        %1394 = vmatprep.subr.mxu0 0.0
        %1395 = vmatpush1.msra.mxu0 0.0
        %1396 = vmatprep.subr.mxu0 0.0
        %1397 = vmatpush1.msra.mxu0 0.0
        %1398 = vmatprep.mubr.f32.mxu0 0.0
        %1399 = vmatmul.mubr.f32.gmra.mrb[0].mxu0 %v1286
        %v1400 = vpop.f32.mrb[0].mxu0
        %v1401 = vadd.f32 0.0, %v1400
        %v1402 = vpop.f32.mrb[0].mxu0
        %1403 = vmatprep.mubr.f32.mxu0 0.0
        %1404 = vmatmul.mubr.f32.gmra.mrb[0].mxu0 %v1287
        %v1405 = vpop.f32.mrb[0].mxu0
        %v1406 = vadd.f32 0.0, %v1405
        %v1407 = vpop.f32.mrb[0].mxu0
        %1408 = vmatprep.mubr.f32.mxu0 0.0
        %1409 = vmatmul.mubr.f32.gmra.mrb[0].mxu0 %v1288
        %v1410 = vpop.f32.mrb[0].mxu0
        %v1411 = vadd.f32 0.0, %v1410
        %v1412 = vpop.f32.mrb[0].mxu0
        %1413 = vmatprep.mubr.f32.mxu0 0.0
        %1414 = vmatmul.mubr.f32.gmra.mrb[0].mxu0 %v1289
        %v1415 = vpop.f32.mrb[0].mxu0
        %v1416 = vadd.f32 0.0, %v1415
        %v1417 = vpop.f32.mrb[0].mxu0
        %1418 = vmatprep.mubr.f32.mxu0 0.0
        %1419 = vmatmul.mubr.f32.gmra.mrb[0].mxu0 %v1290
        %v1420 = vpop.f32.mrb[0].mxu0
        %v1421 = vadd.f32 0.0, %v1420
        %v1422 = vpop.f32.mrb[0].mxu0
        %1423 = vmatprep.mubr.f32.mxu0 0.0
        %1424 = vmatmul.mubr.f32.gmra.mrb[0].mxu0 %v1291
        %v1425 = vpop.f32.mrb[0].mxu0
        %v1426 = vadd.f32 0.0, %v1425
        %v1427 = vpop.f32.mrb[0].mxu0
        %1428 = vmatprep.mubr.f32.mxu0 0.0
        %1429 = vmatmul.mubr.f32.gmra.mrb[0].mxu0 %v1292
        %v1430 = vpop.f32.mrb[0].mxu0
        %v1431 = vadd.f32 0.0, %v1430
        %v1432 = vpop.f32.mrb[0].mxu0
        %1433 = vmatprep.mubr.f32.mxu0 0.0
        %1434 = vmatmul.mubr.f32.gmra.mrb[0].mxu0 %v1293
        %v1435 = vpop.f32.mrb[0].mxu0
        %v1436 = vadd.f32 0.0, %v1435
        %v1437 = vpop.f32.mrb[0].mxu0
        %1438 = vmatprep.mubr.f32.mxu0 0.0
        %1439 = vmatmul.mubr.f32.gmra.mrb[0].mxu0 %v1294
        %v1440 = vpop.f32.mrb[0].mxu0
        %v1441 = vadd.f32 0.0, %v1440
        %v1442 = vpop.f32.mrb[0].mxu0
        %1443 = vmatprep.mubr.f32.mxu0 0.0
        %1444 = vmatmul.mubr.f32.gmra.mrb[0].mxu0 %v1295
        %v1445 = vpop.f32.mrb[0].mxu0
        %v1446 = vadd.f32 0.0, %v1445
        %v1447 = vpop.f32.mrb[0].mxu0
        %1448 = vmatprep.mubr.f32.mxu0 0.0
        %1449 = vmatmul.mubr.f32.gmra.mrb[0].mxu0 %v1296
        %v1450 = vpop.f32.mrb[0].mxu0
        %v1451 = vadd.f32 0.0, %v1450
        %v1452 = vpop.f32.mrb[0].mxu0
        %1453 = vmatprep.mubr.f32.mxu0 0.0
        %1454 = vmatmul.mubr.f32.gmra.mrb[0].mxu0 %v1297
        %v1455 = vpop.f32.mrb[0].mxu0
        %v1456 = vadd.f32 0.0, %v1455
        %v1457 = vpop.f32.mrb[0].mxu0
        %1458 = vmatprep.mubr.f32.mxu0 0.0
        %1459 = vmatmul.mubr.f32.gmra.mrb[0].mxu0 %v1298
        %v1460 = vpop.f32.mrb[0].mxu0
        %v1461 = vadd.f32 0.0, %v1460
        %v1462 = vpop.f32.mrb[0].mxu0
        %1463 = vmatprep.mubr.f32.mxu0 0.0
        %1464 = vmatmul.mubr.f32.gmra.mrb[0].mxu0 %v1299
        %v1465 = vpop.f32.mrb[0].mxu0
        %v1466 = vadd.f32 0.0, %v1465
        %v1467 = vpop.f32.mrb[0].mxu0
        %1468 = vmatprep.mubr.f32.mxu0 0.0
        %1469 = vmatmul.mubr.f32.gmra.mrb[0].mxu0 %v1300
        %v1470 = vpop.f32.mrb[0].mxu0
        %v1471 = vadd.f32 0.0, %v1470
        %v1472 = vpop.f32.mrb[0].mxu0
        %1473 = vmatprep.mubr.f32.mxu0 0.0
        %1474 = vmatmul.mubr.f32.gmra.mrb[0].mxu0 %v1301
        %v1475 = vpop.f32.mrb[0].mxu0
        %v1476 = vadd.f32 0.0, %v1475
        %v1477 = vpop.f32.mrb[0].mxu0
        %1478 = vmatprep.mubr.f32.mxu0 0.0
        %1479 = vmatmul.mubr.f32.gmra.mrb[0].mxu0 %v1302
        %v1480 = vpop.f32.mrb[0].mxu0
        %v1481 = vadd.f32 0.0, %v1480
        %v1482 = vpop.f32.mrb[0].mxu0
        %1483 = vmatprep.mubr.f32.mxu0 0.0
        %1484 = vmatmul.mubr.f32.gmra.mrb[0].mxu0 %v1303
        %v1485 = vpop.f32.mrb[0].mxu0
        %v1486 = vadd.f32 0.0, %v1485
        %v1487 = vpop.f32.mrb[0].mxu0
        %1488 = vmatprep.mubr.f32.mxu0 0.0
        %1489 = vmatmul.mubr.f32.gmra.mrb[0].mxu0 %v1304
        %v1490 = vpop.f32.mrb[0].mxu0
        %v1491 = vadd.f32 0.0, %v1490
        %v1492 = vpop.f32.mrb[0].mxu0
        %1493 = vmatprep.mubr.f32.mxu0 0.0
        %1494 = vmatmul.mubr.f32.gmra.mrb[0].mxu0 %v1305
        %v1495 = vpop.f32.mrb[0].mxu0
        %v1496 = vadd.f32 0.0, %v1495
        %v1497 = vpop.f32.mrb[0].mxu0
        %1498 = vmatprep.mubr.f32.mxu0 0.0
        %1499 = vmatmul.mubr.f32.gmra.mrb[0].mxu0 %v1306
        %v1500 = vpop.f32.mrb[0].mxu0
        %v1501 = vadd.f32 0.0, %v1500
        %v1502 = vpop.f32.mrb[0].mxu0
        %1503 = vmatprep.mubr.f32.mxu0 0.0
        %1504 = vmatmul.mubr.f32.gmra.mrb[0].mxu0 %v1307
        %v1505 = vpop.f32.mrb[0].mxu0
        %v1506 = vadd.f32 0.0, %v1505
        %v1507 = vpop.f32.mrb[0].mxu0
        %1508 = vmatprep.mubr.f32.mxu0 0.0
        %1509 = vmatmul.mubr.f32.gmra.mrb[0].mxu0 %v1308
        %v1510 = vpop.f32.mrb[0].mxu0
        %v1511 = vadd.f32 0.0, %v1510
        %v1512 = vpop.f32.mrb[0].mxu0
        %1513 = vmatprep.mubr.f32.mxu0 0.0
        %1514 = vmatmul.mubr.f32.gmra.mrb[0].mxu0 %v1309
        %v1515 = vpop.f32.mrb[0].mxu0
        %v1516 = vadd.f32 0.0, %v1515
        %v1517 = vpop.f32.mrb[0].mxu0
        %1518 = vmatprep.mubr.f32.mxu0 0.0
        %1519 = vmatmul.mubr.f32.gmra.mrb[0].mxu0 %v1310
        %v1520 = vpop.f32.mrb[0].mxu0
        %v1521 = vadd.f32 0.0, %v1520
        %v1522 = vpop.f32.mrb[0].mxu0
        %1523 = vmatprep.mubr.f32.mxu0 0.0
        %1524 = vmatmul.mubr.f32.gmra.mrb[0].mxu0 %v1311
        %v1525 = vpop.f32.mrb[0].mxu0
        %v1526 = vadd.f32 0.0, %v1525
        %v1527 = vpop.f32.mrb[0].mxu0
        %1528 = vmatprep.mubr.f32.mxu0 0.0
        %1529 = vmatmul.mubr.f32.gmra.mrb[0].mxu0 %v1312
        %v1530 = vpop.f32.mrb[0].mxu0
        %v1531 = vadd.f32 0.0, %v1530
        %v1532 = vpop.f32.mrb[0].mxu0
        %1533 = vmatprep.mubr.f32.mxu0 0.0
        %1534 = vmatmul.mubr.f32.gmra.mrb[0].mxu0 %v1313
        %v1535 = vpop.f32.mrb[0].mxu0
        %v1536 = vadd.f32 0.0, %v1535
        %v1537 = vpop.f32.mrb[0].mxu0
        %1538 = vmatprep.mubr.f32.mxu0 0.0
        %1539 = vmatmul.mubr.f32.gmra.mrb[0].mxu0 %v1314
        %v1540 = vpop.f32.mrb[0].mxu0
        %v1541 = vadd.f32 0.0, %v1540
        %v1542 = vpop.f32.mrb[0].mxu0
        %1543 = vmatprep.mubr.f32.mxu0 0.0
        %1544 = vmatmul.mubr.f32.gmra.mrb[0].mxu0 %v1315
        %v1545 = vpop.f32.mrb[0].mxu0
        %v1546 = vadd.f32 0.0, %v1545
        %v1547 = vpop.f32.mrb[0].mxu0
        %1548 = vmatprep.mubr.f32.mxu0 0.0
        %1549 = vmatmul.mubr.f32.gmra.mrb[0].mxu0 %v1316
        %v1550 = vpop.f32.mrb[0].mxu0
        %v1551 = vadd.f32 0.0, %v1550
        %v1552 = vpop.f32.mrb[0].mxu0
        %1553 = vmatprep.mubr.f32.mxu0 0.0
        %1554 = vmatmul.mubr.f32.gmra.mrb[0].mxu0 %v1317
        %v1555 = vpop.f32.mrb[0].mxu0
        %v1556 = vadd.f32 0.0, %v1555
        %v1557 = vpop.f32.mrb[0].mxu0
        %1558 = vdwg.mxu0
        %v1559 = vadd.f32 %v1253, %v1401
        %v1560 = vadd.f32 %v1254, %v1406
        %v1561 = vadd.f32 %v1255, %v1411
        %v1562 = vadd.f32 %v1256, %v1416
        %v1563 = vadd.f32 %v1257, %v1421
        %v1564 = vadd.f32 %v1258, %v1426
        %v1565 = vadd.f32 %v1259, %v1431
        %v1566 = vadd.f32 %v1260, %v1436
        %v1567 = vadd.f32 %v1261, %v1441
        %v1568 = vadd.f32 %v1262, %v1446
        %v1569 = vadd.f32 %v1263, %v1451
        %v1570 = vadd.f32 %v1264, %v1456
        %v1571 = vadd.f32 %v1265, %v1461
        %v1572 = vadd.f32 %v1266, %v1466
        %v1573 = vadd.f32 %v1267, %v1471
        %v1574 = vadd.f32 %v1268, %v1476
        %v1575 = vadd.f32 %v1269, %v1481
        %v1576 = vadd.f32 %v1270, %v1486
        %v1577 = vadd.f32 %v1271, %v1491
        %v1578 = vadd.f32 %v1272, %v1496
        %v1579 = vadd.f32 %v1273, %v1501
        %v1580 = vadd.f32 %v1274, %v1506
        %v1581 = vadd.f32 %v1275, %v1511
        %v1582 = vadd.f32 %v1276, %v1516
        %v1583 = vadd.f32 %v1277, %v1521
        %v1584 = vadd.f32 %v1278, %v1526
        %v1585 = vadd.f32 %v1279, %v1531
        %v1586 = vadd.f32 %v1280, %v1536
        %v1587 = vadd.f32 %v1281, %v1541
        %v1588 = vadd.f32 %v1282, %v1546
        %v1589 = vadd.f32 %v1283, %v1551
        %v1590 = vadd.f32 %v1284, %v1556
        %v1591 = vld [vmem:[%s1285 + $0x10] sm:$0xff]
        %v1592 = vld [vmem:[%s1285 + $0x18] sm:$0xff]
        %v1593 = vld [vmem:[%s1285 + $0x40] sm:$0xff]
        %v1594 = vld [vmem:[%s1285 + $0x48] sm:$0xff]
        %v1595 = vld [vmem:[%s1285 + $0x70] sm:$0xff]
        %v1596 = vld [vmem:[%s1285 + $0x78] sm:$0xff]
        %v1597 = vld [vmem:[%s1285 + $0xa0] sm:$0xff]
        %v1598 = vld [vmem:[%s1285 + $0xa8] sm:$0xff]
        %v1599 = vld [vmem:[%s1285 + $0xd0] sm:$0xff]
        %v1600 = vld [vmem:[%s1285 + $0xd8] sm:$0xff]
        %v1601 = vld [vmem:[%s1285 + $0x100] sm:$0xff]
        %v1602 = vld [vmem:[%s1285 + $0x108] sm:$0xff]
        %v1603 = vld [vmem:[%s1285 + $0x130] sm:$0xff]
        %v1604 = vld [vmem:[%s1285 + $0x138] sm:$0xff]
        %v1605 = vld [vmem:[%s1285 + $0x160] sm:$0xff]
        %v1606 = vld [vmem:[%s1285 + $0x168] sm:$0xff]
        %v1607 = vld [vmem:[%s1285 + $0x190] sm:$0xff]
        %v1608 = vld [vmem:[%s1285 + $0x198] sm:$0xff]
        %v1609 = vld [vmem:[%s1285 + $0x1c0] sm:$0xff]
        %v1610 = vld [vmem:[%s1285 + $0x1c8] sm:$0xff]
        %v1611 = vld [vmem:[%s1285 + $0x1f0] sm:$0xff]
        %v1612 = vld [vmem:[%s1285 + $0x1f8] sm:$0xff]
        %v1613 = vld [vmem:[%s1285 + $0x220] sm:$0xff]
        %v1614 = vld [vmem:[%s1285 + $0x228] sm:$0xff]
        %v1615 = vld [vmem:[%s1285 + $0x250] sm:$0xff]
        %v1616 = vld [vmem:[%s1285 + $0x258] sm:$0xff]
        %v1617 = vld [vmem:[%s1285 + $0x280] sm:$0xff]
        %v1618 = vld [vmem:[%s1285 + $0x288] sm:$0xff]
        %v1619 = vld [vmem:[%s1285 + $0x2b0] sm:$0xff]
        %v1620 = vld [vmem:[%s1285 + $0x2b8] sm:$0xff]
        %v1621 = vld [vmem:[%s1285 + $0x2e0] sm:$0xff]
        %v1622 = vld [vmem:[%s1285 + $0x2e8] sm:$0xff]
        %v1623 = vld [vmem:[%s207 + $0x200] sm:$0xff]
        %v1624 = vld [vmem:[%s207 + $0x208] sm:$0xff]
        %v1625 = vld [vmem:[%s207 + $0x210] sm:$0xff]
        %v1626 = vld [vmem:[%s207 + $0x218] sm:$0xff]
        %v1627 = vld [vmem:[%s207 + $0x220] sm:$0xff]
        %v1628 = vld [vmem:[%s207 + $0x228] sm:$0xff]
        %v1629 = vld [vmem:[%s207 + $0x230] sm:$0xff]
        %v1630 = vld [vmem:[%s207 + $0x238] sm:$0xff]
        %v1631 = vld [vmem:[%s207 + $0x240] sm:$0xff]
        %v1632 = vld [vmem:[%s207 + $0x248] sm:$0xff]
        %v1633 = vld [vmem:[%s207 + $0x250] sm:$0xff]
        %v1634 = vld [vmem:[%s207 + $0x258] sm:$0xff]
        %v1635 = vld [vmem:[%s207 + $0x260] sm:$0xff]
        %v1636 = vld [vmem:[%s207 + $0x268] sm:$0xff]
        %v1637 = vld [vmem:[%s207 + $0x270] sm:$0xff]
        %v1638 = vld [vmem:[%s207 + $0x278] sm:$0xff]
        %1639 = vmatprep.subr.mxu0 0.0
        %1640 = vmatpush1.msra.mxu0 %v1623
        %1641 = vmatprep.subr.mxu0 0.0
        %1642 = vmatpush1.msra.mxu0 %v1624
        %1643 = vmatprep.subr.mxu0 0.0
        %1644 = vmatpush1.msra.mxu0 %v1625
        %1645 = vmatprep.subr.mxu0 0.0
        %1646 = vmatpush1.msra.mxu0 %v1626
        %1647 = vmatprep.subr.mxu0 0.0
        %1648 = vmatpush1.msra.mxu0 %v1627
        %1649 = vmatprep.subr.mxu0 0.0
        %1650 = vmatpush1.msra.mxu0 %v1628
        %1651 = vmatprep.subr.mxu0 0.0
        %1652 = vmatpush1.msra.mxu0 %v1629
        %1653 = vmatprep.subr.mxu0 0.0
        %1654 = vmatpush1.msra.mxu0 %v1630
        %1655 = vmatprep.subr.mxu0 0.0
        %1656 = vmatpush1.msra.mxu0 %v1631
        %1657 = vmatprep.subr.mxu0 0.0
        %1658 = vmatpush1.msra.mxu0 %v1632
        %1659 = vmatprep.subr.mxu0 0.0
        %1660 = vmatpush1.msra.mxu0 %v1633
        %1661 = vmatprep.subr.mxu0 0.0
        %1662 = vmatpush1.msra.mxu0 %v1634
        %1663 = vmatprep.subr.mxu0 0.0
        %1664 = vmatpush1.msra.mxu0 %v1635
        %1665 = vmatprep.subr.mxu0 0.0
        %1666 = vmatpush1.msra.mxu0 %v1636
        %1667 = vmatprep.subr.mxu0 0.0
        %1668 = vmatpush1.msra.mxu0 %v1637
        %1669 = vmatprep.subr.mxu0 0.0
        %1670 = vmatpush1.msra.mxu0 %v1638
        %1671 = vmatprep.subr.mxu0 0.0
        %1672 = vmatpush1.msra.mxu0 0.0
        %1673 = vmatprep.subr.mxu0 0.0
        %1674 = vmatpush1.msra.mxu0 0.0
        %1675 = vmatprep.subr.mxu0 0.0
        %1676 = vmatpush1.msra.mxu0 0.0
        %1677 = vmatprep.subr.mxu0 0.0
        %1678 = vmatpush1.msra.mxu0 0.0
        %1679 = vmatprep.subr.mxu0 0.0
        %1680 = vmatpush1.msra.mxu0 0.0
        %1681 = vmatprep.subr.mxu0 0.0
        %1682 = vmatpush1.msra.mxu0 0.0
        %1683 = vmatprep.subr.mxu0 0.0
        %1684 = vmatpush1.msra.mxu0 0.0
        %1685 = vmatprep.subr.mxu0 0.0
        %1686 = vmatpush1.msra.mxu0 0.0
        %1687 = vmatprep.subr.mxu0 0.0
        %1688 = vmatpush1.msra.mxu0 0.0
        %1689 = vmatprep.subr.mxu0 0.0
        %1690 = vmatpush1.msra.mxu0 0.0
        %1691 = vmatprep.subr.mxu0 0.0
        %1692 = vmatpush1.msra.mxu0 0.0
        %1693 = vmatprep.subr.mxu0 0.0
        %1694 = vmatpush1.msra.mxu0 0.0
        %1695 = vmatprep.subr.mxu0 0.0
        %1696 = vmatpush1.msra.mxu0 0.0
        %1697 = vmatprep.subr.mxu0 0.0
        %1698 = vmatpush1.msra.mxu0 0.0
        %1699 = vmatprep.subr.mxu0 0.0
        %1700 = vmatpush1.msra.mxu0 0.0
        %1701 = vmatprep.subr.mxu0 0.0
        %1702 = vmatpush1.msra.mxu0 0.0
        %1703 = vmatprep.mubr.f32.mxu0 0.0
        %1704 = vmatmul.mubr.f32.gmra.mrb[0].mxu0 %v1591
        %v1705 = vpop.f32.mrb[0].mxu0
        %v1706 = vadd.f32 0.0, %v1705
        %v1707 = vpop.f32.mrb[0].mxu0
        %1708 = vmatprep.mubr.f32.mxu0 0.0
        %1709 = vmatmul.mubr.f32.gmra.mrb[0].mxu0 %v1592
        %v1710 = vpop.f32.mrb[0].mxu0
        %v1711 = vadd.f32 0.0, %v1710
        %v1712 = vpop.f32.mrb[0].mxu0
        %1713 = vmatprep.mubr.f32.mxu0 0.0
        %1714 = vmatmul.mubr.f32.gmra.mrb[0].mxu0 %v1593
        %v1715 = vpop.f32.mrb[0].mxu0
        %v1716 = vadd.f32 0.0, %v1715
        %v1717 = vpop.f32.mrb[0].mxu0
        %1718 = vmatprep.mubr.f32.mxu0 0.0
        %1719 = vmatmul.mubr.f32.gmra.mrb[0].mxu0 %v1594
        %v1720 = vpop.f32.mrb[0].mxu0
        %v1721 = vadd.f32 0.0, %v1720
        %v1722 = vpop.f32.mrb[0].mxu0
        %1723 = vmatprep.mubr.f32.mxu0 0.0
        %1724 = vmatmul.mubr.f32.gmra.mrb[0].mxu0 %v1595
        %v1725 = vpop.f32.mrb[0].mxu0
        %v1726 = vadd.f32 0.0, %v1725
        %v1727 = vpop.f32.mrb[0].mxu0
        %1728 = vmatprep.mubr.f32.mxu0 0.0
        %1729 = vmatmul.mubr.f32.gmra.mrb[0].mxu0 %v1596
        %v1730 = vpop.f32.mrb[0].mxu0
        %v1731 = vadd.f32 0.0, %v1730
        %v1732 = vpop.f32.mrb[0].mxu0
        %1733 = vmatprep.mubr.f32.mxu0 0.0
        %1734 = vmatmul.mubr.f32.gmra.mrb[0].mxu0 %v1597
        %v1735 = vpop.f32.mrb[0].mxu0
        %v1736 = vadd.f32 0.0, %v1735
        %v1737 = vpop.f32.mrb[0].mxu0
        %1738 = vmatprep.mubr.f32.mxu0 0.0
        %1739 = vmatmul.mubr.f32.gmra.mrb[0].mxu0 %v1598
        %v1740 = vpop.f32.mrb[0].mxu0
        %v1741 = vadd.f32 0.0, %v1740
        %v1742 = vpop.f32.mrb[0].mxu0
        %1743 = vmatprep.mubr.f32.mxu0 0.0
        %1744 = vmatmul.mubr.f32.gmra.mrb[0].mxu0 %v1599
        %v1745 = vpop.f32.mrb[0].mxu0
        %v1746 = vadd.f32 0.0, %v1745
        %v1747 = vpop.f32.mrb[0].mxu0
        %1748 = vmatprep.mubr.f32.mxu0 0.0
        %1749 = vmatmul.mubr.f32.gmra.mrb[0].mxu0 %v1600
        %v1750 = vpop.f32.mrb[0].mxu0
        %v1751 = vadd.f32 0.0, %v1750
        %v1752 = vpop.f32.mrb[0].mxu0
        %1753 = vmatprep.mubr.f32.mxu0 0.0
        %1754 = vmatmul.mubr.f32.gmra.mrb[0].mxu0 %v1601
        %v1755 = vpop.f32.mrb[0].mxu0
        %v1756 = vadd.f32 0.0, %v1755
        %v1757 = vpop.f32.mrb[0].mxu0
        %1758 = vmatprep.mubr.f32.mxu0 0.0
        %1759 = vmatmul.mubr.f32.gmra.mrb[0].mxu0 %v1602
        %v1760 = vpop.f32.mrb[0].mxu0
        %v1761 = vadd.f32 0.0, %v1760
        %v1762 = vpop.f32.mrb[0].mxu0
        %1763 = vmatprep.mubr.f32.mxu0 0.0
        %1764 = vmatmul.mubr.f32.gmra.mrb[0].mxu0 %v1603
        %v1765 = vpop.f32.mrb[0].mxu0
        %v1766 = vadd.f32 0.0, %v1765
        %v1767 = vpop.f32.mrb[0].mxu0
        %1768 = vmatprep.mubr.f32.mxu0 0.0
        %1769 = vmatmul.mubr.f32.gmra.mrb[0].mxu0 %v1604
        %v1770 = vpop.f32.mrb[0].mxu0
        %v1771 = vadd.f32 0.0, %v1770
        %v1772 = vpop.f32.mrb[0].mxu0
        %1773 = vmatprep.mubr.f32.mxu0 0.0
        %1774 = vmatmul.mubr.f32.gmra.mrb[0].mxu0 %v1605
        %v1775 = vpop.f32.mrb[0].mxu0
        %v1776 = vadd.f32 0.0, %v1775
        %v1777 = vpop.f32.mrb[0].mxu0
        %1778 = vmatprep.mubr.f32.mxu0 0.0
        %1779 = vmatmul.mubr.f32.gmra.mrb[0].mxu0 %v1606
        %v1780 = vpop.f32.mrb[0].mxu0
        %v1781 = vadd.f32 0.0, %v1780
        %v1782 = vpop.f32.mrb[0].mxu0
        %1783 = vmatprep.mubr.f32.mxu0 0.0
        %1784 = vmatmul.mubr.f32.gmra.mrb[0].mxu0 %v1607
        %v1785 = vpop.f32.mrb[0].mxu0
        %v1786 = vadd.f32 0.0, %v1785
        %v1787 = vpop.f32.mrb[0].mxu0
        %1788 = vmatprep.mubr.f32.mxu0 0.0
        %1789 = vmatmul.mubr.f32.gmra.mrb[0].mxu0 %v1608
        %v1790 = vpop.f32.mrb[0].mxu0
        %v1791 = vadd.f32 0.0, %v1790
        %v1792 = vpop.f32.mrb[0].mxu0
        %1793 = vmatprep.mubr.f32.mxu0 0.0
        %1794 = vmatmul.mubr.f32.gmra.mrb[0].mxu0 %v1609
        %v1795 = vpop.f32.mrb[0].mxu0
        %v1796 = vadd.f32 0.0, %v1795
        %v1797 = vpop.f32.mrb[0].mxu0
        %1798 = vmatprep.mubr.f32.mxu0 0.0
        %1799 = vmatmul.mubr.f32.gmra.mrb[0].mxu0 %v1610
        %v1800 = vpop.f32.mrb[0].mxu0
        %v1801 = vadd.f32 0.0, %v1800
        %v1802 = vpop.f32.mrb[0].mxu0
        %1803 = vmatprep.mubr.f32.mxu0 0.0
        %1804 = vmatmul.mubr.f32.gmra.mrb[0].mxu0 %v1611
        %v1805 = vpop.f32.mrb[0].mxu0
        %v1806 = vadd.f32 0.0, %v1805
        %v1807 = vpop.f32.mrb[0].mxu0
        %1808 = vmatprep.mubr.f32.mxu0 0.0
        %1809 = vmatmul.mubr.f32.gmra.mrb[0].mxu0 %v1612
        %v1810 = vpop.f32.mrb[0].mxu0
        %v1811 = vadd.f32 0.0, %v1810
        %v1812 = vpop.f32.mrb[0].mxu0
        %1813 = vmatprep.mubr.f32.mxu0 0.0
        %1814 = vmatmul.mubr.f32.gmra.mrb[0].mxu0 %v1613
        %v1815 = vpop.f32.mrb[0].mxu0
        %v1816 = vadd.f32 0.0, %v1815
        %v1817 = vpop.f32.mrb[0].mxu0
        %1818 = vmatprep.mubr.f32.mxu0 0.0
        %1819 = vmatmul.mubr.f32.gmra.mrb[0].mxu0 %v1614
        %v1820 = vpop.f32.mrb[0].mxu0
        %v1821 = vadd.f32 0.0, %v1820
        %v1822 = vpop.f32.mrb[0].mxu0
        %1823 = vmatprep.mubr.f32.mxu0 0.0
        %1824 = vmatmul.mubr.f32.gmra.mrb[0].mxu0 %v1615
        %v1825 = vpop.f32.mrb[0].mxu0
        %v1826 = vadd.f32 0.0, %v1825
        %v1827 = vpop.f32.mrb[0].mxu0
        %1828 = vmatprep.mubr.f32.mxu0 0.0
        %1829 = vmatmul.mubr.f32.gmra.mrb[0].mxu0 %v1616
        %v1830 = vpop.f32.mrb[0].mxu0
        %v1831 = vadd.f32 0.0, %v1830
        %v1832 = vpop.f32.mrb[0].mxu0
        %1833 = vmatprep.mubr.f32.mxu0 0.0
        %1834 = vmatmul.mubr.f32.gmra.mrb[0].mxu0 %v1617
        %v1835 = vpop.f32.mrb[0].mxu0
        %v1836 = vadd.f32 0.0, %v1835
        %v1837 = vpop.f32.mrb[0].mxu0
        %1838 = vmatprep.mubr.f32.mxu0 0.0
        %1839 = vmatmul.mubr.f32.gmra.mrb[0].mxu0 %v1618
        %v1840 = vpop.f32.mrb[0].mxu0
        %v1841 = vadd.f32 0.0, %v1840
        %v1842 = vpop.f32.mrb[0].mxu0
        %1843 = vmatprep.mubr.f32.mxu0 0.0
        %1844 = vmatmul.mubr.f32.gmra.mrb[0].mxu0 %v1619
        %v1845 = vpop.f32.mrb[0].mxu0
        %v1846 = vadd.f32 0.0, %v1845
        %v1847 = vpop.f32.mrb[0].mxu0
        %1848 = vmatprep.mubr.f32.mxu0 0.0
        %1849 = vmatmul.mubr.f32.gmra.mrb[0].mxu0 %v1620
        %v1850 = vpop.f32.mrb[0].mxu0
        %v1851 = vadd.f32 0.0, %v1850
        %v1852 = vpop.f32.mrb[0].mxu0
        %1853 = vmatprep.mubr.f32.mxu0 0.0
        %1854 = vmatmul.mubr.f32.gmra.mrb[0].mxu0 %v1621
        %v1855 = vpop.f32.mrb[0].mxu0
        %v1856 = vadd.f32 0.0, %v1855
        %v1857 = vpop.f32.mrb[0].mxu0
        %1858 = vmatprep.mubr.f32.mxu0 0.0
        %1859 = vmatmul.mubr.f32.gmra.mrb[0].mxu0 %v1622
        %v1860 = vpop.f32.mrb[0].mxu0
        %v1861 = vadd.f32 0.0, %v1860
        %v1862 = vpop.f32.mrb[0].mxu0
        %1863 = vdwg.mxu0
        %v1864 = vadd.f32 %v1559, %v1706
        %v1865 = vadd.f32 %v1560, %v1711
        %v1866 = vadd.f32 %v1561, %v1716
        %v1867 = vadd.f32 %v1562, %v1721
        %v1868 = vadd.f32 %v1563, %v1726
        %v1869 = vadd.f32 %v1564, %v1731
        %v1870 = vadd.f32 %v1565, %v1736
        %v1871 = vadd.f32 %v1566, %v1741
        %v1872 = vadd.f32 %v1567, %v1746
        %v1873 = vadd.f32 %v1568, %v1751
        %v1874 = vadd.f32 %v1569, %v1756
        %v1875 = vadd.f32 %v1570, %v1761
        %v1876 = vadd.f32 %v1571, %v1766
        %v1877 = vadd.f32 %v1572, %v1771
        %v1878 = vadd.f32 %v1573, %v1776
        %v1879 = vadd.f32 %v1574, %v1781
        %v1880 = vadd.f32 %v1575, %v1786
        %v1881 = vadd.f32 %v1576, %v1791
        %v1882 = vadd.f32 %v1577, %v1796
        %v1883 = vadd.f32 %v1578, %v1801
        %v1884 = vadd.f32 %v1579, %v1806
        %v1885 = vadd.f32 %v1580, %v1811
        %v1886 = vadd.f32 %v1581, %v1816
        %v1887 = vadd.f32 %v1582, %v1821
        %v1888 = vadd.f32 %v1583, %v1826
        %v1889 = vadd.f32 %v1584, %v1831
        %v1890 = vadd.f32 %v1585, %v1836
        %v1891 = vadd.f32 %v1586, %v1841
        %v1892 = vadd.f32 %v1587, %v1846
        %v1893 = vadd.f32 %v1588, %v1851
        %v1894 = vadd.f32 %v1589, %v1856
        %v1895 = vadd.f32 %v1590, %v1861
        %v1896 = vld [vmem:[%s1285 + $0x11] sm:$0xff]
        %v1897 = vld [vmem:[%s1285 + $0x19] sm:$0xff]
        %v1898 = vld [vmem:[%s1285 + $0x41] sm:$0xff]
        %v1899 = vld [vmem:[%s1285 + $0x49] sm:$0xff]
        %v1900 = vld [vmem:[%s1285 + $0x71] sm:$0xff]
        %v1901 = vld [vmem:[%s1285 + $0x79] sm:$0xff]
        %v1902 = vld [vmem:[%s1285 + $0xa1] sm:$0xff]
        %v1903 = vld [vmem:[%s1285 + $0xa9] sm:$0xff]
        %v1904 = vld [vmem:[%s1285 + $0xd1] sm:$0xff]
        %v1905 = vld [vmem:[%s1285 + $0xd9] sm:$0xff]
        %v1906 = vld [vmem:[%s1285 + $0x101] sm:$0xff]
        %v1907 = vld [vmem:[%s1285 + $0x109] sm:$0xff]
        %v1908 = vld [vmem:[%s1285 + $0x131] sm:$0xff]
        %v1909 = vld [vmem:[%s1285 + $0x139] sm:$0xff]
        %v1910 = vld [vmem:[%s1285 + $0x161] sm:$0xff]
        %v1911 = vld [vmem:[%s1285 + $0x169] sm:$0xff]
        %v1912 = vld [vmem:[%s1285 + $0x191] sm:$0xff]
        %v1913 = vld [vmem:[%s1285 + $0x199] sm:$0xff]
        %v1914 = vld [vmem:[%s1285 + $0x1c1] sm:$0xff]
        %v1915 = vld [vmem:[%s1285 + $0x1c9] sm:$0xff]
        %v1916 = vld [vmem:[%s1285 + $0x1f1] sm:$0xff]
        %v1917 = vld [vmem:[%s1285 + $0x1f9] sm:$0xff]
        %v1918 = vld [vmem:[%s1285 + $0x221] sm:$0xff]
        %v1919 = vld [vmem:[%s1285 + $0x229] sm:$0xff]
        %v1920 = vld [vmem:[%s1285 + $0x251] sm:$0xff]
        %v1921 = vld [vmem:[%s1285 + $0x259] sm:$0xff]
        %v1922 = vld [vmem:[%s1285 + $0x281] sm:$0xff]
        %v1923 = vld [vmem:[%s1285 + $0x289] sm:$0xff]
        %v1924 = vld [vmem:[%s1285 + $0x2b1] sm:$0xff]
        %v1925 = vld [vmem:[%s1285 + $0x2b9] sm:$0xff]
        %v1926 = vld [vmem:[%s1285 + $0x2e1] sm:$0xff]
        %v1927 = vld [vmem:[%s1285 + $0x2e9] sm:$0xff]
        %v1928 = vld [vmem:[%s207 + $0x280] sm:$0xff]
        %v1929 = vld [vmem:[%s207 + $0x288] sm:$0xff]
        %v1930 = vld [vmem:[%s207 + $0x290] sm:$0xff]
        %v1931 = vld [vmem:[%s207 + $0x298] sm:$0xff]
        %v1932 = vld [vmem:[%s207 + $0x2a0] sm:$0xff]
        %v1933 = vld [vmem:[%s207 + $0x2a8] sm:$0xff]
        %v1934 = vld [vmem:[%s207 + $0x2b0] sm:$0xff]
        %v1935 = vld [vmem:[%s207 + $0x2b8] sm:$0xff]
        %v1936 = vld [vmem:[%s207 + $0x2c0] sm:$0xff]
        %v1937 = vld [vmem:[%s207 + $0x2c8] sm:$0xff]
        %v1938 = vld [vmem:[%s207 + $0x2d0] sm:$0xff]
        %v1939 = vld [vmem:[%s207 + $0x2d8] sm:$0xff]
        %v1940 = vld [vmem:[%s207 + $0x2e0] sm:$0xff]
        %v1941 = vld [vmem:[%s207 + $0x2e8] sm:$0xff]
        %v1942 = vld [vmem:[%s207 + $0x2f0] sm:$0xff]
        %v1943 = vld [vmem:[%s207 + $0x2f8] sm:$0xff]
        %1944 = vmatprep.subr.mxu0 0.0
        %1945 = vmatpush1.msra.mxu0 %v1928
        %1946 = vmatprep.subr.mxu0 0.0
        %1947 = vmatpush1.msra.mxu0 %v1929
        %1948 = vmatprep.subr.mxu0 0.0
        %1949 = vmatpush1.msra.mxu0 %v1930
        %1950 = vmatprep.subr.mxu0 0.0
        %1951 = vmatpush1.msra.mxu0 %v1931
        %1952 = vmatprep.subr.mxu0 0.0
        %1953 = vmatpush1.msra.mxu0 %v1932
        %1954 = vmatprep.subr.mxu0 0.0
        %1955 = vmatpush1.msra.mxu0 %v1933
        %1956 = vmatprep.subr.mxu0 0.0
        %1957 = vmatpush1.msra.mxu0 %v1934
        %1958 = vmatprep.subr.mxu0 0.0
        %1959 = vmatpush1.msra.mxu0 %v1935
        %1960 = vmatprep.subr.mxu0 0.0
        %1961 = vmatpush1.msra.mxu0 %v1936
        %1962 = vmatprep.subr.mxu0 0.0
        %1963 = vmatpush1.msra.mxu0 %v1937
        %1964 = vmatprep.subr.mxu0 0.0
        %1965 = vmatpush1.msra.mxu0 %v1938
        %1966 = vmatprep.subr.mxu0 0.0
        %1967 = vmatpush1.msra.mxu0 %v1939
        %1968 = vmatprep.subr.mxu0 0.0
        %1969 = vmatpush1.msra.mxu0 %v1940
        %1970 = vmatprep.subr.mxu0 0.0
        %1971 = vmatpush1.msra.mxu0 %v1941
        %1972 = vmatprep.subr.mxu0 0.0
        %1973 = vmatpush1.msra.mxu0 %v1942
        %1974 = vmatprep.subr.mxu0 0.0
        %1975 = vmatpush1.msra.mxu0 %v1943
        %1976 = vmatprep.subr.mxu0 0.0
        %1977 = vmatpush1.msra.mxu0 0.0
        %1978 = vmatprep.subr.mxu0 0.0
        %1979 = vmatpush1.msra.mxu0 0.0
        %1980 = vmatprep.subr.mxu0 0.0
        %1981 = vmatpush1.msra.mxu0 0.0
        %1982 = vmatprep.subr.mxu0 0.0
        %1983 = vmatpush1.msra.mxu0 0.0
        %1984 = vmatprep.subr.mxu0 0.0
        %1985 = vmatpush1.msra.mxu0 0.0
        %1986 = vmatprep.subr.mxu0 0.0
        %1987 = vmatpush1.msra.mxu0 0.0
        %1988 = vmatprep.subr.mxu0 0.0
        %1989 = vmatpush1.msra.mxu0 0.0
        %1990 = vmatprep.subr.mxu0 0.0
        %1991 = vmatpush1.msra.mxu0 0.0
        %1992 = vmatprep.subr.mxu0 0.0
        %1993 = vmatpush1.msra.mxu0 0.0
        %1994 = vmatprep.subr.mxu0 0.0
        %1995 = vmatpush1.msra.mxu0 0.0
        %1996 = vmatprep.subr.mxu0 0.0
        %1997 = vmatpush1.msra.mxu0 0.0
        %1998 = vmatprep.subr.mxu0 0.0
        %1999 = vmatpush1.msra.mxu0 0.0
        %2000 = vmatprep.subr.mxu0 0.0
        %2001 = vmatpush1.msra.mxu0 0.0
        %2002 = vmatprep.subr.mxu0 0.0
        %2003 = vmatpush1.msra.mxu0 0.0
        %2004 = vmatprep.subr.mxu0 0.0
        %2005 = vmatpush1.msra.mxu0 0.0
        %2006 = vmatprep.subr.mxu0 0.0
        %2007 = vmatpush1.msra.mxu0 0.0
        %2008 = vmatprep.mubr.f32.mxu0 0.0
        %2009 = vmatmul.mubr.f32.gmra.mrb[0].mxu0 %v1896
        %v2010 = vpop.f32.mrb[0].mxu0
        %v2011 = vadd.f32 0.0, %v2010
        %v2012 = vpop.f32.mrb[0].mxu0
        %2013 = vmatprep.mubr.f32.mxu0 0.0
        %2014 = vmatmul.mubr.f32.gmra.mrb[0].mxu0 %v1897
        %v2015 = vpop.f32.mrb[0].mxu0
        %v2016 = vadd.f32 0.0, %v2015
        %v2017 = vpop.f32.mrb[0].mxu0
        %2018 = vmatprep.mubr.f32.mxu0 0.0
        %2019 = vmatmul.mubr.f32.gmra.mrb[0].mxu0 %v1898
        %v2020 = vpop.f32.mrb[0].mxu0
        %v2021 = vadd.f32 0.0, %v2020
        %v2022 = vpop.f32.mrb[0].mxu0
        %2023 = vmatprep.mubr.f32.mxu0 0.0
        %2024 = vmatmul.mubr.f32.gmra.mrb[0].mxu0 %v1899
        %v2025 = vpop.f32.mrb[0].mxu0
        %v2026 = vadd.f32 0.0, %v2025
        %v2027 = vpop.f32.mrb[0].mxu0
        %2028 = vmatprep.mubr.f32.mxu0 0.0
        %2029 = vmatmul.mubr.f32.gmra.mrb[0].mxu0 %v1900
        %v2030 = vpop.f32.mrb[0].mxu0
        %v2031 = vadd.f32 0.0, %v2030
        %v2032 = vpop.f32.mrb[0].mxu0
        %2033 = vmatprep.mubr.f32.mxu0 0.0
        %2034 = vmatmul.mubr.f32.gmra.mrb[0].mxu0 %v1901
        %v2035 = vpop.f32.mrb[0].mxu0
        %v2036 = vadd.f32 0.0, %v2035
        %v2037 = vpop.f32.mrb[0].mxu0
        %2038 = vmatprep.mubr.f32.mxu0 0.0
        %2039 = vmatmul.mubr.f32.gmra.mrb[0].mxu0 %v1902
        %v2040 = vpop.f32.mrb[0].mxu0
        %v2041 = vadd.f32 0.0, %v2040
        %v2042 = vpop.f32.mrb[0].mxu0
        %2043 = vmatprep.mubr.f32.mxu0 0.0
        %2044 = vmatmul.mubr.f32.gmra.mrb[0].mxu0 %v1903
        %v2045 = vpop.f32.mrb[0].mxu0
        %v2046 = vadd.f32 0.0, %v2045
        %v2047 = vpop.f32.mrb[0].mxu0
        %2048 = vmatprep.mubr.f32.mxu0 0.0
        %2049 = vmatmul.mubr.f32.gmra.mrb[0].mxu0 %v1904
        %v2050 = vpop.f32.mrb[0].mxu0
        %v2051 = vadd.f32 0.0, %v2050
        %v2052 = vpop.f32.mrb[0].mxu0
        %2053 = vmatprep.mubr.f32.mxu0 0.0
        %2054 = vmatmul.mubr.f32.gmra.mrb[0].mxu0 %v1905
        %v2055 = vpop.f32.mrb[0].mxu0
        %v2056 = vadd.f32 0.0, %v2055
        %v2057 = vpop.f32.mrb[0].mxu0
        %2058 = vmatprep.mubr.f32.mxu0 0.0
        %2059 = vmatmul.mubr.f32.gmra.mrb[0].mxu0 %v1906
        %v2060 = vpop.f32.mrb[0].mxu0
        %v2061 = vadd.f32 0.0, %v2060
        %v2062 = vpop.f32.mrb[0].mxu0
        %2063 = vmatprep.mubr.f32.mxu0 0.0
        %2064 = vmatmul.mubr.f32.gmra.mrb[0].mxu0 %v1907
        %v2065 = vpop.f32.mrb[0].mxu0
        %v2066 = vadd.f32 0.0, %v2065
        %v2067 = vpop.f32.mrb[0].mxu0
        %2068 = vmatprep.mubr.f32.mxu0 0.0
        %2069 = vmatmul.mubr.f32.gmra.mrb[0].mxu0 %v1908
        %v2070 = vpop.f32.mrb[0].mxu0
        %v2071 = vadd.f32 0.0, %v2070
        %v2072 = vpop.f32.mrb[0].mxu0
        %2073 = vmatprep.mubr.f32.mxu0 0.0
        %2074 = vmatmul.mubr.f32.gmra.mrb[0].mxu0 %v1909
        %v2075 = vpop.f32.mrb[0].mxu0
        %v2076 = vadd.f32 0.0, %v2075
        %v2077 = vpop.f32.mrb[0].mxu0
        %2078 = vmatprep.mubr.f32.mxu0 0.0
        %2079 = vmatmul.mubr.f32.gmra.mrb[0].mxu0 %v1910
        %v2080 = vpop.f32.mrb[0].mxu0
        %v2081 = vadd.f32 0.0, %v2080
        %v2082 = vpop.f32.mrb[0].mxu0
        %2083 = vmatprep.mubr.f32.mxu0 0.0
        %2084 = vmatmul.mubr.f32.gmra.mrb[0].mxu0 %v1911
        %v2085 = vpop.f32.mrb[0].mxu0
        %v2086 = vadd.f32 0.0, %v2085
        %v2087 = vpop.f32.mrb[0].mxu0
        %2088 = vmatprep.mubr.f32.mxu0 0.0
        %2089 = vmatmul.mubr.f32.gmra.mrb[0].mxu0 %v1912
        %v2090 = vpop.f32.mrb[0].mxu0
        %v2091 = vadd.f32 0.0, %v2090
        %v2092 = vpop.f32.mrb[0].mxu0
        %2093 = vmatprep.mubr.f32.mxu0 0.0
        %2094 = vmatmul.mubr.f32.gmra.mrb[0].mxu0 %v1913
        %v2095 = vpop.f32.mrb[0].mxu0
        %v2096 = vadd.f32 0.0, %v2095
        %v2097 = vpop.f32.mrb[0].mxu0
        %2098 = vmatprep.mubr.f32.mxu0 0.0
        %2099 = vmatmul.mubr.f32.gmra.mrb[0].mxu0 %v1914
        %v2100 = vpop.f32.mrb[0].mxu0
        %v2101 = vadd.f32 0.0, %v2100
        %v2102 = vpop.f32.mrb[0].mxu0
        %2103 = vmatprep.mubr.f32.mxu0 0.0
        %2104 = vmatmul.mubr.f32.gmra.mrb[0].mxu0 %v1915
        %v2105 = vpop.f32.mrb[0].mxu0
        %v2106 = vadd.f32 0.0, %v2105
        %v2107 = vpop.f32.mrb[0].mxu0
        %2108 = vmatprep.mubr.f32.mxu0 0.0
        %2109 = vmatmul.mubr.f32.gmra.mrb[0].mxu0 %v1916
        %v2110 = vpop.f32.mrb[0].mxu0
        %v2111 = vadd.f32 0.0, %v2110
        %v2112 = vpop.f32.mrb[0].mxu0
        %2113 = vmatprep.mubr.f32.mxu0 0.0
        %2114 = vmatmul.mubr.f32.gmra.mrb[0].mxu0 %v1917
        %v2115 = vpop.f32.mrb[0].mxu0
        %v2116 = vadd.f32 0.0, %v2115
        %v2117 = vpop.f32.mrb[0].mxu0
        %2118 = vmatprep.mubr.f32.mxu0 0.0
        %2119 = vmatmul.mubr.f32.gmra.mrb[0].mxu0 %v1918
        %v2120 = vpop.f32.mrb[0].mxu0
        %v2121 = vadd.f32 0.0, %v2120
        %v2122 = vpop.f32.mrb[0].mxu0
        %2123 = vmatprep.mubr.f32.mxu0 0.0
        %2124 = vmatmul.mubr.f32.gmra.mrb[0].mxu0 %v1919
        %v2125 = vpop.f32.mrb[0].mxu0
        %v2126 = vadd.f32 0.0, %v2125
        %v2127 = vpop.f32.mrb[0].mxu0
        %2128 = vmatprep.mubr.f32.mxu0 0.0
        %2129 = vmatmul.mubr.f32.gmra.mrb[0].mxu0 %v1920
        %v2130 = vpop.f32.mrb[0].mxu0
        %v2131 = vadd.f32 0.0, %v2130
        %v2132 = vpop.f32.mrb[0].mxu0
        %2133 = vmatprep.mubr.f32.mxu0 0.0
        %2134 = vmatmul.mubr.f32.gmra.mrb[0].mxu0 %v1921
        %v2135 = vpop.f32.mrb[0].mxu0
        %v2136 = vadd.f32 0.0, %v2135
        %v2137 = vpop.f32.mrb[0].mxu0
        %2138 = vmatprep.mubr.f32.mxu0 0.0
        %2139 = vmatmul.mubr.f32.gmra.mrb[0].mxu0 %v1922
        %v2140 = vpop.f32.mrb[0].mxu0
        %v2141 = vadd.f32 0.0, %v2140
        %v2142 = vpop.f32.mrb[0].mxu0
        %2143 = vmatprep.mubr.f32.mxu0 0.0
        %2144 = vmatmul.mubr.f32.gmra.mrb[0].mxu0 %v1923
        %v2145 = vpop.f32.mrb[0].mxu0
        %v2146 = vadd.f32 0.0, %v2145
        %v2147 = vpop.f32.mrb[0].mxu0
        %2148 = vmatprep.mubr.f32.mxu0 0.0
        %2149 = vmatmul.mubr.f32.gmra.mrb[0].mxu0 %v1924
        %v2150 = vpop.f32.mrb[0].mxu0
        %v2151 = vadd.f32 0.0, %v2150
        %v2152 = vpop.f32.mrb[0].mxu0
        %2153 = vmatprep.mubr.f32.mxu0 0.0
        %2154 = vmatmul.mubr.f32.gmra.mrb[0].mxu0 %v1925
        %v2155 = vpop.f32.mrb[0].mxu0
        %v2156 = vadd.f32 0.0, %v2155
        %v2157 = vpop.f32.mrb[0].mxu0
        %2158 = vmatprep.mubr.f32.mxu0 0.0
        %2159 = vmatmul.mubr.f32.gmra.mrb[0].mxu0 %v1926
        %v2160 = vpop.f32.mrb[0].mxu0
        %v2161 = vadd.f32 0.0, %v2160
        %v2162 = vpop.f32.mrb[0].mxu0
        %2163 = vmatprep.mubr.f32.mxu0 0.0
        %2164 = vmatmul.mubr.f32.gmra.mrb[0].mxu0 %v1927
        %v2165 = vpop.f32.mrb[0].mxu0
        %v2166 = vadd.f32 0.0, %v2165
        %v2167 = vpop.f32.mrb[0].mxu0
        %2168 = vdwg.mxu0
        %v2169 = vadd.f32 %v1864, %v2011
        %v2170 = vadd.f32 %v1865, %v2016
        %v2171 = vadd.f32 %v1866, %v2021
        %v2172 = vadd.f32 %v1867, %v2026
        %v2173 = vadd.f32 %v1868, %v2031
        %v2174 = vadd.f32 %v1869, %v2036
        %v2175 = vadd.f32 %v1870, %v2041
        %v2176 = vadd.f32 %v1871, %v2046
        %v2177 = vadd.f32 %v1872, %v2051
        %v2178 = vadd.f32 %v1873, %v2056
        %v2179 = vadd.f32 %v1874, %v2061
        %v2180 = vadd.f32 %v1875, %v2066
        %v2181 = vadd.f32 %v1876, %v2071
        %v2182 = vadd.f32 %v1877, %v2076
        %v2183 = vadd.f32 %v1878, %v2081
        %v2184 = vadd.f32 %v1879, %v2086
        %v2185 = vadd.f32 %v1880, %v2091
        %v2186 = vadd.f32 %v1881, %v2096
        %v2187 = vadd.f32 %v1882, %v2101
        %v2188 = vadd.f32 %v1883, %v2106
        %v2189 = vadd.f32 %v1884, %v2111
        %v2190 = vadd.f32 %v1885, %v2116
        %v2191 = vadd.f32 %v1886, %v2121
        %v2192 = vadd.f32 %v1887, %v2126
        %v2193 = vadd.f32 %v1888, %v2131
        %v2194 = vadd.f32 %v1889, %v2136
        %v2195 = vadd.f32 %v1890, %v2141
        %v2196 = vadd.f32 %v1891, %v2146
        %v2197 = vadd.f32 %v1892, %v2151
        %v2198 = vadd.f32 %v1893, %v2156
        %v2199 = vadd.f32 %v1894, %v2161
        %v2200 = vadd.f32 %v1895, %v2166
        %s2201 = scalar_lea.vmem [#allocation2], 96
        %v2202 = vld [vmem:[%s2201 + $0xf] sm:$0xff]
        %v2203 = vld [vmem:[%s2201 + $0x17] sm:$0xff]
        %v2204 = vld [vmem:[%s2201 + $0x3f] sm:$0xff]
        %v2205 = vld [vmem:[%s2201 + $0x47] sm:$0xff]
        %v2206 = vld [vmem:[%s2201 + $0x6f] sm:$0xff]
        %v2207 = vld [vmem:[%s2201 + $0x77] sm:$0xff]
        %v2208 = vld [vmem:[%s2201 + $0x9f] sm:$0xff]
        %v2209 = vld [vmem:[%s2201 + $0xa7] sm:$0xff]
        %v2210 = vld [vmem:[%s2201 + $0xcf] sm:$0xff]
        %v2211 = vld [vmem:[%s2201 + $0xd7] sm:$0xff]
        %v2212 = vld [vmem:[%s2201 + $0xff] sm:$0xff]
        %v2213 = vld [vmem:[%s2201 + $0x107] sm:$0xff]
        %v2214 = vld [vmem:[%s2201 + $0x12f] sm:$0xff]
        %v2215 = vld [vmem:[%s2201 + $0x137] sm:$0xff]
        %v2216 = vld [vmem:[%s2201 + $0x15f] sm:$0xff]
        %v2217 = vld [vmem:[%s2201 + $0x167] sm:$0xff]
        %v2218 = vld [vmem:[%s2201 + $0x18f] sm:$0xff]
        %v2219 = vld [vmem:[%s2201 + $0x197] sm:$0xff]
        %v2220 = vld [vmem:[%s2201 + $0x1bf] sm:$0xff]
        %v2221 = vld [vmem:[%s2201 + $0x1c7] sm:$0xff]
        %v2222 = vld [vmem:[%s2201 + $0x1ef] sm:$0xff]
        %v2223 = vld [vmem:[%s2201 + $0x1f7] sm:$0xff]
        %v2224 = vld [vmem:[%s2201 + $0x21f] sm:$0xff]
        %v2225 = vld [vmem:[%s2201 + $0x227] sm:$0xff]
        %v2226 = vld [vmem:[%s2201 + $0x24f] sm:$0xff]
        %v2227 = vld [vmem:[%s2201 + $0x257] sm:$0xff]
        %v2228 = vld [vmem:[%s2201 + $0x27f] sm:$0xff]
        %v2229 = vld [vmem:[%s2201 + $0x287] sm:$0xff]
        %v2230 = vld [vmem:[%s2201 + $0x2af] sm:$0xff]
        %v2231 = vld [vmem:[%s2201 + $0x2b7] sm:$0xff]
        %v2232 = vld [vmem:[%s2201 + $0x2df] sm:$0xff]
        %v2233 = vld [vmem:[%s2201 + $0x2e7] sm:$0xff]
        %v2234 = vld [vmem:[%s207 + $0x300] sm:$0xff]
        %v2235 = vld [vmem:[%s207 + $0x308] sm:$0xff]
        %v2236 = vld [vmem:[%s207 + $0x310] sm:$0xff]
        %v2237 = vld [vmem:[%s207 + $0x318] sm:$0xff]
        %v2238 = vld [vmem:[%s207 + $0x320] sm:$0xff]
        %v2239 = vld [vmem:[%s207 + $0x328] sm:$0xff]
        %v2240 = vld [vmem:[%s207 + $0x330] sm:$0xff]
        %v2241 = vld [vmem:[%s207 + $0x338] sm:$0xff]
        %v2242 = vld [vmem:[%s207 + $0x340] sm:$0xff]
        %v2243 = vld [vmem:[%s207 + $0x348] sm:$0xff]
        %v2244 = vld [vmem:[%s207 + $0x350] sm:$0xff]
        %v2245 = vld [vmem:[%s207 + $0x358] sm:$0xff]
        %v2246 = vld [vmem:[%s207 + $0x360] sm:$0xff]
        %v2247 = vld [vmem:[%s207 + $0x368] sm:$0xff]
        %v2248 = vld [vmem:[%s207 + $0x370] sm:$0xff]
        %v2249 = vld [vmem:[%s207 + $0x378] sm:$0xff]
        %2250 = vmatprep.subr.mxu0 0.0
        %2251 = vmatpush1.msra.mxu0 %v2234
        %2252 = vmatprep.subr.mxu0 0.0
        %2253 = vmatpush1.msra.mxu0 %v2235
        %2254 = vmatprep.subr.mxu0 0.0
        %2255 = vmatpush1.msra.mxu0 %v2236
        %2256 = vmatprep.subr.mxu0 0.0
        %2257 = vmatpush1.msra.mxu0 %v2237
        %2258 = vmatprep.subr.mxu0 0.0
        %2259 = vmatpush1.msra.mxu0 %v2238
        %2260 = vmatprep.subr.mxu0 0.0
        %2261 = vmatpush1.msra.mxu0 %v2239
        %2262 = vmatprep.subr.mxu0 0.0
        %2263 = vmatpush1.msra.mxu0 %v2240
        %2264 = vmatprep.subr.mxu0 0.0
        %2265 = vmatpush1.msra.mxu0 %v2241
        %2266 = vmatprep.subr.mxu0 0.0
        %2267 = vmatpush1.msra.mxu0 %v2242
        %2268 = vmatprep.subr.mxu0 0.0
        %2269 = vmatpush1.msra.mxu0 %v2243
        %2270 = vmatprep.subr.mxu0 0.0
        %2271 = vmatpush1.msra.mxu0 %v2244
        %2272 = vmatprep.subr.mxu0 0.0
        %2273 = vmatpush1.msra.mxu0 %v2245
        %2274 = vmatprep.subr.mxu0 0.0
        %2275 = vmatpush1.msra.mxu0 %v2246
        %2276 = vmatprep.subr.mxu0 0.0
        %2277 = vmatpush1.msra.mxu0 %v2247
        %2278 = vmatprep.subr.mxu0 0.0
        %2279 = vmatpush1.msra.mxu0 %v2248
        %2280 = vmatprep.subr.mxu0 0.0
        %2281 = vmatpush1.msra.mxu0 %v2249
        %2282 = vmatprep.subr.mxu0 0.0
        %2283 = vmatpush1.msra.mxu0 0.0
        %2284 = vmatprep.subr.mxu0 0.0
        %2285 = vmatpush1.msra.mxu0 0.0
        %2286 = vmatprep.subr.mxu0 0.0
        %2287 = vmatpush1.msra.mxu0 0.0
        %2288 = vmatprep.subr.mxu0 0.0
        %2289 = vmatpush1.msra.mxu0 0.0
        %2290 = vmatprep.subr.mxu0 0.0
        %2291 = vmatpush1.msra.mxu0 0.0
        %2292 = vmatprep.subr.mxu0 0.0
        %2293 = vmatpush1.msra.mxu0 0.0
        %2294 = vmatprep.subr.mxu0 0.0
        %2295 = vmatpush1.msra.mxu0 0.0
        %2296 = vmatprep.subr.mxu0 0.0
        %2297 = vmatpush1.msra.mxu0 0.0
        %2298 = vmatprep.subr.mxu0 0.0
        %2299 = vmatpush1.msra.mxu0 0.0
        %2300 = vmatprep.subr.mxu0 0.0
        %2301 = vmatpush1.msra.mxu0 0.0
        %2302 = vmatprep.subr.mxu0 0.0
        %2303 = vmatpush1.msra.mxu0 0.0
        %2304 = vmatprep.subr.mxu0 0.0
        %2305 = vmatpush1.msra.mxu0 0.0
        %2306 = vmatprep.subr.mxu0 0.0
        %2307 = vmatpush1.msra.mxu0 0.0
        %2308 = vmatprep.subr.mxu0 0.0
        %2309 = vmatpush1.msra.mxu0 0.0
        %2310 = vmatprep.subr.mxu0 0.0
        %2311 = vmatpush1.msra.mxu0 0.0
        %2312 = vmatprep.subr.mxu0 0.0
        %2313 = vmatpush1.msra.mxu0 0.0
        %2314 = vmatprep.mubr.f32.mxu0 0.0
        %2315 = vmatmul.mubr.f32.gmra.mrb[0].mxu0 %v2202
        %v2316 = vpop.f32.mrb[0].mxu0
        %v2317 = vadd.f32 0.0, %v2316
        %v2318 = vpop.f32.mrb[0].mxu0
        %2319 = vmatprep.mubr.f32.mxu0 0.0
        %2320 = vmatmul.mubr.f32.gmra.mrb[0].mxu0 %v2203
        %v2321 = vpop.f32.mrb[0].mxu0
        %v2322 = vadd.f32 0.0, %v2321
        %v2323 = vpop.f32.mrb[0].mxu0
        %2324 = vmatprep.mubr.f32.mxu0 0.0
        %2325 = vmatmul.mubr.f32.gmra.mrb[0].mxu0 %v2204
        %v2326 = vpop.f32.mrb[0].mxu0
        %v2327 = vadd.f32 0.0, %v2326
        %v2328 = vpop.f32.mrb[0].mxu0
        %2329 = vmatprep.mubr.f32.mxu0 0.0
        %2330 = vmatmul.mubr.f32.gmra.mrb[0].mxu0 %v2205
        %v2331 = vpop.f32.mrb[0].mxu0
        %v2332 = vadd.f32 0.0, %v2331
        %v2333 = vpop.f32.mrb[0].mxu0
        %2334 = vmatprep.mubr.f32.mxu0 0.0
        %2335 = vmatmul.mubr.f32.gmra.mrb[0].mxu0 %v2206
        %v2336 = vpop.f32.mrb[0].mxu0
        %v2337 = vadd.f32 0.0, %v2336
        %v2338 = vpop.f32.mrb[0].mxu0
        %2339 = vmatprep.mubr.f32.mxu0 0.0
        %2340 = vmatmul.mubr.f32.gmra.mrb[0].mxu0 %v2207
        %v2341 = vpop.f32.mrb[0].mxu0
        %v2342 = vadd.f32 0.0, %v2341
        %v2343 = vpop.f32.mrb[0].mxu0
        %2344 = vmatprep.mubr.f32.mxu0 0.0
        %2345 = vmatmul.mubr.f32.gmra.mrb[0].mxu0 %v2208
        %v2346 = vpop.f32.mrb[0].mxu0
        %v2347 = vadd.f32 0.0, %v2346
        %v2348 = vpop.f32.mrb[0].mxu0
        %2349 = vmatprep.mubr.f32.mxu0 0.0
        %2350 = vmatmul.mubr.f32.gmra.mrb[0].mxu0 %v2209
        %v2351 = vpop.f32.mrb[0].mxu0
        %v2352 = vadd.f32 0.0, %v2351
        %v2353 = vpop.f32.mrb[0].mxu0
        %2354 = vmatprep.mubr.f32.mxu0 0.0
        %2355 = vmatmul.mubr.f32.gmra.mrb[0].mxu0 %v2210
        %v2356 = vpop.f32.mrb[0].mxu0
        %v2357 = vadd.f32 0.0, %v2356
        %v2358 = vpop.f32.mrb[0].mxu0
        %2359 = vmatprep.mubr.f32.mxu0 0.0
        %2360 = vmatmul.mubr.f32.gmra.mrb[0].mxu0 %v2211
        %v2361 = vpop.f32.mrb[0].mxu0
        %v2362 = vadd.f32 0.0, %v2361
        %v2363 = vpop.f32.mrb[0].mxu0
        %2364 = vmatprep.mubr.f32.mxu0 0.0
        %2365 = vmatmul.mubr.f32.gmra.mrb[0].mxu0 %v2212
        %v2366 = vpop.f32.mrb[0].mxu0
        %v2367 = vadd.f32 0.0, %v2366
        %v2368 = vpop.f32.mrb[0].mxu0
        %2369 = vmatprep.mubr.f32.mxu0 0.0
        %2370 = vmatmul.mubr.f32.gmra.mrb[0].mxu0 %v2213
        %v2371 = vpop.f32.mrb[0].mxu0
        %v2372 = vadd.f32 0.0, %v2371
        %v2373 = vpop.f32.mrb[0].mxu0
        %2374 = vmatprep.mubr.f32.mxu0 0.0
        %2375 = vmatmul.mubr.f32.gmra.mrb[0].mxu0 %v2214
        %v2376 = vpop.f32.mrb[0].mxu0
        %v2377 = vadd.f32 0.0, %v2376
        %v2378 = vpop.f32.mrb[0].mxu0
        %2379 = vmatprep.mubr.f32.mxu0 0.0
        %2380 = vmatmul.mubr.f32.gmra.mrb[0].mxu0 %v2215
        %v2381 = vpop.f32.mrb[0].mxu0
        %v2382 = vadd.f32 0.0, %v2381
        %v2383 = vpop.f32.mrb[0].mxu0
        %2384 = vmatprep.mubr.f32.mxu0 0.0
        %2385 = vmatmul.mubr.f32.gmra.mrb[0].mxu0 %v2216
        %v2386 = vpop.f32.mrb[0].mxu0
        %v2387 = vadd.f32 0.0, %v2386
        %v2388 = vpop.f32.mrb[0].mxu0
        %2389 = vmatprep.mubr.f32.mxu0 0.0
        %2390 = vmatmul.mubr.f32.gmra.mrb[0].mxu0 %v2217
        %v2391 = vpop.f32.mrb[0].mxu0
        %v2392 = vadd.f32 0.0, %v2391
        %v2393 = vpop.f32.mrb[0].mxu0
        %2394 = vmatprep.mubr.f32.mxu0 0.0
        %2395 = vmatmul.mubr.f32.gmra.mrb[0].mxu0 %v2218
        %v2396 = vpop.f32.mrb[0].mxu0
        %v2397 = vadd.f32 0.0, %v2396
        %v2398 = vpop.f32.mrb[0].mxu0
        %2399 = vmatprep.mubr.f32.mxu0 0.0
        %2400 = vmatmul.mubr.f32.gmra.mrb[0].mxu0 %v2219
        %v2401 = vpop.f32.mrb[0].mxu0
        %v2402 = vadd.f32 0.0, %v2401
        %v2403 = vpop.f32.mrb[0].mxu0
        %2404 = vmatprep.mubr.f32.mxu0 0.0
        %2405 = vmatmul.mubr.f32.gmra.mrb[0].mxu0 %v2220
        %v2406 = vpop.f32.mrb[0].mxu0
        %v2407 = vadd.f32 0.0, %v2406
        %v2408 = vpop.f32.mrb[0].mxu0
        %2409 = vmatprep.mubr.f32.mxu0 0.0
        %2410 = vmatmul.mubr.f32.gmra.mrb[0].mxu0 %v2221
        %v2411 = vpop.f32.mrb[0].mxu0
        %v2412 = vadd.f32 0.0, %v2411
        %v2413 = vpop.f32.mrb[0].mxu0
        %2414 = vmatprep.mubr.f32.mxu0 0.0
        %2415 = vmatmul.mubr.f32.gmra.mrb[0].mxu0 %v2222
        %v2416 = vpop.f32.mrb[0].mxu0
        %v2417 = vadd.f32 0.0, %v2416
        %v2418 = vpop.f32.mrb[0].mxu0
        %2419 = vmatprep.mubr.f32.mxu0 0.0
        %2420 = vmatmul.mubr.f32.gmra.mrb[0].mxu0 %v2223
        %v2421 = vpop.f32.mrb[0].mxu0
        %v2422 = vadd.f32 0.0, %v2421
        %v2423 = vpop.f32.mrb[0].mxu0
        %2424 = vmatprep.mubr.f32.mxu0 0.0
        %2425 = vmatmul.mubr.f32.gmra.mrb[0].mxu0 %v2224
        %v2426 = vpop.f32.mrb[0].mxu0
        %v2427 = vadd.f32 0.0, %v2426
        %v2428 = vpop.f32.mrb[0].mxu0
        %2429 = vmatprep.mubr.f32.mxu0 0.0
        %2430 = vmatmul.mubr.f32.gmra.mrb[0].mxu0 %v2225
        %v2431 = vpop.f32.mrb[0].mxu0
        %v2432 = vadd.f32 0.0, %v2431
        %v2433 = vpop.f32.mrb[0].mxu0
        %2434 = vmatprep.mubr.f32.mxu0 0.0
        %2435 = vmatmul.mubr.f32.gmra.mrb[0].mxu0 %v2226
        %v2436 = vpop.f32.mrb[0].mxu0
        %v2437 = vadd.f32 0.0, %v2436
        %v2438 = vpop.f32.mrb[0].mxu0
        %2439 = vmatprep.mubr.f32.mxu0 0.0
        %2440 = vmatmul.mubr.f32.gmra.mrb[0].mxu0 %v2227
        %v2441 = vpop.f32.mrb[0].mxu0
        %v2442 = vadd.f32 0.0, %v2441
        %v2443 = vpop.f32.mrb[0].mxu0
        %2444 = vmatprep.mubr.f32.mxu0 0.0
        %2445 = vmatmul.mubr.f32.gmra.mrb[0].mxu0 %v2228
        %v2446 = vpop.f32.mrb[0].mxu0
        %v2447 = vadd.f32 0.0, %v2446
        %v2448 = vpop.f32.mrb[0].mxu0
        %2449 = vmatprep.mubr.f32.mxu0 0.0
        %2450 = vmatmul.mubr.f32.gmra.mrb[0].mxu0 %v2229
        %v2451 = vpop.f32.mrb[0].mxu0
        %v2452 = vadd.f32 0.0, %v2451
        %v2453 = vpop.f32.mrb[0].mxu0
        %2454 = vmatprep.mubr.f32.mxu0 0.0
        %2455 = vmatmul.mubr.f32.gmra.mrb[0].mxu0 %v2230
        %v2456 = vpop.f32.mrb[0].mxu0
        %v2457 = vadd.f32 0.0, %v2456
        %v2458 = vpop.f32.mrb[0].mxu0
        %2459 = vmatprep.mubr.f32.mxu0 0.0
        %2460 = vmatmul.mubr.f32.gmra.mrb[0].mxu0 %v2231
        %v2461 = vpop.f32.mrb[0].mxu0
        %v2462 = vadd.f32 0.0, %v2461
        %v2463 = vpop.f32.mrb[0].mxu0
        %2464 = vmatprep.mubr.f32.mxu0 0.0
        %2465 = vmatmul.mubr.f32.gmra.mrb[0].mxu0 %v2232
        %v2466 = vpop.f32.mrb[0].mxu0
        %v2467 = vadd.f32 0.0, %v2466
        %v2468 = vpop.f32.mrb[0].mxu0
        %2469 = vmatprep.mubr.f32.mxu0 0.0
        %2470 = vmatmul.mubr.f32.gmra.mrb[0].mxu0 %v2233
        %v2471 = vpop.f32.mrb[0].mxu0
        %v2472 = vadd.f32 0.0, %v2471
        %v2473 = vpop.f32.mrb[0].mxu0
        %2474 = vdwg.mxu0
        %v2475 = vadd.f32 %v2169, %v2317
        %v2476 = vadd.f32 %v2170, %v2322
        %v2477 = vadd.f32 %v2171, %v2327
        %v2478 = vadd.f32 %v2172, %v2332
        %v2479 = vadd.f32 %v2173, %v2337
        %v2480 = vadd.f32 %v2174, %v2342
        %v2481 = vadd.f32 %v2175, %v2347
        %v2482 = vadd.f32 %v2176, %v2352
        %v2483 = vadd.f32 %v2177, %v2357
        %v2484 = vadd.f32 %v2178, %v2362
        %v2485 = vadd.f32 %v2179, %v2367
        %v2486 = vadd.f32 %v2180, %v2372
        %v2487 = vadd.f32 %v2181, %v2377
        %v2488 = vadd.f32 %v2182, %v2382
        %v2489 = vadd.f32 %v2183, %v2387
        %v2490 = vadd.f32 %v2184, %v2392
        %v2491 = vadd.f32 %v2185, %v2397
        %v2492 = vadd.f32 %v2186, %v2402
        %v2493 = vadd.f32 %v2187, %v2407
        %v2494 = vadd.f32 %v2188, %v2412
        %v2495 = vadd.f32 %v2189, %v2417
        %v2496 = vadd.f32 %v2190, %v2422
        %v2497 = vadd.f32 %v2191, %v2427
        %v2498 = vadd.f32 %v2192, %v2432
        %v2499 = vadd.f32 %v2193, %v2437
        %v2500 = vadd.f32 %v2194, %v2442
        %v2501 = vadd.f32 %v2195, %v2447
        %v2502 = vadd.f32 %v2196, %v2452
        %v2503 = vadd.f32 %v2197, %v2457
        %v2504 = vadd.f32 %v2198, %v2462
        %v2505 = vadd.f32 %v2199, %v2467
        %v2506 = vadd.f32 %v2200, %v2472
        %v2507 = vld [vmem:[%s2201 + $0x10] sm:$0xff]
        %v2508 = vld [vmem:[%s2201 + $0x18] sm:$0xff]
        %v2509 = vld [vmem:[%s2201 + $0x40] sm:$0xff]
        %v2510 = vld [vmem:[%s2201 + $0x48] sm:$0xff]
        %v2511 = vld [vmem:[%s2201 + $0x70] sm:$0xff]
        %v2512 = vld [vmem:[%s2201 + $0x78] sm:$0xff]
        %v2513 = vld [vmem:[%s2201 + $0xa0] sm:$0xff]
        %v2514 = vld [vmem:[%s2201 + $0xa8] sm:$0xff]
        %v2515 = vld [vmem:[%s2201 + $0xd0] sm:$0xff]
        %v2516 = vld [vmem:[%s2201 + $0xd8] sm:$0xff]
        %v2517 = vld [vmem:[%s2201 + $0x100] sm:$0xff]
        %v2518 = vld [vmem:[%s2201 + $0x108] sm:$0xff]
        %v2519 = vld [vmem:[%s2201 + $0x130] sm:$0xff]
        %v2520 = vld [vmem:[%s2201 + $0x138] sm:$0xff]
        %v2521 = vld [vmem:[%s2201 + $0x160] sm:$0xff]
        %v2522 = vld [vmem:[%s2201 + $0x168] sm:$0xff]
        %v2523 = vld [vmem:[%s2201 + $0x190] sm:$0xff]
        %v2524 = vld [vmem:[%s2201 + $0x198] sm:$0xff]
        %v2525 = vld [vmem:[%s2201 + $0x1c0] sm:$0xff]
        %v2526 = vld [vmem:[%s2201 + $0x1c8] sm:$0xff]
        %v2527 = vld [vmem:[%s2201 + $0x1f0] sm:$0xff]
        %v2528 = vld [vmem:[%s2201 + $0x1f8] sm:$0xff]
        %v2529 = vld [vmem:[%s2201 + $0x220] sm:$0xff]
        %v2530 = vld [vmem:[%s2201 + $0x228] sm:$0xff]
        %v2531 = vld [vmem:[%s2201 + $0x250] sm:$0xff]
        %v2532 = vld [vmem:[%s2201 + $0x258] sm:$0xff]
        %v2533 = vld [vmem:[%s2201 + $0x280] sm:$0xff]
        %v2534 = vld [vmem:[%s2201 + $0x288] sm:$0xff]
        %v2535 = vld [vmem:[%s2201 + $0x2b0] sm:$0xff]
        %v2536 = vld [vmem:[%s2201 + $0x2b8] sm:$0xff]
        %v2537 = vld [vmem:[%s2201 + $0x2e0] sm:$0xff]
        %v2538 = vld [vmem:[%s2201 + $0x2e8] sm:$0xff]
        %v2539 = vld [vmem:[%s207 + $0x380] sm:$0xff]
        %v2540 = vld [vmem:[%s207 + $0x388] sm:$0xff]
        %v2541 = vld [vmem:[%s207 + $0x390] sm:$0xff]
        %v2542 = vld [vmem:[%s207 + $0x398] sm:$0xff]
        %v2543 = vld [vmem:[%s207 + $0x3a0] sm:$0xff]
        %v2544 = vld [vmem:[%s207 + $0x3a8] sm:$0xff]
        %v2545 = vld [vmem:[%s207 + $0x3b0] sm:$0xff]
        %v2546 = vld [vmem:[%s207 + $0x3b8] sm:$0xff]
        %v2547 = vld [vmem:[%s207 + $0x3c0] sm:$0xff]
        %v2548 = vld [vmem:[%s207 + $0x3c8] sm:$0xff]
        %v2549 = vld [vmem:[%s207 + $0x3d0] sm:$0xff]
        %v2550 = vld [vmem:[%s207 + $0x3d8] sm:$0xff]
        %v2551 = vld [vmem:[%s207 + $0x3e0] sm:$0xff]
        %v2552 = vld [vmem:[%s207 + $0x3e8] sm:$0xff]
        %v2553 = vld [vmem:[%s207 + $0x3f0] sm:$0xff]
        %v2554 = vld [vmem:[%s207 + $0x3f8] sm:$0xff]
        %2555 = vmatprep.subr.mxu0 0.0
        %2556 = vmatpush1.msra.mxu0 %v2539
        %2557 = vmatprep.subr.mxu0 0.0
        %2558 = vmatpush1.msra.mxu0 %v2540
        %2559 = vmatprep.subr.mxu0 0.0
        %2560 = vmatpush1.msra.mxu0 %v2541
        %2561 = vmatprep.subr.mxu0 0.0
        %2562 = vmatpush1.msra.mxu0 %v2542
        %2563 = vmatprep.subr.mxu0 0.0
        %2564 = vmatpush1.msra.mxu0 %v2543
        %2565 = vmatprep.subr.mxu0 0.0
        %2566 = vmatpush1.msra.mxu0 %v2544
        %2567 = vmatprep.subr.mxu0 0.0
        %2568 = vmatpush1.msra.mxu0 %v2545
        %2569 = vmatprep.subr.mxu0 0.0
        %2570 = vmatpush1.msra.mxu0 %v2546
        %2571 = vmatprep.subr.mxu0 0.0
        %2572 = vmatpush1.msra.mxu0 %v2547
        %2573 = vmatprep.subr.mxu0 0.0
        %2574 = vmatpush1.msra.mxu0 %v2548
        %2575 = vmatprep.subr.mxu0 0.0
        %2576 = vmatpush1.msra.mxu0 %v2549
        %2577 = vmatprep.subr.mxu0 0.0
        %2578 = vmatpush1.msra.mxu0 %v2550
        %2579 = vmatprep.subr.mxu0 0.0
        %2580 = vmatpush1.msra.mxu0 %v2551
        %2581 = vmatprep.subr.mxu0 0.0
        %2582 = vmatpush1.msra.mxu0 %v2552
        %2583 = vmatprep.subr.mxu0 0.0
        %2584 = vmatpush1.msra.mxu0 %v2553
        %2585 = vmatprep.subr.mxu0 0.0
        %2586 = vmatpush1.msra.mxu0 %v2554
        %2587 = vmatprep.subr.mxu0 0.0
        %2588 = vmatpush1.msra.mxu0 0.0
        %2589 = vmatprep.subr.mxu0 0.0
        %2590 = vmatpush1.msra.mxu0 0.0
        %2591 = vmatprep.subr.mxu0 0.0
        %2592 = vmatpush1.msra.mxu0 0.0
        %2593 = vmatprep.subr.mxu0 0.0
        %2594 = vmatpush1.msra.mxu0 0.0
        %2595 = vmatprep.subr.mxu0 0.0
        %2596 = vmatpush1.msra.mxu0 0.0
        %2597 = vmatprep.subr.mxu0 0.0
        %2598 = vmatpush1.msra.mxu0 0.0
        %2599 = vmatprep.subr.mxu0 0.0
        %2600 = vmatpush1.msra.mxu0 0.0
        %2601 = vmatprep.subr.mxu0 0.0
        %2602 = vmatpush1.msra.mxu0 0.0
        %2603 = vmatprep.subr.mxu0 0.0
        %2604 = vmatpush1.msra.mxu0 0.0
        %2605 = vmatprep.subr.mxu0 0.0
        %2606 = vmatpush1.msra.mxu0 0.0
        %2607 = vmatprep.subr.mxu0 0.0
        %2608 = vmatpush1.msra.mxu0 0.0
        %2609 = vmatprep.subr.mxu0 0.0
        %2610 = vmatpush1.msra.mxu0 0.0
        %2611 = vmatprep.subr.mxu0 0.0
        %2612 = vmatpush1.msra.mxu0 0.0
        %2613 = vmatprep.subr.mxu0 0.0
        %2614 = vmatpush1.msra.mxu0 0.0
        %2615 = vmatprep.subr.mxu0 0.0
        %2616 = vmatpush1.msra.mxu0 0.0
        %2617 = vmatprep.subr.mxu0 0.0
        %2618 = vmatpush1.msra.mxu0 0.0
        %2619 = vmatprep.mubr.f32.mxu0 0.0
        %2620 = vmatmul.mubr.f32.gmra.mrb[0].mxu0 %v2507
        %v2621 = vpop.f32.mrb[0].mxu0
        %v2622 = vadd.f32 0.0, %v2621
        %v2623 = vpop.f32.mrb[0].mxu0
        %2624 = vmatprep.mubr.f32.mxu0 0.0
        %2625 = vmatmul.mubr.f32.gmra.mrb[0].mxu0 %v2508
        %v2626 = vpop.f32.mrb[0].mxu0
        %v2627 = vadd.f32 0.0, %v2626
        %v2628 = vpop.f32.mrb[0].mxu0
        %2629 = vmatprep.mubr.f32.mxu0 0.0
        %2630 = vmatmul.mubr.f32.gmra.mrb[0].mxu0 %v2509
        %v2631 = vpop.f32.mrb[0].mxu0
        %v2632 = vadd.f32 0.0, %v2631
        %v2633 = vpop.f32.mrb[0].mxu0
        %2634 = vmatprep.mubr.f32.mxu0 0.0
        %2635 = vmatmul.mubr.f32.gmra.mrb[0].mxu0 %v2510
        %v2636 = vpop.f32.mrb[0].mxu0
        %v2637 = vadd.f32 0.0, %v2636
        %v2638 = vpop.f32.mrb[0].mxu0
        %2639 = vmatprep.mubr.f32.mxu0 0.0
        %2640 = vmatmul.mubr.f32.gmra.mrb[0].mxu0 %v2511
        %v2641 = vpop.f32.mrb[0].mxu0
        %v2642 = vadd.f32 0.0, %v2641
        %v2643 = vpop.f32.mrb[0].mxu0
        %2644 = vmatprep.mubr.f32.mxu0 0.0
        %2645 = vmatmul.mubr.f32.gmra.mrb[0].mxu0 %v2512
        %v2646 = vpop.f32.mrb[0].mxu0
        %v2647 = vadd.f32 0.0, %v2646
        %v2648 = vpop.f32.mrb[0].mxu0
        %2649 = vmatprep.mubr.f32.mxu0 0.0
        %2650 = vmatmul.mubr.f32.gmra.mrb[0].mxu0 %v2513
        %v2651 = vpop.f32.mrb[0].mxu0
        %v2652 = vadd.f32 0.0, %v2651
        %v2653 = vpop.f32.mrb[0].mxu0
        %2654 = vmatprep.mubr.f32.mxu0 0.0
        %2655 = vmatmul.mubr.f32.gmra.mrb[0].mxu0 %v2514
        %v2656 = vpop.f32.mrb[0].mxu0
        %v2657 = vadd.f32 0.0, %v2656
        %v2658 = vpop.f32.mrb[0].mxu0
        %2659 = vmatprep.mubr.f32.mxu0 0.0
        %2660 = vmatmul.mubr.f32.gmra.mrb[0].mxu0 %v2515
        %v2661 = vpop.f32.mrb[0].mxu0
        %v2662 = vadd.f32 0.0, %v2661
        %v2663 = vpop.f32.mrb[0].mxu0
        %2664 = vmatprep.mubr.f32.mxu0 0.0
        %2665 = vmatmul.mubr.f32.gmra.mrb[0].mxu0 %v2516
        %v2666 = vpop.f32.mrb[0].mxu0
        %v2667 = vadd.f32 0.0, %v2666
        %v2668 = vpop.f32.mrb[0].mxu0
        %2669 = vmatprep.mubr.f32.mxu0 0.0
        %2670 = vmatmul.mubr.f32.gmra.mrb[0].mxu0 %v2517
        %v2671 = vpop.f32.mrb[0].mxu0
        %v2672 = vadd.f32 0.0, %v2671
        %v2673 = vpop.f32.mrb[0].mxu0
        %2674 = vmatprep.mubr.f32.mxu0 0.0
        %2675 = vmatmul.mubr.f32.gmra.mrb[0].mxu0 %v2518
        %v2676 = vpop.f32.mrb[0].mxu0
        %v2677 = vadd.f32 0.0, %v2676
        %v2678 = vpop.f32.mrb[0].mxu0
        %2679 = vmatprep.mubr.f32.mxu0 0.0
        %2680 = vmatmul.mubr.f32.gmra.mrb[0].mxu0 %v2519
        %v2681 = vpop.f32.mrb[0].mxu0
        %v2682 = vadd.f32 0.0, %v2681
        %v2683 = vpop.f32.mrb[0].mxu0
        %2684 = vmatprep.mubr.f32.mxu0 0.0
        %2685 = vmatmul.mubr.f32.gmra.mrb[0].mxu0 %v2520
        %v2686 = vpop.f32.mrb[0].mxu0
        %v2687 = vadd.f32 0.0, %v2686
        %v2688 = vpop.f32.mrb[0].mxu0
        %2689 = vmatprep.mubr.f32.mxu0 0.0
        %2690 = vmatmul.mubr.f32.gmra.mrb[0].mxu0 %v2521
        %v2691 = vpop.f32.mrb[0].mxu0
        %v2692 = vadd.f32 0.0, %v2691
        %v2693 = vpop.f32.mrb[0].mxu0
        %2694 = vmatprep.mubr.f32.mxu0 0.0
        %2695 = vmatmul.mubr.f32.gmra.mrb[0].mxu0 %v2522
        %v2696 = vpop.f32.mrb[0].mxu0
        %v2697 = vadd.f32 0.0, %v2696
        %v2698 = vpop.f32.mrb[0].mxu0
        %2699 = vmatprep.mubr.f32.mxu0 0.0
        %2700 = vmatmul.mubr.f32.gmra.mrb[0].mxu0 %v2523
        %v2701 = vpop.f32.mrb[0].mxu0
        %v2702 = vadd.f32 0.0, %v2701
        %v2703 = vpop.f32.mrb[0].mxu0
        %2704 = vmatprep.mubr.f32.mxu0 0.0
        %2705 = vmatmul.mubr.f32.gmra.mrb[0].mxu0 %v2524
        %v2706 = vpop.f32.mrb[0].mxu0
        %v2707 = vadd.f32 0.0, %v2706
        %v2708 = vpop.f32.mrb[0].mxu0
        %2709 = vmatprep.mubr.f32.mxu0 0.0
        %2710 = vmatmul.mubr.f32.gmra.mrb[0].mxu0 %v2525
        %v2711 = vpop.f32.mrb[0].mxu0
        %v2712 = vadd.f32 0.0, %v2711
        %v2713 = vpop.f32.mrb[0].mxu0
        %2714 = vmatprep.mubr.f32.mxu0 0.0
        %2715 = vmatmul.mubr.f32.gmra.mrb[0].mxu0 %v2526
        %v2716 = vpop.f32.mrb[0].mxu0
        %v2717 = vadd.f32 0.0, %v2716
        %v2718 = vpop.f32.mrb[0].mxu0
        %2719 = vmatprep.mubr.f32.mxu0 0.0
        %2720 = vmatmul.mubr.f32.gmra.mrb[0].mxu0 %v2527
        %v2721 = vpop.f32.mrb[0].mxu0
        %v2722 = vadd.f32 0.0, %v2721
        %v2723 = vpop.f32.mrb[0].mxu0
        %2724 = vmatprep.mubr.f32.mxu0 0.0
        %2725 = vmatmul.mubr.f32.gmra.mrb[0].mxu0 %v2528
        %v2726 = vpop.f32.mrb[0].mxu0
        %v2727 = vadd.f32 0.0, %v2726
        %v2728 = vpop.f32.mrb[0].mxu0
        %2729 = vmatprep.mubr.f32.mxu0 0.0
        %2730 = vmatmul.mubr.f32.gmra.mrb[0].mxu0 %v2529
        %v2731 = vpop.f32.mrb[0].mxu0
        %v2732 = vadd.f32 0.0, %v2731
        %v2733 = vpop.f32.mrb[0].mxu0
        %2734 = vmatprep.mubr.f32.mxu0 0.0
        %2735 = vmatmul.mubr.f32.gmra.mrb[0].mxu0 %v2530
        %v2736 = vpop.f32.mrb[0].mxu0
        %v2737 = vadd.f32 0.0, %v2736
        %v2738 = vpop.f32.mrb[0].mxu0
        %2739 = vmatprep.mubr.f32.mxu0 0.0
        %2740 = vmatmul.mubr.f32.gmra.mrb[0].mxu0 %v2531
        %v2741 = vpop.f32.mrb[0].mxu0
        %v2742 = vadd.f32 0.0, %v2741
        %v2743 = vpop.f32.mrb[0].mxu0
        %2744 = vmatprep.mubr.f32.mxu0 0.0
        %2745 = vmatmul.mubr.f32.gmra.mrb[0].mxu0 %v2532
        %v2746 = vpop.f32.mrb[0].mxu0
        %v2747 = vadd.f32 0.0, %v2746
        %v2748 = vpop.f32.mrb[0].mxu0
        %2749 = vmatprep.mubr.f32.mxu0 0.0
        %2750 = vmatmul.mubr.f32.gmra.mrb[0].mxu0 %v2533
        %v2751 = vpop.f32.mrb[0].mxu0
        %v2752 = vadd.f32 0.0, %v2751
        %v2753 = vpop.f32.mrb[0].mxu0
        %2754 = vmatprep.mubr.f32.mxu0 0.0
        %2755 = vmatmul.mubr.f32.gmra.mrb[0].mxu0 %v2534
        %v2756 = vpop.f32.mrb[0].mxu0
        %v2757 = vadd.f32 0.0, %v2756
        %v2758 = vpop.f32.mrb[0].mxu0
        %2759 = vmatprep.mubr.f32.mxu0 0.0
        %2760 = vmatmul.mubr.f32.gmra.mrb[0].mxu0 %v2535
        %v2761 = vpop.f32.mrb[0].mxu0
        %v2762 = vadd.f32 0.0, %v2761
        %v2763 = vpop.f32.mrb[0].mxu0
        %2764 = vmatprep.mubr.f32.mxu0 0.0
        %2765 = vmatmul.mubr.f32.gmra.mrb[0].mxu0 %v2536
        %v2766 = vpop.f32.mrb[0].mxu0
        %v2767 = vadd.f32 0.0, %v2766
        %v2768 = vpop.f32.mrb[0].mxu0
        %2769 = vmatprep.mubr.f32.mxu0 0.0
        %2770 = vmatmul.mubr.f32.gmra.mrb[0].mxu0 %v2537
        %v2771 = vpop.f32.mrb[0].mxu0
        %v2772 = vadd.f32 0.0, %v2771
        %v2773 = vpop.f32.mrb[0].mxu0
        %2774 = vmatprep.mubr.f32.mxu0 0.0
        %2775 = vmatmul.mubr.f32.gmra.mrb[0].mxu0 %v2538
        %v2776 = vpop.f32.mrb[0].mxu0
        %v2777 = vadd.f32 0.0, %v2776
        %v2778 = vpop.f32.mrb[0].mxu0
        %2779 = vdwg.mxu0
        %v2780 = vadd.f32 %v2475, %v2622
        %v2781 = vadd.f32 %v2476, %v2627
        %v2782 = vadd.f32 %v2477, %v2632
        %v2783 = vadd.f32 %v2478, %v2637
        %v2784 = vadd.f32 %v2479, %v2642
        %v2785 = vadd.f32 %v2480, %v2647
        %v2786 = vadd.f32 %v2481, %v2652
        %v2787 = vadd.f32 %v2482, %v2657
        %v2788 = vadd.f32 %v2483, %v2662
        %v2789 = vadd.f32 %v2484, %v2667
        %v2790 = vadd.f32 %v2485, %v2672
        %v2791 = vadd.f32 %v2486, %v2677
        %v2792 = vadd.f32 %v2487, %v2682
        %v2793 = vadd.f32 %v2488, %v2687
        %v2794 = vadd.f32 %v2489, %v2692
        %v2795 = vadd.f32 %v2490, %v2697
        %v2796 = vadd.f32 %v2491, %v2702
        %v2797 = vadd.f32 %v2492, %v2707
        %v2798 = vadd.f32 %v2493, %v2712
        %v2799 = vadd.f32 %v2494, %v2717
        %v2800 = vadd.f32 %v2495, %v2722
        %v2801 = vadd.f32 %v2496, %v2727
        %v2802 = vadd.f32 %v2497, %v2732
        %v2803 = vadd.f32 %v2498, %v2737
        %v2804 = vadd.f32 %v2499, %v2742
        %v2805 = vadd.f32 %v2500, %v2747
        %v2806 = vadd.f32 %v2501, %v2752
        %v2807 = vadd.f32 %v2502, %v2757
        %v2808 = vadd.f32 %v2503, %v2762
        %v2809 = vadd.f32 %v2504, %v2767
        %v2810 = vadd.f32 %v2505, %v2772
        %v2811 = vadd.f32 %v2506, %v2777
        %v2812 = vld [vmem:[%s2201 + $0x11] sm:$0xff]
        %v2813 = vld [vmem:[%s2201 + $0x19] sm:$0xff]
        %v2814 = vld [vmem:[%s2201 + $0x41] sm:$0xff]
        %v2815 = vld [vmem:[%s2201 + $0x49] sm:$0xff]
        %v2816 = vld [vmem:[%s2201 + $0x71] sm:$0xff]
        %v2817 = vld [vmem:[%s2201 + $0x79] sm:$0xff]
        %v2818 = vld [vmem:[%s2201 + $0xa1] sm:$0xff]
        %v2819 = vld [vmem:[%s2201 + $0xa9] sm:$0xff]
        %v2820 = vld [vmem:[%s2201 + $0xd1] sm:$0xff]
        %v2821 = vld [vmem:[%s2201 + $0xd9] sm:$0xff]
        %v2822 = vld [vmem:[%s2201 + $0x101] sm:$0xff]
        %v2823 = vld [vmem:[%s2201 + $0x109] sm:$0xff]
        %v2824 = vld [vmem:[%s2201 + $0x131] sm:$0xff]
        %v2825 = vld [vmem:[%s2201 + $0x139] sm:$0xff]
        %v2826 = vld [vmem:[%s2201 + $0x161] sm:$0xff]
        %v2827 = vld [vmem:[%s2201 + $0x169] sm:$0xff]
        %v2828 = vld [vmem:[%s2201 + $0x191] sm:$0xff]
        %v2829 = vld [vmem:[%s2201 + $0x199] sm:$0xff]
        %v2830 = vld [vmem:[%s2201 + $0x1c1] sm:$0xff]
        %v2831 = vld [vmem:[%s2201 + $0x1c9] sm:$0xff]
        %v2832 = vld [vmem:[%s2201 + $0x1f1] sm:$0xff]
        %v2833 = vld [vmem:[%s2201 + $0x1f9] sm:$0xff]
        %v2834 = vld [vmem:[%s2201 + $0x221] sm:$0xff]
        %v2835 = vld [vmem:[%s2201 + $0x229] sm:$0xff]
        %v2836 = vld [vmem:[%s2201 + $0x251] sm:$0xff]
        %v2837 = vld [vmem:[%s2201 + $0x259] sm:$0xff]
        %v2838 = vld [vmem:[%s2201 + $0x281] sm:$0xff]
        %v2839 = vld [vmem:[%s2201 + $0x289] sm:$0xff]
        %v2840 = vld [vmem:[%s2201 + $0x2b1] sm:$0xff]
        %v2841 = vld [vmem:[%s2201 + $0x2b9] sm:$0xff]
        %v2842 = vld [vmem:[%s2201 + $0x2e1] sm:$0xff]
        %v2843 = vld [vmem:[%s2201 + $0x2e9] sm:$0xff]
        %v2844 = vld [vmem:[%s207 + $0x400] sm:$0xff]
        %v2845 = vld [vmem:[%s207 + $0x408] sm:$0xff]
        %v2846 = vld [vmem:[%s207 + $0x410] sm:$0xff]
        %v2847 = vld [vmem:[%s207 + $0x418] sm:$0xff]
        %v2848 = vld [vmem:[%s207 + $0x420] sm:$0xff]
        %v2849 = vld [vmem:[%s207 + $0x428] sm:$0xff]
        %v2850 = vld [vmem:[%s207 + $0x430] sm:$0xff]
        %v2851 = vld [vmem:[%s207 + $0x438] sm:$0xff]
        %v2852 = vld [vmem:[%s207 + $0x440] sm:$0xff]
        %v2853 = vld [vmem:[%s207 + $0x448] sm:$0xff]
        %v2854 = vld [vmem:[%s207 + $0x450] sm:$0xff]
        %v2855 = vld [vmem:[%s207 + $0x458] sm:$0xff]
        %v2856 = vld [vmem:[%s207 + $0x460] sm:$0xff]
        %v2857 = vld [vmem:[%s207 + $0x468] sm:$0xff]
        %v2858 = vld [vmem:[%s207 + $0x470] sm:$0xff]
        %v2859 = vld [vmem:[%s207 + $0x478] sm:$0xff]
        %2860 = vmatprep.subr.mxu0 0.0
        %2861 = vmatpush1.msra.mxu0 %v2844
        %2862 = vmatprep.subr.mxu0 0.0
        %2863 = vmatpush1.msra.mxu0 %v2845
        %2864 = vmatprep.subr.mxu0 0.0
        %2865 = vmatpush1.msra.mxu0 %v2846
        %2866 = vmatprep.subr.mxu0 0.0
        %2867 = vmatpush1.msra.mxu0 %v2847
        %2868 = vmatprep.subr.mxu0 0.0
        %2869 = vmatpush1.msra.mxu0 %v2848
        %2870 = vmatprep.subr.mxu0 0.0
        %2871 = vmatpush1.msra.mxu0 %v2849
        %2872 = vmatprep.subr.mxu0 0.0
        %2873 = vmatpush1.msra.mxu0 %v2850
        %2874 = vmatprep.subr.mxu0 0.0
        %2875 = vmatpush1.msra.mxu0 %v2851
        %2876 = vmatprep.subr.mxu0 0.0
        %2877 = vmatpush1.msra.mxu0 %v2852
        %2878 = vmatprep.subr.mxu0 0.0
        %2879 = vmatpush1.msra.mxu0 %v2853
        %2880 = vmatprep.subr.mxu0 0.0
        %2881 = vmatpush1.msra.mxu0 %v2854
        %2882 = vmatprep.subr.mxu0 0.0
        %2883 = vmatpush1.msra.mxu0 %v2855
        %2884 = vmatprep.subr.mxu0 0.0
        %2885 = vmatpush1.msra.mxu0 %v2856
        %2886 = vmatprep.subr.mxu0 0.0
        %2887 = vmatpush1.msra.mxu0 %v2857
        %2888 = vmatprep.subr.mxu0 0.0
        %2889 = vmatpush1.msra.mxu0 %v2858
        %2890 = vmatprep.subr.mxu0 0.0
        %2891 = vmatpush1.msra.mxu0 %v2859
        %2892 = vmatprep.subr.mxu0 0.0
        %2893 = vmatpush1.msra.mxu0 0.0
        %2894 = vmatprep.subr.mxu0 0.0
        %2895 = vmatpush1.msra.mxu0 0.0
        %2896 = vmatprep.subr.mxu0 0.0
        %2897 = vmatpush1.msra.mxu0 0.0
        %2898 = vmatprep.subr.mxu0 0.0
        %2899 = vmatpush1.msra.mxu0 0.0
        %2900 = vmatprep.subr.mxu0 0.0
        %2901 = vmatpush1.msra.mxu0 0.0
        %2902 = vmatprep.subr.mxu0 0.0
        %2903 = vmatpush1.msra.mxu0 0.0
        %2904 = vmatprep.subr.mxu0 0.0
        %2905 = vmatpush1.msra.mxu0 0.0
        %2906 = vmatprep.subr.mxu0 0.0
        %2907 = vmatpush1.msra.mxu0 0.0
        %2908 = vmatprep.subr.mxu0 0.0
        %2909 = vmatpush1.msra.mxu0 0.0
        %2910 = vmatprep.subr.mxu0 0.0
        %2911 = vmatpush1.msra.mxu0 0.0
        %2912 = vmatprep.subr.mxu0 0.0
        %2913 = vmatpush1.msra.mxu0 0.0
        %2914 = vmatprep.subr.mxu0 0.0
        %2915 = vmatpush1.msra.mxu0 0.0
        %2916 = vmatprep.subr.mxu0 0.0
        %2917 = vmatpush1.msra.mxu0 0.0
        %2918 = vmatprep.subr.mxu0 0.0
        %2919 = vmatpush1.msra.mxu0 0.0
        %2920 = vmatprep.subr.mxu0 0.0
        %2921 = vmatpush1.msra.mxu0 0.0
        %2922 = vmatprep.subr.mxu0 0.0
        %2923 = vmatpush1.msra.mxu0 0.0
        %2924 = vmatprep.mubr.f32.mxu0 0.0
        %2925 = vmatmul.mubr.f32.gmra.mrb[0].mxu0 %v2812
        %v2926 = vpop.f32.mrb[0].mxu0
        %v2927 = vadd.f32 0.0, %v2926
        %v2928 = vpop.f32.mrb[0].mxu0
        %2929 = vmatprep.mubr.f32.mxu0 0.0
        %2930 = vmatmul.mubr.f32.gmra.mrb[0].mxu0 %v2813
        %v2931 = vpop.f32.mrb[0].mxu0
        %v2932 = vadd.f32 0.0, %v2931
        %v2933 = vpop.f32.mrb[0].mxu0
        %2934 = vmatprep.mubr.f32.mxu0 0.0
        %2935 = vmatmul.mubr.f32.gmra.mrb[0].mxu0 %v2814
        %v2936 = vpop.f32.mrb[0].mxu0
        %v2937 = vadd.f32 0.0, %v2936
        %v2938 = vpop.f32.mrb[0].mxu0
        %2939 = vmatprep.mubr.f32.mxu0 0.0
        %2940 = vmatmul.mubr.f32.gmra.mrb[0].mxu0 %v2815
        %v2941 = vpop.f32.mrb[0].mxu0
        %v2942 = vadd.f32 0.0, %v2941
        %v2943 = vpop.f32.mrb[0].mxu0
        %2944 = vmatprep.mubr.f32.mxu0 0.0
        %2945 = vmatmul.mubr.f32.gmra.mrb[0].mxu0 %v2816
        %v2946 = vpop.f32.mrb[0].mxu0
        %v2947 = vadd.f32 0.0, %v2946
        %v2948 = vpop.f32.mrb[0].mxu0
        %2949 = vmatprep.mubr.f32.mxu0 0.0
        %2950 = vmatmul.mubr.f32.gmra.mrb[0].mxu0 %v2817
        %v2951 = vpop.f32.mrb[0].mxu0
        %v2952 = vadd.f32 0.0, %v2951
        %v2953 = vpop.f32.mrb[0].mxu0
        %2954 = vmatprep.mubr.f32.mxu0 0.0
        %2955 = vmatmul.mubr.f32.gmra.mrb[0].mxu0 %v2818
        %v2956 = vpop.f32.mrb[0].mxu0
        %v2957 = vadd.f32 0.0, %v2956
        %v2958 = vpop.f32.mrb[0].mxu0
        %2959 = vmatprep.mubr.f32.mxu0 0.0
        %2960 = vmatmul.mubr.f32.gmra.mrb[0].mxu0 %v2819
        %v2961 = vpop.f32.mrb[0].mxu0
        %v2962 = vadd.f32 0.0, %v2961
        %v2963 = vpop.f32.mrb[0].mxu0
        %2964 = vmatprep.mubr.f32.mxu0 0.0
        %2965 = vmatmul.mubr.f32.gmra.mrb[0].mxu0 %v2820
        %v2966 = vpop.f32.mrb[0].mxu0
        %v2967 = vadd.f32 0.0, %v2966
        %v2968 = vpop.f32.mrb[0].mxu0
        %2969 = vmatprep.mubr.f32.mxu0 0.0
        %2970 = vmatmul.mubr.f32.gmra.mrb[0].mxu0 %v2821
        %v2971 = vpop.f32.mrb[0].mxu0
        %v2972 = vadd.f32 0.0, %v2971
        %v2973 = vpop.f32.mrb[0].mxu0
        %2974 = vmatprep.mubr.f32.mxu0 0.0
        %2975 = vmatmul.mubr.f32.gmra.mrb[0].mxu0 %v2822
        %v2976 = vpop.f32.mrb[0].mxu0
        %v2977 = vadd.f32 0.0, %v2976
        %v2978 = vpop.f32.mrb[0].mxu0
        %2979 = vmatprep.mubr.f32.mxu0 0.0
        %2980 = vmatmul.mubr.f32.gmra.mrb[0].mxu0 %v2823
        %v2981 = vpop.f32.mrb[0].mxu0
        %v2982 = vadd.f32 0.0, %v2981
        %v2983 = vpop.f32.mrb[0].mxu0
        %2984 = vmatprep.mubr.f32.mxu0 0.0
        %2985 = vmatmul.mubr.f32.gmra.mrb[0].mxu0 %v2824
        %v2986 = vpop.f32.mrb[0].mxu0
        %v2987 = vadd.f32 0.0, %v2986
        %v2988 = vpop.f32.mrb[0].mxu0
        %2989 = vmatprep.mubr.f32.mxu0 0.0
        %2990 = vmatmul.mubr.f32.gmra.mrb[0].mxu0 %v2825
        %v2991 = vpop.f32.mrb[0].mxu0
        %v2992 = vadd.f32 0.0, %v2991
        %v2993 = vpop.f32.mrb[0].mxu0
        %2994 = vmatprep.mubr.f32.mxu0 0.0
        %2995 = vmatmul.mubr.f32.gmra.mrb[0].mxu0 %v2826
        %v2996 = vpop.f32.mrb[0].mxu0
        %v2997 = vadd.f32 0.0, %v2996
        %v2998 = vpop.f32.mrb[0].mxu0
        %2999 = vmatprep.mubr.f32.mxu0 0.0
        %3000 = vmatmul.mubr.f32.gmra.mrb[0].mxu0 %v2827
        %v3001 = vpop.f32.mrb[0].mxu0
        %v3002 = vadd.f32 0.0, %v3001
        %v3003 = vpop.f32.mrb[0].mxu0
        %3004 = vmatprep.mubr.f32.mxu0 0.0
        %3005 = vmatmul.mubr.f32.gmra.mrb[0].mxu0 %v2828
        %v3006 = vpop.f32.mrb[0].mxu0
        %v3007 = vadd.f32 0.0, %v3006
        %v3008 = vpop.f32.mrb[0].mxu0
        %3009 = vmatprep.mubr.f32.mxu0 0.0
        %3010 = vmatmul.mubr.f32.gmra.mrb[0].mxu0 %v2829
        %v3011 = vpop.f32.mrb[0].mxu0
        %v3012 = vadd.f32 0.0, %v3011
        %v3013 = vpop.f32.mrb[0].mxu0
        %3014 = vmatprep.mubr.f32.mxu0 0.0
        %3015 = vmatmul.mubr.f32.gmra.mrb[0].mxu0 %v2830
        %v3016 = vpop.f32.mrb[0].mxu0
        %v3017 = vadd.f32 0.0, %v3016
        %v3018 = vpop.f32.mrb[0].mxu0
        %3019 = vmatprep.mubr.f32.mxu0 0.0
        %3020 = vmatmul.mubr.f32.gmra.mrb[0].mxu0 %v2831
        %v3021 = vpop.f32.mrb[0].mxu0
        %v3022 = vadd.f32 0.0, %v3021
        %v3023 = vpop.f32.mrb[0].mxu0
        %3024 = vmatprep.mubr.f32.mxu0 0.0
        %3025 = vmatmul.mubr.f32.gmra.mrb[0].mxu0 %v2832
        %v3026 = vpop.f32.mrb[0].mxu0
        %v3027 = vadd.f32 0.0, %v3026
        %v3028 = vpop.f32.mrb[0].mxu0
        %3029 = vmatprep.mubr.f32.mxu0 0.0
        %3030 = vmatmul.mubr.f32.gmra.mrb[0].mxu0 %v2833
        %v3031 = vpop.f32.mrb[0].mxu0
        %v3032 = vadd.f32 0.0, %v3031
        %v3033 = vpop.f32.mrb[0].mxu0
        %3034 = vmatprep.mubr.f32.mxu0 0.0
        %3035 = vmatmul.mubr.f32.gmra.mrb[0].mxu0 %v2834
        %v3036 = vpop.f32.mrb[0].mxu0
        %v3037 = vadd.f32 0.0, %v3036
        %v3038 = vpop.f32.mrb[0].mxu0
        %3039 = vmatprep.mubr.f32.mxu0 0.0
        %3040 = vmatmul.mubr.f32.gmra.mrb[0].mxu0 %v2835
        %v3041 = vpop.f32.mrb[0].mxu0
        %v3042 = vadd.f32 0.0, %v3041
        %v3043 = vpop.f32.mrb[0].mxu0
        %3044 = vmatprep.mubr.f32.mxu0 0.0
        %3045 = vmatmul.mubr.f32.gmra.mrb[0].mxu0 %v2836
        %v3046 = vpop.f32.mrb[0].mxu0
        %v3047 = vadd.f32 0.0, %v3046
        %v3048 = vpop.f32.mrb[0].mxu0
        %3049 = vmatprep.mubr.f32.mxu0 0.0
        %3050 = vmatmul.mubr.f32.gmra.mrb[0].mxu0 %v2837
        %v3051 = vpop.f32.mrb[0].mxu0
        %v3052 = vadd.f32 0.0, %v3051
        %v3053 = vpop.f32.mrb[0].mxu0
        %3054 = vmatprep.mubr.f32.mxu0 0.0
        %3055 = vmatmul.mubr.f32.gmra.mrb[0].mxu0 %v2838
        %v3056 = vpop.f32.mrb[0].mxu0
        %v3057 = vadd.f32 0.0, %v3056
        %v3058 = vpop.f32.mrb[0].mxu0
        %3059 = vmatprep.mubr.f32.mxu0 0.0
        %3060 = vmatmul.mubr.f32.gmra.mrb[0].mxu0 %v2839
        %v3061 = vpop.f32.mrb[0].mxu0
        %v3062 = vadd.f32 0.0, %v3061
        %v3063 = vpop.f32.mrb[0].mxu0
        %3064 = vmatprep.mubr.f32.mxu0 0.0
        %3065 = vmatmul.mubr.f32.gmra.mrb[0].mxu0 %v2840
        %v3066 = vpop.f32.mrb[0].mxu0
        %v3067 = vadd.f32 0.0, %v3066
        %v3068 = vpop.f32.mrb[0].mxu0
        %3069 = vmatprep.mubr.f32.mxu0 0.0
        %3070 = vmatmul.mubr.f32.gmra.mrb[0].mxu0 %v2841
        %v3071 = vpop.f32.mrb[0].mxu0
        %v3072 = vadd.f32 0.0, %v3071
        %v3073 = vpop.f32.mrb[0].mxu0
        %3074 = vmatprep.mubr.f32.mxu0 0.0
        %3075 = vmatmul.mubr.f32.gmra.mrb[0].mxu0 %v2842
        %v3076 = vpop.f32.mrb[0].mxu0
        %v3077 = vadd.f32 0.0, %v3076
        %v3078 = vpop.f32.mrb[0].mxu0
        %3079 = vmatprep.mubr.f32.mxu0 0.0
        %3080 = vmatmul.mubr.f32.gmra.mrb[0].mxu0 %v2843
        %v3081 = vpop.f32.mrb[0].mxu0
        %v3082 = vadd.f32 0.0, %v3081
        %v3083 = vpop.f32.mrb[0].mxu0
        %3084 = vdwg.mxu0
        %v3085 = vadd.f32 %v2780, %v2927
        %v3086 = vadd.f32 %v2781, %v2932
        %v3087 = vadd.f32 %v2782, %v2937
        %v3088 = vadd.f32 %v2783, %v2942
        %v3089 = vadd.f32 %v2784, %v2947
        %v3090 = vadd.f32 %v2785, %v2952
        %v3091 = vadd.f32 %v2786, %v2957
        %v3092 = vadd.f32 %v2787, %v2962
        %v3093 = vadd.f32 %v2788, %v2967
        %v3094 = vadd.f32 %v2789, %v2972
        %v3095 = vadd.f32 %v2790, %v2977
        %v3096 = vadd.f32 %v2791, %v2982
        %v3097 = vadd.f32 %v2792, %v2987
        %v3098 = vadd.f32 %v2793, %v2992
        %v3099 = vadd.f32 %v2794, %v2997
        %v3100 = vadd.f32 %v2795, %v3002
        %v3101 = vadd.f32 %v2796, %v3007
        %v3102 = vadd.f32 %v2797, %v3012
        %v3103 = vadd.f32 %v2798, %v3017
        %v3104 = vadd.f32 %v2799, %v3022
        %v3105 = vadd.f32 %v2800, %v3027
        %v3106 = vadd.f32 %v2801, %v3032
        %v3107 = vadd.f32 %v2802, %v3037
        %v3108 = vadd.f32 %v2803, %v3042
        %v3109 = vadd.f32 %v2804, %v3047
        %v3110 = vadd.f32 %v2805, %v3052
        %v3111 = vadd.f32 %v2806, %v3057
        %v3112 = vadd.f32 %v2807, %v3062
        %v3113 = vadd.f32 %v2808, %v3067
        %v3114 = vadd.f32 %v2809, %v3072
        %v3115 = vadd.f32 %v2810, %v3077
        %v3116 = vadd.f32 %v2811, %v3082
        %v3117 = vld [vmem:[%s215] sm:$0x1]
        %v3119 = vlaneseq
        %v3120 = vshrl.u32 %v3119, 7
        %v3121 = vsub.s32 0, %v3120
        %v3122 = vrot.slane %v3117, %v3121
        %v3124 = vadd.f32 %v3085, %v3122
        %v3125 = vadd.f32 %v3086, %v3122
        %v3126 = vadd.f32 %v3087, %v3122
        %v3127 = vadd.f32 %v3088, %v3122
        %v3128 = vadd.f32 %v3089, %v3122
        %v3129 = vadd.f32 %v3090, %v3122
        %v3130 = vadd.f32 %v3091, %v3122
        %v3131 = vadd.f32 %v3092, %v3122
        %v3132 = vadd.f32 %v3093, %v3122
        %v3133 = vadd.f32 %v3094, %v3122
        %v3134 = vadd.f32 %v3095, %v3122
        %v3135 = vadd.f32 %v3096, %v3122
        %v3136 = vadd.f32 %v3097, %v3122
        %v3137 = vadd.f32 %v3098, %v3122
        %v3138 = vadd.f32 %v3099, %v3122
        %v3139 = vadd.f32 %v3100, %v3122
        %v3140 = vadd.f32 %v3101, %v3122
        %v3141 = vadd.f32 %v3102, %v3122
        %v3142 = vadd.f32 %v3103, %v3122
        %v3143 = vadd.f32 %v3104, %v3122
        %v3144 = vadd.f32 %v3105, %v3122
        %v3145 = vadd.f32 %v3106, %v3122
        %v3146 = vadd.f32 %v3107, %v3122
        %v3147 = vadd.f32 %v3108, %v3122
        %v3148 = vadd.f32 %v3109, %v3122
        %v3149 = vadd.f32 %v3110, %v3122
        %v3150 = vadd.f32 %v3111, %v3122
        %v3151 = vadd.f32 %v3112, %v3122
        %v3152 = vadd.f32 %v3113, %v3122
        %v3153 = vadd.f32 %v3114, %v3122
        %v3154 = vadd.f32 %v3115, %v3122
        %v3155 = vadd.f32 %v3116, %v3122
        %p3156 = scmp.lt.s32.totalorder %s25, 6
        %s3157 = scalar_select %p3156, 0.1, 1.0
        %vm3158 = vcmp.ge.f32.partialorder %v3124, 0.0
        %vm3159 = vcmp.ge.f32.partialorder %v3125, 0.0
        %vm3160 = vcmp.ge.f32.partialorder %v3126, 0.0
        %vm3161 = vcmp.ge.f32.partialorder %v3127, 0.0
        %vm3162 = vcmp.ge.f32.partialorder %v3128, 0.0
        %vm3163 = vcmp.ge.f32.partialorder %v3129, 0.0
        %vm3164 = vcmp.ge.f32.partialorder %v3130, 0.0
        %vm3165 = vcmp.ge.f32.partialorder %v3131, 0.0
        %vm3166 = vcmp.ge.f32.partialorder %v3132, 0.0
        %vm3167 = vcmp.ge.f32.partialorder %v3133, 0.0
        %vm3168 = vcmp.ge.f32.partialorder %v3134, 0.0
        %vm3169 = vcmp.ge.f32.partialorder %v3135, 0.0
        %vm3170 = vcmp.ge.f32.partialorder %v3136, 0.0
        %vm3171 = vcmp.ge.f32.partialorder %v3137, 0.0
        %vm3172 = vcmp.ge.f32.partialorder %v3138, 0.0
        %vm3173 = vcmp.ge.f32.partialorder %v3139, 0.0
        %vm3174 = vcmp.ge.f32.partialorder %v3140, 0.0
        %vm3175 = vcmp.ge.f32.partialorder %v3141, 0.0
        %vm3176 = vcmp.ge.f32.partialorder %v3142, 0.0
        %vm3177 = vcmp.ge.f32.partialorder %v3143, 0.0
        %vm3178 = vcmp.ge.f32.partialorder %v3144, 0.0
        %vm3179 = vcmp.ge.f32.partialorder %v3145, 0.0
        %vm3180 = vcmp.ge.f32.partialorder %v3146, 0.0
        %vm3181 = vcmp.ge.f32.partialorder %v3147, 0.0
        %vm3182 = vcmp.ge.f32.partialorder %v3148, 0.0
        %vm3183 = vcmp.ge.f32.partialorder %v3149, 0.0
        %vm3184 = vcmp.ge.f32.partialorder %v3150, 0.0
        %vm3185 = vcmp.ge.f32.partialorder %v3151, 0.0
        %vm3186 = vcmp.ge.f32.partialorder %v3152, 0.0
        %vm3187 = vcmp.ge.f32.partialorder %v3153, 0.0
        %vm3188 = vcmp.ge.f32.partialorder %v3154, 0.0
        %vm3189 = vcmp.ge.f32.partialorder %v3155, 0.0
        %v3190 = vstv %s3157
        %v3191 = vmul.f32 %v3190, %v3124
        %v3192 = vmul.f32 %v3190, %v3125
        %v3193 = vmul.f32 %v3190, %v3126
        %v3194 = vmul.f32 %v3190, %v3127
        %v3195 = vmul.f32 %v3190, %v3128
        %v3196 = vmul.f32 %v3190, %v3129
        %v3197 = vmul.f32 %v3190, %v3130
        %v3198 = vmul.f32 %v3190, %v3131
        %v3199 = vmul.f32 %v3190, %v3132
        %v3200 = vmul.f32 %v3190, %v3133
        %v3201 = vmul.f32 %v3190, %v3134
        %v3202 = vmul.f32 %v3190, %v3135
        %v3203 = vmul.f32 %v3190, %v3136
        %v3204 = vmul.f32 %v3190, %v3137
        %v3205 = vmul.f32 %v3190, %v3138
        %v3206 = vmul.f32 %v3190, %v3139
        %v3207 = vmul.f32 %v3190, %v3140
        %v3208 = vmul.f32 %v3190, %v3141
        %v3209 = vmul.f32 %v3190, %v3142
        %v3210 = vmul.f32 %v3190, %v3143
        %v3211 = vmul.f32 %v3190, %v3144
        %v3212 = vmul.f32 %v3190, %v3145
        %v3213 = vmul.f32 %v3190, %v3146
        %v3214 = vmul.f32 %v3190, %v3147
        %v3215 = vmul.f32 %v3190, %v3148
        %v3216 = vmul.f32 %v3190, %v3149
        %v3217 = vmul.f32 %v3190, %v3150
        %v3218 = vmul.f32 %v3190, %v3151
        %v3219 = vmul.f32 %v3190, %v3152
        %v3220 = vmul.f32 %v3190, %v3153
        %v3221 = vmul.f32 %v3190, %v3154
        %v3222 = vmul.f32 %v3190, %v3155
        %v3223 = vsel %vm3158, %v3124, %v3191
        %v3224 = vsel %vm3159, %v3125, %v3192
        %v3225 = vsel %vm3160, %v3126, %v3193
        %v3226 = vsel %vm3161, %v3127, %v3194
        %v3227 = vsel %vm3162, %v3128, %v3195
        %v3228 = vsel %vm3163, %v3129, %v3196
        %v3229 = vsel %vm3164, %v3130, %v3197
        %v3230 = vsel %vm3165, %v3131, %v3198
        %v3231 = vsel %vm3166, %v3132, %v3199
        %v3232 = vsel %vm3167, %v3133, %v3200
        %v3233 = vsel %vm3168, %v3134, %v3201
        %v3234 = vsel %vm3169, %v3135, %v3202
        %v3235 = vsel %vm3170, %v3136, %v3203
        %v3236 = vsel %vm3171, %v3137, %v3204
        %v3237 = vsel %vm3172, %v3138, %v3205
        %v3238 = vsel %vm3173, %v3139, %v3206
        %v3239 = vsel %vm3174, %v3140, %v3207
        %v3240 = vsel %vm3175, %v3141, %v3208
        %v3241 = vsel %vm3176, %v3142, %v3209
        %v3242 = vsel %vm3177, %v3143, %v3210
        %v3243 = vsel %vm3178, %v3144, %v3211
        %v3244 = vsel %vm3179, %v3145, %v3212
        %v3245 = vsel %vm3180, %v3146, %v3213
        %v3246 = vsel %vm3181, %v3147, %v3214
        %v3247 = vsel %vm3182, %v3148, %v3215
        %v3248 = vsel %vm3183, %v3149, %v3216
        %v3249 = vsel %vm3184, %v3150, %v3217
        %v3250 = vsel %vm3185, %v3151, %v3218
        %v3251 = vsel %vm3186, %v3152, %v3219
        %v3252 = vsel %vm3187, %v3153, %v3220
        %v3253 = vsel %vm3188, %v3154, %v3221
        %v3254 = vsel %vm3189, %v3155, %v3222
        // Predicated region
        $region45: #{_decoder_pallas_impl.1} parent=31 // pred_check
          %p3255 = pneg %p3156
        $region46: #{_decoder_pallas_impl.1} parent=31 // pred_check_branch
          %3257 = sbr.rel (%p3255) target = $region48
        $region47: #{_decoder_pallas_impl.1} parent=31 // pred_region
          %3258 = vst [vmem:[%s1285 + $0x10] sm:$0xff] %v3223
          %3259 = vst [vmem:[%s1285 + $0x18] sm:$0xff] %v3224
          %3260 = vst [vmem:[%s1285 + $0x40] sm:$0xff] %v3225
          %3261 = vst [vmem:[%s1285 + $0x48] sm:$0xff] %v3226
          %3262 = vst [vmem:[%s1285 + $0x70] sm:$0xff] %v3227
          %3263 = vst [vmem:[%s1285 + $0x78] sm:$0xff] %v3228
          %3264 = vst [vmem:[%s1285 + $0xa0] sm:$0xff] %v3229
          %3265 = vst [vmem:[%s1285 + $0xa8] sm:$0xff] %v3230
          %3266 = vst [vmem:[%s1285 + $0xd0] sm:$0xff] %v3231
          %3267 = vst [vmem:[%s1285 + $0xd8] sm:$0xff] %v3232
          %3268 = vst [vmem:[%s1285 + $0x100] sm:$0xff] %v3233
          %3269 = vst [vmem:[%s1285 + $0x108] sm:$0xff] %v3234
          %3270 = vst [vmem:[%s1285 + $0x130] sm:$0xff] %v3235
          %3271 = vst [vmem:[%s1285 + $0x138] sm:$0xff] %v3236
          %3272 = vst [vmem:[%s1285 + $0x160] sm:$0xff] %v3237
          %3273 = vst [vmem:[%s1285 + $0x168] sm:$0xff] %v3238
          %3274 = vst [vmem:[%s1285 + $0x190] sm:$0xff] %v3239
          %3275 = vst [vmem:[%s1285 + $0x198] sm:$0xff] %v3240
          %3276 = vst [vmem:[%s1285 + $0x1c0] sm:$0xff] %v3241
          %3277 = vst [vmem:[%s1285 + $0x1c8] sm:$0xff] %v3242
          %3278 = vst [vmem:[%s1285 + $0x1f0] sm:$0xff] %v3243
          %3279 = vst [vmem:[%s1285 + $0x1f8] sm:$0xff] %v3244
          %3280 = vst [vmem:[%s1285 + $0x220] sm:$0xff] %v3245
          %3281 = vst [vmem:[%s1285 + $0x228] sm:$0xff] %v3246
          %3282 = vst [vmem:[%s1285 + $0x250] sm:$0xff] %v3247
          %3283 = vst [vmem:[%s1285 + $0x258] sm:$0xff] %v3248
          %3284 = vst [vmem:[%s1285 + $0x280] sm:$0xff] %v3249
          %3285 = vst [vmem:[%s1285 + $0x288] sm:$0xff] %v3250
          %3286 = vst [vmem:[%s1285 + $0x2b0] sm:$0xff] %v3251
          %3287 = vst [vmem:[%s1285 + $0x2b8] sm:$0xff] %v3252
          %3288 = vst [vmem:[%s1285 + $0x2e0] sm:$0xff] %v3253
          %3289 = vst [vmem:[%s1285 + $0x2e8] sm:$0xff] %v3254
        $region48: #{_decoder_pallas_impl.1} parent=31 // pred_fallthru
          _
        %p3290 = scmp.eq.s32.totalorder %s25, 6
        // Predicated region
        $region49: #{_decoder_pallas_impl.1} parent=31 // pred_check
          %p3291 = pneg %p3290
        $region50: #{_decoder_pallas_impl.1} parent=31 // pred_check_branch
          %3293 = sbr.rel (%p3291) target = $region52
        $region51: #{_decoder_pallas_impl.1} parent=31 // pred_region
          %3294 = vst [vmem:[%s256] sm:$0xff] %v3223
          %3295 = vst [vmem:[%s256 + $0x8] sm:$0xff] %v3224
          %3296 = vst [vmem:[%s256 + $0x10] sm:$0xff] %v3225
          %3297 = vst [vmem:[%s256 + $0x18] sm:$0xff] %v3226
          %3298 = vst [vmem:[%s256 + $0x20] sm:$0xff] %v3227
          %3299 = vst [vmem:[%s256 + $0x28] sm:$0xff] %v3228
          %3300 = vst [vmem:[%s256 + $0x30] sm:$0xff] %v3229
          %3301 = vst [vmem:[%s256 + $0x38] sm:$0xff] %v3230
          %3302 = vst [vmem:[%s256 + $0x40] sm:$0xff] %v3231
          %3303 = vst [vmem:[%s256 + $0x48] sm:$0xff] %v3232
          %3304 = vst [vmem:[%s256 + $0x50] sm:$0xff] %v3233
          %3305 = vst [vmem:[%s256 + $0x58] sm:$0xff] %v3234
          %3306 = vst [vmem:[%s256 + $0x60] sm:$0xff] %v3235
          %3307 = vst [vmem:[%s256 + $0x68] sm:$0xff] %v3236
          %3308 = vst [vmem:[%s256 + $0x70] sm:$0xff] %v3237
          %3309 = vst [vmem:[%s256 + $0x78] sm:$0xff] %v3238
          %3310 = vst [vmem:[%s256 + $0x80] sm:$0xff] %v3239
          %3311 = vst [vmem:[%s256 + $0x88] sm:$0xff] %v3240
          %3312 = vst [vmem:[%s256 + $0x90] sm:$0xff] %v3241
          %3313 = vst [vmem:[%s256 + $0x98] sm:$0xff] %v3242
          %3314 = vst [vmem:[%s256 + $0xa0] sm:$0xff] %v3243
          %3315 = vst [vmem:[%s256 + $0xa8] sm:$0xff] %v3244
          %3316 = vst [vmem:[%s256 + $0xb0] sm:$0xff] %v3245
          %3317 = vst [vmem:[%s256 + $0xb8] sm:$0xff] %v3246
          %3318 = vst [vmem:[%s256 + $0xc0] sm:$0xff] %v3247
          %3319 = vst [vmem:[%s256 + $0xc8] sm:$0xff] %v3248
          %3320 = vst [vmem:[%s256 + $0xd0] sm:$0xff] %v3249
          %3321 = vst [vmem:[%s256 + $0xd8] sm:$0xff] %v3250
          %3322 = vst [vmem:[%s256 + $0xe0] sm:$0xff] %v3251
          %3323 = vst [vmem:[%s256 + $0xe8] sm:$0xff] %v3252
          %3324 = vst [vmem:[%s256 + $0xf0] sm:$0xff] %v3253
          %3325 = vst [vmem:[%s256 + $0xf8] sm:$0xff] %v3254
        $region52: #{_decoder_pallas_impl.1} parent=31 // pred_fallthru
          _
        %p3326 = scmp.lt.s32.totalorder %s24, 1
        %s3327 = scalar_select %p3326, %s24, 1
        %s3328 = smul.addr %s3327, 32
        %s3329 = smul.addr %s3328, 8
        %s3330 = scalar_lea.vmem %s3, %s3329
        // Predicated region
        $region53: #{_decoder_pallas_impl.1} parent=31 // pred_check
          %p3331 = pneg %p128
        $region54: #{_decoder_pallas_impl.1} parent=31 // pred_check_branch
          %3333 = sbr.rel (%p3331) target = $region56
        $region55: #{_decoder_pallas_impl.1} parent=31 // pred_region
          _
        $region56: #{_decoder_pallas_impl.1} parent=31 // pred_fallthru
          _
      $region32: #{_decoder_pallas_impl.1} parent=5 // pred_fallthru
        _
      %p3334 = scmp.le.s32.totalorder 2, %s15
      // Predicated region
      $region57: #{_decoder_pallas_impl.1} parent=5 // pred_check
        %p3335 = pneg %p3334
      $region58: #{_decoder_pallas_impl.1} parent=5 // pred_check_branch
        %3337 = sbr.rel (%p3335) target = $region60
      $region59: #{_decoder_pallas_impl.1} parent=5 // pred_region
        %s3338 = ssub.s32 %s15, 2
        // Predicated region
        $region61: #{_decoder_pallas_impl.1} parent=59 // pred_check
          %p3339 = pneg %p134
        $region62: #{_decoder_pallas_impl.1} parent=59 // pred_check_branch
          %3341 = sbr.rel (%p3339) target = $region64
        $region63: #{_decoder_pallas_impl.1} parent=59 // pred_region
          %p3342 = scmp.lt.s32.totalorder %s26, 1
          %s3343 = scalar_select %p3342, %s26, 1
          %s3344 = smul.addr %s3343, 32
          %s3345 = smul.addr %s3344, 8
          %s3346 = scalar_lea.vmem %s3, %s3345
        $region64: #{_decoder_pallas_impl.1} parent=59 // pred_fallthru
          _
      $region60: #{_decoder_pallas_impl.1} parent=5 // pred_fallthru
        _
    $region6: #{_decoder_pallas_impl.1} parent=1 // loop_footer
      %s19 = sadd.s32 1, %s15
    $region7: #{_decoder_pallas_impl.1} parent=1 // loop_footer_branch
      %14 = sbr.rel target = $region3
    $region8: #{_decoder_pallas_impl.1} parent=1 // loop_exit
      _
    %3347 = vsyncpa [#allocation4], 1
    %s3348 = scalar_lea.sflag [#allocation4], 1
    %3349 = vsyncpa %s3348, 1
    %3350 = vsyncpa [#allocation6], 1
    %s3351 = scalar_lea.sflag [#allocation6], 1
    %3352 = vsyncpa %s3351, 1

</llo_original>
